<compile_context>
chip_gen: v6e
topology: v6e:2x2x1
jax: 0.10.0
libtpu: 0.0.40
codegen_flags: <defaults>
</compile_context>

<pallas_src>
import functools

import numpy as np
import jax
import jax.numpy as jnp
from jax import lax
from jax.experimental import pallas as pl
from jax.experimental.pallas import tpu as pltpu


def _conv3d_block_kernel(x_ref, w_ref, g_ref, b_ref, out_ref, sum_ref, ssq_ref, *,
                         kernel_size, stride, dilation, tile_do, out_hw,
                         n_spatial, eps, negative_slope):
    kd, kh, kw = kernel_size
    sd, sh, sw = stride
    dd, dh, dw = dilation
    td = tile_do
    ho, wo = out_hw
    p_tile = td * ho * wo
    cin = x_ref.shape[4]
    cout = out_ref.shape[1]

    pass_id = pl.program_id(1)   # 0: stats sweep, 1: normalize + write sweep
    tile_id = pl.program_id(2)   # depth tile

    # ---- conv tile: accumulation of kd*kh*kw shifted bf16 matmuls (MXU) ----
    x = x_ref[0]                                   # [TD_in, Hp, Wp, Cin] bf16
    acc = jnp.zeros((cout, p_tile), jnp.float32)
    tap = 0
    for i in range(kd):
        for j in range(kh):
            for k in range(kw):
                xs = lax.slice(
                    x,
                    (i * dd, j * dh, k * dw, 0),
                    (i * dd + (td - 1) * sd + 1,
                     j * dh + (ho - 1) * sh + 1,
                     k * dw + (wo - 1) * sw + 1,
                     cin),
                    (sd, sh, sw, 1))               # [TD, Ho, Wo, Cin]
                # Minor (channel) dim untouched -> cheap flatten of the
                # spatial dims only.
                xs = xs.reshape(p_tile, cin)       # [P_tile, Cin]
                # [Cout, Cin] x [P_tile, Cin] contracted over Cin
                #   -> [Cout, P_tile]  (wide MXU output dim = lane-dense P).
                acc = acc + lax.dot_general(
                    w_ref[tap], xs, (((1,), (1,)), ((), ())),
                    preferred_element_type=jnp.float32)
                tap += 1

    # ---- pass 0: per-(sample, channel) sum / sum-of-squares accumulation ----
    @pl.when((pass_id == 0) & (tile_id == 0))
    def _():
        sum_ref[...] = jnp.zeros_like(sum_ref)
        ssq_ref[...] = jnp.zeros_like(ssq_ref)

    @pl.when(pass_id == 0)
    def _():
        sum_ref[...] += jnp.sum(acc, axis=1, keepdims=True)        # [Cout, 1]
        ssq_ref[...] += jnp.sum(acc * acc, axis=1, keepdims=True)  # [Cout, 1]

    # ---- pass 1: InstanceNorm (full-sample stats) + affine + activation ----
    @pl.when(pass_id == 1)
    def _():
        inv_n = 1.0 / float(n_spatial)
        mean = sum_ref[...] * inv_n                      # [Cout, 1]
        var = ssq_ref[...] * inv_n - mean * mean         # biased, like torch IN
        inv_std = lax.rsqrt(var + eps)
        scale = g_ref[...] * inv_std                     # [Cout, 1]
        shift = b_ref[...] - mean * scale                # [Cout, 1]
        z = acc * scale + shift                          # [Cout, P_tile]
        z = jnp.where(z > 0, z, negative_slope * z)      # ReLU / LeakyReLU
        out_ref[0] = z.astype(out_ref.dtype)


def _auto_depth_tile(Do, Ho, Wo, Cin, Cout, kd, sd, dd, Hp, Wp,
                     vmem_budget_bytes=4 * 1024 * 1024):
    """Largest divisor of Do whose lane-dense [Cout, TD*Ho*Wo] output block and
    bf16 input slab stay, double-buffered, inside a modest VMEM budget
    (conservative for v7x's smaller 64 MiB VMEM)."""
    valid = [td for td in range(1, Do + 1)
             if Do % td == 0 and ((td * Ho * Wo) % 128 == 0 or td == Do)]

    def tile_bytes(td):
        td_in = (td - 1) * sd + dd * (kd - 1) + 1
        x_bytes = td_in * Hp * Wp * Cin * 2          # bf16 input slab
        y_bytes = Cout * td * Ho * Wo * 4            # f32 output block
        return 2 * (x_bytes + y_bytes)               # double buffered

    fitting = [td for td in valid if tile_bytes(td) <= vmem_budget_bytes]
    return max(fitting) if fitting else min(valid)


def conv3d_block(x, weight, gamma, beta, *,
                 stride=(1, 1, 1), padding=(0, 0, 0), dilation=(1, 1, 1),
                 activation_cfg='ReLU', weight_std=False, eps=1e-5,
                 depth_tile=None):
    """Forward of Conv3dBlock with norm_cfg='IN', activation_cfg in {ReLU, LeakyReLU}."""
    # TODO(synk): norm_cfg 'BN'/'SyncBN'/'GN' variants are not implemented; only 'IN'.
    N, Cin, D, H, W = x.shape
    Cout, Cin_w, kd, kh, kw = weight.shape
    assert Cin == Cin_w
    sd, sh, sw = stride
    pd, ph, pw = padding
    dd, dh, dw = dilation

    if weight_std:  # Conv3d_wd weight standardization (ddof=1 = torch.var default).
        wm = weight.mean(axis=(1, 2, 3, 4), keepdims=True)
        wc = weight - wm
        std = jnp.sqrt(jnp.var(wc.reshape(Cout, -1), axis=1, ddof=1) + 1e-12)
        weight = wc / std.reshape(-1, 1, 1, 1, 1)

    Do = (D + 2 * pd - dd * (kd - 1) - 1) // sd + 1
    Ho = (H + 2 * ph - dh * (kh - 1) - 1) // sh + 1
    Wo = (W + 2 * pw - dw * (kw - 1) - 1) // sw + 1
    P = Do * Ho * Wo
    Hp, Wp = H + 2 * ph, W + 2 * pw

    # Depth tiling (lane-dense spatial blocks, VMEM-bounded).
    # TODO(synk): tiles are cut along D only; very large H*W planes would also
    # need H/W tiling with halos to bound VMEM.
    if depth_tile is None:
        TD = _auto_depth_tile(Do, Ho, Wo, Cin, Cout, kd, sd, dd, Hp, Wp)
    else:
        TD = depth_tile
        assert Do % TD == 0, "depth_tile must divide the output depth"
        assert (TD * Ho * Wo) % 128 == 0 or TD == Do, \
            "depth_tile must give a lane-dense (multiple-of-128) spatial block"
    T = Do // TD
    P_tile = TD * Ho * Wo
    TD_in = (TD - 1) * sd + dd * (kd - 1) + 1     # input depth rows per tile (halo)

    # --- glue (no im2col): channels-last, pad, bf16, overlapping depth slabs ---
    xl = jnp.transpose(x, (0, 2, 3, 4, 1))                          # [N, D, H, W, Cin]
    xp = jnp.pad(xl, ((0, 0), (pd, pd), (ph, ph), (pw, pw), (0, 0)))
    xp = xp.astype(jnp.bfloat16)
    slabs = [lax.slice_in_dim(xp, t * TD * sd, t * TD * sd + TD_in, axis=1)
             for t in range(T)]
    x_slabs = jnp.stack(slabs, axis=1).reshape(N * T, TD_in, Hp, Wp, Cin)

    # Per-tap weights [kd*kh*kw, Cout, Cin] (bf16 MXU operand, stays resident).
    kk = kd * kh * kw
    w_taps = jnp.transpose(weight, (2, 3, 4, 0, 1)).reshape(kk, Cout, Cin)
    w_taps = w_taps.astype(jnp.bfloat16)
    gamma2 = gamma.reshape(Cout, 1).astype(jnp.float32)
    beta2 = beta.reshape(Cout, 1).astype(jnp.float32)

    negative_slope = 0.0 if activation_cfg == 'ReLU' else 0.01
    kernel = functools.partial(
        _conv3d_block_kernel,
        kernel_size=(kd, kh, kw), stride=stride, dilation=dilation,
        tile_do=TD, out_hw=(Ho, Wo), n_spatial=P,
        eps=eps, negative_slope=negative_slope)

    out = pl.pallas_call(
        kernel,
        out_shape=jax.ShapeDtypeStruct((N, Cout, P), jnp.float32),
        grid=(N, 2, T),   # (sample, pass: 0=stats / 1=normalize+write, depth tile)
        in_specs=[
            pl.BlockSpec((1, TD_in, Hp, Wp, Cin),
                         lambda n, s, t: (n * T + t, 0, 0, 0, 0)),
            pl.BlockSpec((kk, Cout, Cin), lambda n, s, t: (0, 0, 0)),
            pl.BlockSpec((Cout, 1), lambda n, s, t: (0, 0)),
            pl.BlockSpec((Cout, 1), lambda n, s, t: (0, 0)),
        ],
        # During the stats pass (s=0) the block index stays (n, 0, 0), so nothing
        # is written back; pass 1 writes each lane-dense [Cout, P_tile] block once.
        out_specs=pl.BlockSpec((1, Cout, P_tile), lambda n, s, t: (n, 0, s * t)),
        scratch_shapes=[pltpu.VMEM((Cout, 1), jnp.float32),   # running sum
                        pltpu.VMEM((Cout, 1), jnp.float32)],  # running sum of squares
        compiler_params=pltpu.CompilerParams(
            dimension_semantics=("parallel", "arbitrary", "arbitrary"),
            vmem_limit_bytes=48 * 1024 * 1024),
    )(x_slabs, w_taps, gamma2, beta2)

    # [N, Cout, P] with P = Do*Ho*Wo on lanes is already NCDHW after a reshape.
    return out.reshape(N, Cout, Do, Ho, Wo)


def _reference(x, weight, gamma, beta, *, stride, padding, dilation,
               eps=1e-5, negative_slope=0.0):
    """Plain-JAX reference: conv3d (bf16 operands, f32 accumulation, matching the
    kernel's precision) -> InstanceNorm3d(affine) -> ReLU/LeakyReLU."""
    y = lax.conv_general_dilated(
        x.astype(jnp.bfloat16), weight.astype(jnp.bfloat16),
        window_strides=stride,
        padding=[(p, p) for p in padding],
        rhs_dilation=dilation,
        dimension_numbers=('NCDHW', 'OIDHW', 'NCDHW'),
        preferred_element_type=jnp.float32)
    mean = y.mean(axis=(2, 3, 4), keepdims=True)
    var = y.var(axis=(2, 3, 4), keepdims=True)     # biased, like torch IN
    g = gamma.reshape(1, -1, 1, 1, 1)
    b = beta.reshape(1, -1, 1, 1, 1)
    z = (y - mean) * lax.rsqrt(var + eps) * g + b
    return jnp.where(z > 0, z, negative_slope * z)


if __name__ == "__main__":
    # Conv3dBlock(4, 16, 'IN', 'ReLU', kernel_size=(3,3,3), stride=(1,1,1),
    # padding=(1,1,1), bias=False) at small shapes.
    N, Cin, Cout = 2, 4, 16
    D = H = W = 8
    kernel_size = (3, 3, 3)
    stride = (1, 1, 1)
    padding = (1, 1, 1)
    dilation = (1, 1, 1)

    key = jax.random.PRNGKey(0)
    kx, kw_ = jax.random.split(key)
    x = jax.random.normal(kx, (N, Cin, D, H, W), dtype=jnp.float32)
    fan_in = Cin * int(np.prod(kernel_size))
    weight = jax.random.normal(kw_, (Cout, Cin) + kernel_size,
                               dtype=jnp.float32) * (1.0 / np.sqrt(fan_in))
    gamma = jnp.ones((Cout,), dtype=jnp.float32)    # InstanceNorm3d affine init
    beta = jnp.zeros((Cout,), dtype=jnp.float32)

    out = conv3d_block(x, weight, gamma, beta,
                       stride=stride, padding=padding, dilation=dilation,
                       activation_cfg='ReLU', weight_std=False,
                       depth_tile=4)   # 2 depth tiles -> exercises cross-tile stats
    out = jax.block_until_ready(out)

    ref = _reference(x, weight, gamma, beta,
                     stride=stride, padding=padding, dilation=dilation)
    np.testing.assert_allclose(np.asarray(out), np.asarray(ref),
                               rtol=1e-2, atol=1e-2)
    print("KERNEL_OK")
</pallas_src>

<mosaic_0001>
module attributes {stable_mosaic.version = 11 : i64} {
  func.func @_conv3d_block_kernel(%arg0: i32, %arg1: i32, %arg2: i32, %arg3: memref<1x6x10x10x4xbf16, #tpu.memory_space<vmem>>, %arg4: memref<27x16x4xbf16, #tpu.memory_space<vmem>>, %arg5: memref<16x1xf32, #tpu.memory_space<vmem>>, %arg6: memref<16x1xf32, #tpu.memory_space<vmem>>, %arg7: memref<1x16x256xf32, #tpu.memory_space<vmem>>, %arg8: memref<16x1xf32, #tpu.memory_space<vmem>>, %arg9: memref<16x1xf32, #tpu.memory_space<vmem>>) attributes {dimension_semantics = [#tpu.dimension_semantics<parallel>, #tpu.dimension_semantics<arbitrary>, #tpu.dimension_semantics<arbitrary>], iteration_bounds = array<i64: 2, 2, 2>, scalar_prefetch = 0 : i64, scratch_operands = 2 : i64, tpu.core_type = #tpu.core_type<tc>, window_params = [{transform_indices = @transform_0, window_bounds = array<i64: 1, 6, 10, 10, 4>}, {pipeline_mode = #tpu.pipeline_mode<synchronous>, transform_indices = @transform_1, window_bounds = array<i64: 27, 16, 4>}, {pipeline_mode = #tpu.pipeline_mode<synchronous>, transform_indices = @transform_2, window_bounds = array<i64: 16, 1>}, {pipeline_mode = #tpu.pipeline_mode<synchronous>, transform_indices = @transform_3, window_bounds = array<i64: 16, 1>}, {transform_indices = @transform_4, window_bounds = array<i64: 1, 16, 256>}]} {
    %c0 = arith.constant 0 : index
    %c0_0 = arith.constant 0 : index
    %c0_1 = arith.constant 0 : index
    %c0_2 = arith.constant 0 : index
    %c0_3 = arith.constant 0 : index
    %0 = vector.load %arg3[%c0, %c0_0, %c0_1, %c0_2, %c0_3] : memref<1x6x10x10x4xbf16, #tpu.memory_space<vmem>>, vector<1x6x10x10x4xbf16>
    %1 = vector.shape_cast %0 : vector<1x6x10x10x4xbf16> to vector<6x10x10x4xbf16>
    %cst = arith.constant 0.000000e+00 : f32
    %2 = vector.broadcast %cst : f32 to vector<16x256xf32>
    %3 = vector.extract_strided_slice %1 {offsets = [0, 0, 0, 0], sizes = [4, 8, 8, 4], strides = [1, 1, 1, 1]} : vector<6x10x10x4xbf16> to vector<4x8x8x4xbf16>
    %4 = vector.shape_cast %3 : vector<4x8x8x4xbf16> to vector<256x4xbf16>
    %c0_4 = arith.constant 0 : index
    %c0_5 = arith.constant 0 : index
    %c0_6 = arith.constant 0 : index
    %5 = vector.load %arg4[%c0_4, %c0_5, %c0_6] : memref<27x16x4xbf16, #tpu.memory_space<vmem>>, vector<1x16x4xbf16>
    %6 = vector.shape_cast %5 : vector<1x16x4xbf16> to vector<16x4xbf16>
    %cst_7 = arith.constant dense<0.000000e+00> : vector<16x256xf32>
    %7 = tpu.matmul %6, %4, %cst_7 {dimension_numbers = #tpu.dot_dimension_numbers<[1], [1], [0], [0], [0, 0, 1, 0], [], []>} : vector<16x4xbf16>, vector<256x4xbf16>, vector<16x256xf32> -> vector<16x256xf32>
    %8 = arith.addf %2, %7 : vector<16x256xf32>
    %9 = vector.extract_strided_slice %1 {offsets = [0, 0, 1, 0], sizes = [4, 8, 8, 4], strides = [1, 1, 1, 1]} : vector<6x10x10x4xbf16> to vector<4x8x8x4xbf16>
    %10 = vector.shape_cast %9 : vector<4x8x8x4xbf16> to vector<256x4xbf16>
    %c1 = arith.constant 1 : index
    %c0_8 = arith.constant 0 : index
    %c0_9 = arith.constant 0 : index
    %11 = vector.load %arg4[%c1, %c0_8, %c0_9] : memref<27x16x4xbf16, #tpu.memory_space<vmem>>, vector<1x16x4xbf16>
    %12 = vector.shape_cast %11 : vector<1x16x4xbf16> to vector<16x4xbf16>
    %cst_10 = arith.constant dense<0.000000e+00> : vector<16x256xf32>
    %13 = tpu.matmul %12, %10, %cst_10 {dimension_numbers = #tpu.dot_dimension_numbers<[1], [1], [0], [0], [0, 0, 1, 0], [], []>} : vector<16x4xbf16>, vector<256x4xbf16>, vector<16x256xf32> -> vector<16x256xf32>
    %14 = arith.addf %8, %13 : vector<16x256xf32>
    %15 = vector.extract_strided_slice %1 {offsets = [0, 0, 2, 0], sizes = [4, 8, 8, 4], strides = [1, 1, 1, 1]} : vector<6x10x10x4xbf16> to vector<4x8x8x4xbf16>
    %16 = vector.shape_cast %15 : vector<4x8x8x4xbf16> to vector<256x4xbf16>
    %c2 = arith.constant 2 : index
    %c0_11 = arith.constant 0 : index
    %c0_12 = arith.constant 0 : index
    %17 = vector.load %arg4[%c2, %c0_11, %c0_12] : memref<27x16x4xbf16, #tpu.memory_space<vmem>>, vector<1x16x4xbf16>
    %18 = vector.shape_cast %17 : vector<1x16x4xbf16> to vector<16x4xbf16>
    %cst_13 = arith.constant dense<0.000000e+00> : vector<16x256xf32>
    %19 = tpu.matmul %18, %16, %cst_13 {dimension_numbers = #tpu.dot_dimension_numbers<[1], [1], [0], [0], [0, 0, 1, 0], [], []>} : vector<16x4xbf16>, vector<256x4xbf16>, vector<16x256xf32> -> vector<16x256xf32>
    %20 = arith.addf %14, %19 : vector<16x256xf32>
    %21 = vector.extract_strided_slice %1 {offsets = [0, 1, 0, 0], sizes = [4, 8, 8, 4], strides = [1, 1, 1, 1]} : vector<6x10x10x4xbf16> to vector<4x8x8x4xbf16>
    %22 = vector.shape_cast %21 : vector<4x8x8x4xbf16> to vector<256x4xbf16>
    %c3 = arith.constant 3 : index
    %c0_14 = arith.constant 0 : index
    %c0_15 = arith.constant 0 : index
    %23 = vector.load %arg4[%c3, %c0_14, %c0_15] : memref<27x16x4xbf16, #tpu.memory_space<vmem>>, vector<1x16x4xbf16>
    %24 = vector.shape_cast %23 : vector<1x16x4xbf16> to vector<16x4xbf16>
    %cst_16 = arith.constant dense<0.000000e+00> : vector<16x256xf32>
    %25 = tpu.matmul %24, %22, %cst_16 {dimension_numbers = #tpu.dot_dimension_numbers<[1], [1], [0], [0], [0, 0, 1, 0], [], []>} : vector<16x4xbf16>, vector<256x4xbf16>, vector<16x256xf32> -> vector<16x256xf32>
    %26 = arith.addf %20, %25 : vector<16x256xf32>
    %27 = vector.extract_strided_slice %1 {offsets = [0, 1, 1, 0], sizes = [4, 8, 8, 4], strides = [1, 1, 1, 1]} : vector<6x10x10x4xbf16> to vector<4x8x8x4xbf16>
    %28 = vector.shape_cast %27 : vector<4x8x8x4xbf16> to vector<256x4xbf16>
    %c4 = arith.constant 4 : index
    %c0_17 = arith.constant 0 : index
    %c0_18 = arith.constant 0 : index
    %29 = vector.load %arg4[%c4, %c0_17, %c0_18] : memref<27x16x4xbf16, #tpu.memory_space<vmem>>, vector<1x16x4xbf16>
    %30 = vector.shape_cast %29 : vector<1x16x4xbf16> to vector<16x4xbf16>
    %cst_19 = arith.constant dense<0.000000e+00> : vector<16x256xf32>
    %31 = tpu.matmul %30, %28, %cst_19 {dimension_numbers = #tpu.dot_dimension_numbers<[1], [1], [0], [0], [0, 0, 1, 0], [], []>} : vector<16x4xbf16>, vector<256x4xbf16>, vector<16x256xf32> -> vector<16x256xf32>
    %32 = arith.addf %26, %31 : vector<16x256xf32>
    %33 = vector.extract_strided_slice %1 {offsets = [0, 1, 2, 0], sizes = [4, 8, 8, 4], strides = [1, 1, 1, 1]} : vector<6x10x10x4xbf16> to vector<4x8x8x4xbf16>
    %34 = vector.shape_cast %33 : vector<4x8x8x4xbf16> to vector<256x4xbf16>
    %c5 = arith.constant 5 : index
    %c0_20 = arith.constant 0 : index
    %c0_21 = arith.constant 0 : index
    %35 = vector.load %arg4[%c5, %c0_20, %c0_21] : memref<27x16x4xbf16, #tpu.memory_space<vmem>>, vector<1x16x4xbf16>
    %36 = vector.shape_cast %35 : vector<1x16x4xbf16> to vector<16x4xbf16>
    %cst_22 = arith.constant dense<0.000000e+00> : vector<16x256xf32>
    %37 = tpu.matmul %36, %34, %cst_22 {dimension_numbers = #tpu.dot_dimension_numbers<[1], [1], [0], [0], [0, 0, 1, 0], [], []>} : vector<16x4xbf16>, vector<256x4xbf16>, vector<16x256xf32> -> vector<16x256xf32>
    %38 = arith.addf %32, %37 : vector<16x256xf32>
    %39 = vector.extract_strided_slice %1 {offsets = [0, 2, 0, 0], sizes = [4, 8, 8, 4], strides = [1, 1, 1, 1]} : vector<6x10x10x4xbf16> to vector<4x8x8x4xbf16>
    %40 = vector.shape_cast %39 : vector<4x8x8x4xbf16> to vector<256x4xbf16>
    %c6 = arith.constant 6 : index
    %c0_23 = arith.constant 0 : index
    %c0_24 = arith.constant 0 : index
    %41 = vector.load %arg4[%c6, %c0_23, %c0_24] : memref<27x16x4xbf16, #tpu.memory_space<vmem>>, vector<1x16x4xbf16>
    %42 = vector.shape_cast %41 : vector<1x16x4xbf16> to vector<16x4xbf16>
    %cst_25 = arith.constant dense<0.000000e+00> : vector<16x256xf32>
    %43 = tpu.matmul %42, %40, %cst_25 {dimension_numbers = #tpu.dot_dimension_numbers<[1], [1], [0], [0], [0, 0, 1, 0], [], []>} : vector<16x4xbf16>, vector<256x4xbf16>, vector<16x256xf32> -> vector<16x256xf32>
    %44 = arith.addf %38, %43 : vector<16x256xf32>
    %45 = vector.extract_strided_slice %1 {offsets = [0, 2, 1, 0], sizes = [4, 8, 8, 4], strides = [1, 1, 1, 1]} : vector<6x10x10x4xbf16> to vector<4x8x8x4xbf16>
    %46 = vector.shape_cast %45 : vector<4x8x8x4xbf16> to vector<256x4xbf16>
    %c7 = arith.constant 7 : index
    %c0_26 = arith.constant 0 : index
    %c0_27 = arith.constant 0 : index
    %47 = vector.load %arg4[%c7, %c0_26, %c0_27] : memref<27x16x4xbf16, #tpu.memory_space<vmem>>, vector<1x16x4xbf16>
    %48 = vector.shape_cast %47 : vector<1x16x4xbf16> to vector<16x4xbf16>
    %cst_28 = arith.constant dense<0.000000e+00> : vector<16x256xf32>
    %49 = tpu.matmul %48, %46, %cst_28 {dimension_numbers = #tpu.dot_dimension_numbers<[1], [1], [0], [0], [0, 0, 1, 0], [], []>} : vector<16x4xbf16>, vector<256x4xbf16>, vector<16x256xf32> -> vector<16x256xf32>
    %50 = arith.addf %44, %49 : vector<16x256xf32>
    %51 = vector.extract_strided_slice %1 {offsets = [0, 2, 2, 0], sizes = [4, 8, 8, 4], strides = [1, 1, 1, 1]} : vector<6x10x10x4xbf16> to vector<4x8x8x4xbf16>
    %52 = vector.shape_cast %51 : vector<4x8x8x4xbf16> to vector<256x4xbf16>
    %c8 = arith.constant 8 : index
    %c0_29 = arith.constant 0 : index
    %c0_30 = arith.constant 0 : index
    %53 = vector.load %arg4[%c8, %c0_29, %c0_30] : memref<27x16x4xbf16, #tpu.memory_space<vmem>>, vector<1x16x4xbf16>
    %54 = vector.shape_cast %53 : vector<1x16x4xbf16> to vector<16x4xbf16>
    %cst_31 = arith.constant dense<0.000000e+00> : vector<16x256xf32>
    %55 = tpu.matmul %54, %52, %cst_31 {dimension_numbers = #tpu.dot_dimension_numbers<[1], [1], [0], [0], [0, 0, 1, 0], [], []>} : vector<16x4xbf16>, vector<256x4xbf16>, vector<16x256xf32> -> vector<16x256xf32>
    %56 = arith.addf %50, %55 : vector<16x256xf32>
    %57 = vector.extract_strided_slice %1 {offsets = [1, 0, 0, 0], sizes = [4, 8, 8, 4], strides = [1, 1, 1, 1]} : vector<6x10x10x4xbf16> to vector<4x8x8x4xbf16>
    %58 = vector.shape_cast %57 : vector<4x8x8x4xbf16> to vector<256x4xbf16>
    %c9 = arith.constant 9 : index
    %c0_32 = arith.constant 0 : index
    %c0_33 = arith.constant 0 : index
    %59 = vector.load %arg4[%c9, %c0_32, %c0_33] : memref<27x16x4xbf16, #tpu.memory_space<vmem>>, vector<1x16x4xbf16>
    %60 = vector.shape_cast %59 : vector<1x16x4xbf16> to vector<16x4xbf16>
    %cst_34 = arith.constant dense<0.000000e+00> : vector<16x256xf32>
    %61 = tpu.matmul %60, %58, %cst_34 {dimension_numbers = #tpu.dot_dimension_numbers<[1], [1], [0], [0], [0, 0, 1, 0], [], []>} : vector<16x4xbf16>, vector<256x4xbf16>, vector<16x256xf32> -> vector<16x256xf32>
    %62 = arith.addf %56, %61 : vector<16x256xf32>
    %63 = vector.extract_strided_slice %1 {offsets = [1, 0, 1, 0], sizes = [4, 8, 8, 4], strides = [1, 1, 1, 1]} : vector<6x10x10x4xbf16> to vector<4x8x8x4xbf16>
    %64 = vector.shape_cast %63 : vector<4x8x8x4xbf16> to vector<256x4xbf16>
    %c10 = arith.constant 10 : index
    %c0_35 = arith.constant 0 : index
    %c0_36 = arith.constant 0 : index
    %65 = vector.load %arg4[%c10, %c0_35, %c0_36] : memref<27x16x4xbf16, #tpu.memory_space<vmem>>, vector<1x16x4xbf16>
    %66 = vector.shape_cast %65 : vector<1x16x4xbf16> to vector<16x4xbf16>
    %cst_37 = arith.constant dense<0.000000e+00> : vector<16x256xf32>
    %67 = tpu.matmul %66, %64, %cst_37 {dimension_numbers = #tpu.dot_dimension_numbers<[1], [1], [0], [0], [0, 0, 1, 0], [], []>} : vector<16x4xbf16>, vector<256x4xbf16>, vector<16x256xf32> -> vector<16x256xf32>
    %68 = arith.addf %62, %67 : vector<16x256xf32>
    %69 = vector.extract_strided_slice %1 {offsets = [1, 0, 2, 0], sizes = [4, 8, 8, 4], strides = [1, 1, 1, 1]} : vector<6x10x10x4xbf16> to vector<4x8x8x4xbf16>
    %70 = vector.shape_cast %69 : vector<4x8x8x4xbf16> to vector<256x4xbf16>
    %c11 = arith.constant 11 : index
    %c0_38 = arith.constant 0 : index
    %c0_39 = arith.constant 0 : index
    %71 = vector.load %arg4[%c11, %c0_38, %c0_39] : memref<27x16x4xbf16, #tpu.memory_space<vmem>>, vector<1x16x4xbf16>
    %72 = vector.shape_cast %71 : vector<1x16x4xbf16> to vector<16x4xbf16>
    %cst_40 = arith.constant dense<0.000000e+00> : vector<16x256xf32>
    %73 = tpu.matmul %72, %70, %cst_40 {dimension_numbers = #tpu.dot_dimension_numbers<[1], [1], [0], [0], [0, 0, 1, 0], [], []>} : vector<16x4xbf16>, vector<256x4xbf16>, vector<16x256xf32> -> vector<16x256xf32>
    %74 = arith.addf %68, %73 : vector<16x256xf32>
    %75 = vector.extract_strided_slice %1 {offsets = [1, 1, 0, 0], sizes = [4, 8, 8, 4], strides = [1, 1, 1, 1]} : vector<6x10x10x4xbf16> to vector<4x8x8x4xbf16>
    %76 = vector.shape_cast %75 : vector<4x8x8x4xbf16> to vector<256x4xbf16>
    %c12 = arith.constant 12 : index
    %c0_41 = arith.constant 0 : index
    %c0_42 = arith.constant 0 : index
    %77 = vector.load %arg4[%c12, %c0_41, %c0_42] : memref<27x16x4xbf16, #tpu.memory_space<vmem>>, vector<1x16x4xbf16>
    %78 = vector.shape_cast %77 : vector<1x16x4xbf16> to vector<16x4xbf16>
    %cst_43 = arith.constant dense<0.000000e+00> : vector<16x256xf32>
    %79 = tpu.matmul %78, %76, %cst_43 {dimension_numbers = #tpu.dot_dimension_numbers<[1], [1], [0], [0], [0, 0, 1, 0], [], []>} : vector<16x4xbf16>, vector<256x4xbf16>, vector<16x256xf32> -> vector<16x256xf32>
    %80 = arith.addf %74, %79 : vector<16x256xf32>
    %81 = vector.extract_strided_slice %1 {offsets = [1, 1, 1, 0], sizes = [4, 8, 8, 4], strides = [1, 1, 1, 1]} : vector<6x10x10x4xbf16> to vector<4x8x8x4xbf16>
    %82 = vector.shape_cast %81 : vector<4x8x8x4xbf16> to vector<256x4xbf16>
    %c13 = arith.constant 13 : index
    %c0_44 = arith.constant 0 : index
    %c0_45 = arith.constant 0 : index
    %83 = vector.load %arg4[%c13, %c0_44, %c0_45] : memref<27x16x4xbf16, #tpu.memory_space<vmem>>, vector<1x16x4xbf16>
    %84 = vector.shape_cast %83 : vector<1x16x4xbf16> to vector<16x4xbf16>
    %cst_46 = arith.constant dense<0.000000e+00> : vector<16x256xf32>
    %85 = tpu.matmul %84, %82, %cst_46 {dimension_numbers = #tpu.dot_dimension_numbers<[1], [1], [0], [0], [0, 0, 1, 0], [], []>} : vector<16x4xbf16>, vector<256x4xbf16>, vector<16x256xf32> -> vector<16x256xf32>
    %86 = arith.addf %80, %85 : vector<16x256xf32>
    %87 = vector.extract_strided_slice %1 {offsets = [1, 1, 2, 0], sizes = [4, 8, 8, 4], strides = [1, 1, 1, 1]} : vector<6x10x10x4xbf16> to vector<4x8x8x4xbf16>
    %88 = vector.shape_cast %87 : vector<4x8x8x4xbf16> to vector<256x4xbf16>
    %c14 = arith.constant 14 : index
    %c0_47 = arith.constant 0 : index
    %c0_48 = arith.constant 0 : index
    %89 = vector.load %arg4[%c14, %c0_47, %c0_48] : memref<27x16x4xbf16, #tpu.memory_space<vmem>>, vector<1x16x4xbf16>
    %90 = vector.shape_cast %89 : vector<1x16x4xbf16> to vector<16x4xbf16>
    %cst_49 = arith.constant dense<0.000000e+00> : vector<16x256xf32>
    %91 = tpu.matmul %90, %88, %cst_49 {dimension_numbers = #tpu.dot_dimension_numbers<[1], [1], [0], [0], [0, 0, 1, 0], [], []>} : vector<16x4xbf16>, vector<256x4xbf16>, vector<16x256xf32> -> vector<16x256xf32>
    %92 = arith.addf %86, %91 : vector<16x256xf32>
    %93 = vector.extract_strided_slice %1 {offsets = [1, 2, 0, 0], sizes = [4, 8, 8, 4], strides = [1, 1, 1, 1]} : vector<6x10x10x4xbf16> to vector<4x8x8x4xbf16>
    %94 = vector.shape_cast %93 : vector<4x8x8x4xbf16> to vector<256x4xbf16>
    %c15 = arith.constant 15 : index
    %c0_50 = arith.constant 0 : index
    %c0_51 = arith.constant 0 : index
    %95 = vector.load %arg4[%c15, %c0_50, %c0_51] : memref<27x16x4xbf16, #tpu.memory_space<vmem>>, vector<1x16x4xbf16>
    %96 = vector.shape_cast %95 : vector<1x16x4xbf16> to vector<16x4xbf16>
    %cst_52 = arith.constant dense<0.000000e+00> : vector<16x256xf32>
    %97 = tpu.matmul %96, %94, %cst_52 {dimension_numbers = #tpu.dot_dimension_numbers<[1], [1], [0], [0], [0, 0, 1, 0], [], []>} : vector<16x4xbf16>, vector<256x4xbf16>, vector<16x256xf32> -> vector<16x256xf32>
    %98 = arith.addf %92, %97 : vector<16x256xf32>
    %99 = vector.extract_strided_slice %1 {offsets = [1, 2, 1, 0], sizes = [4, 8, 8, 4], strides = [1, 1, 1, 1]} : vector<6x10x10x4xbf16> to vector<4x8x8x4xbf16>
    %100 = vector.shape_cast %99 : vector<4x8x8x4xbf16> to vector<256x4xbf16>
    %c16 = arith.constant 16 : index
    %c0_53 = arith.constant 0 : index
    %c0_54 = arith.constant 0 : index
    %101 = vector.load %arg4[%c16, %c0_53, %c0_54] : memref<27x16x4xbf16, #tpu.memory_space<vmem>>, vector<1x16x4xbf16>
    %102 = vector.shape_cast %101 : vector<1x16x4xbf16> to vector<16x4xbf16>
    %cst_55 = arith.constant dense<0.000000e+00> : vector<16x256xf32>
    %103 = tpu.matmul %102, %100, %cst_55 {dimension_numbers = #tpu.dot_dimension_numbers<[1], [1], [0], [0], [0, 0, 1, 0], [], []>} : vector<16x4xbf16>, vector<256x4xbf16>, vector<16x256xf32> -> vector<16x256xf32>
    %104 = arith.addf %98, %103 : vector<16x256xf32>
    %105 = vector.extract_strided_slice %1 {offsets = [1, 2, 2, 0], sizes = [4, 8, 8, 4], strides = [1, 1, 1, 1]} : vector<6x10x10x4xbf16> to vector<4x8x8x4xbf16>
    %106 = vector.shape_cast %105 : vector<4x8x8x4xbf16> to vector<256x4xbf16>
    %c17 = arith.constant 17 : index
    %c0_56 = arith.constant 0 : index
    %c0_57 = arith.constant 0 : index
    %107 = vector.load %arg4[%c17, %c0_56, %c0_57] : memref<27x16x4xbf16, #tpu.memory_space<vmem>>, vector<1x16x4xbf16>
    %108 = vector.shape_cast %107 : vector<1x16x4xbf16> to vector<16x4xbf16>
    %cst_58 = arith.constant dense<0.000000e+00> : vector<16x256xf32>
    %109 = tpu.matmul %108, %106, %cst_58 {dimension_numbers = #tpu.dot_dimension_numbers<[1], [1], [0], [0], [0, 0, 1, 0], [], []>} : vector<16x4xbf16>, vector<256x4xbf16>, vector<16x256xf32> -> vector<16x256xf32>
    %110 = arith.addf %104, %109 : vector<16x256xf32>
    %111 = vector.extract_strided_slice %1 {offsets = [2, 0, 0, 0], sizes = [4, 8, 8, 4], strides = [1, 1, 1, 1]} : vector<6x10x10x4xbf16> to vector<4x8x8x4xbf16>
    %112 = vector.shape_cast %111 : vector<4x8x8x4xbf16> to vector<256x4xbf16>
    %c18 = arith.constant 18 : index
    %c0_59 = arith.constant 0 : index
    %c0_60 = arith.constant 0 : index
    %113 = vector.load %arg4[%c18, %c0_59, %c0_60] : memref<27x16x4xbf16, #tpu.memory_space<vmem>>, vector<1x16x4xbf16>
    %114 = vector.shape_cast %113 : vector<1x16x4xbf16> to vector<16x4xbf16>
    %cst_61 = arith.constant dense<0.000000e+00> : vector<16x256xf32>
    %115 = tpu.matmul %114, %112, %cst_61 {dimension_numbers = #tpu.dot_dimension_numbers<[1], [1], [0], [0], [0, 0, 1, 0], [], []>} : vector<16x4xbf16>, vector<256x4xbf16>, vector<16x256xf32> -> vector<16x256xf32>
    %116 = arith.addf %110, %115 : vector<16x256xf32>
    %117 = vector.extract_strided_slice %1 {offsets = [2, 0, 1, 0], sizes = [4, 8, 8, 4], strides = [1, 1, 1, 1]} : vector<6x10x10x4xbf16> to vector<4x8x8x4xbf16>
    %118 = vector.shape_cast %117 : vector<4x8x8x4xbf16> to vector<256x4xbf16>
    %c19 = arith.constant 19 : index
    %c0_62 = arith.constant 0 : index
    %c0_63 = arith.constant 0 : index
    %119 = vector.load %arg4[%c19, %c0_62, %c0_63] : memref<27x16x4xbf16, #tpu.memory_space<vmem>>, vector<1x16x4xbf16>
    %120 = vector.shape_cast %119 : vector<1x16x4xbf16> to vector<16x4xbf16>
    %cst_64 = arith.constant dense<0.000000e+00> : vector<16x256xf32>
    %121 = tpu.matmul %120, %118, %cst_64 {dimension_numbers = #tpu.dot_dimension_numbers<[1], [1], [0], [0], [0, 0, 1, 0], [], []>} : vector<16x4xbf16>, vector<256x4xbf16>, vector<16x256xf32> -> vector<16x256xf32>
    %122 = arith.addf %116, %121 : vector<16x256xf32>
    %123 = vector.extract_strided_slice %1 {offsets = [2, 0, 2, 0], sizes = [4, 8, 8, 4], strides = [1, 1, 1, 1]} : vector<6x10x10x4xbf16> to vector<4x8x8x4xbf16>
    %124 = vector.shape_cast %123 : vector<4x8x8x4xbf16> to vector<256x4xbf16>
    %c20 = arith.constant 20 : index
    %c0_65 = arith.constant 0 : index
    %c0_66 = arith.constant 0 : index
    %125 = vector.load %arg4[%c20, %c0_65, %c0_66] : memref<27x16x4xbf16, #tpu.memory_space<vmem>>, vector<1x16x4xbf16>
    %126 = vector.shape_cast %125 : vector<1x16x4xbf16> to vector<16x4xbf16>
    %cst_67 = arith.constant dense<0.000000e+00> : vector<16x256xf32>
    %127 = tpu.matmul %126, %124, %cst_67 {dimension_numbers = #tpu.dot_dimension_numbers<[1], [1], [0], [0], [0, 0, 1, 0], [], []>} : vector<16x4xbf16>, vector<256x4xbf16>, vector<16x256xf32> -> vector<16x256xf32>
    %128 = arith.addf %122, %127 : vector<16x256xf32>
    %129 = vector.extract_strided_slice %1 {offsets = [2, 1, 0, 0], sizes = [4, 8, 8, 4], strides = [1, 1, 1, 1]} : vector<6x10x10x4xbf16> to vector<4x8x8x4xbf16>
    %130 = vector.shape_cast %129 : vector<4x8x8x4xbf16> to vector<256x4xbf16>
    %c21 = arith.constant 21 : index
    %c0_68 = arith.constant 0 : index
    %c0_69 = arith.constant 0 : index
    %131 = vector.load %arg4[%c21, %c0_68, %c0_69] : memref<27x16x4xbf16, #tpu.memory_space<vmem>>, vector<1x16x4xbf16>
    %132 = vector.shape_cast %131 : vector<1x16x4xbf16> to vector<16x4xbf16>
    %cst_70 = arith.constant dense<0.000000e+00> : vector<16x256xf32>
    %133 = tpu.matmul %132, %130, %cst_70 {dimension_numbers = #tpu.dot_dimension_numbers<[1], [1], [0], [0], [0, 0, 1, 0], [], []>} : vector<16x4xbf16>, vector<256x4xbf16>, vector<16x256xf32> -> vector<16x256xf32>
    %134 = arith.addf %128, %133 : vector<16x256xf32>
    %135 = vector.extract_strided_slice %1 {offsets = [2, 1, 1, 0], sizes = [4, 8, 8, 4], strides = [1, 1, 1, 1]} : vector<6x10x10x4xbf16> to vector<4x8x8x4xbf16>
    %136 = vector.shape_cast %135 : vector<4x8x8x4xbf16> to vector<256x4xbf16>
    %c22 = arith.constant 22 : index
    %c0_71 = arith.constant 0 : index
    %c0_72 = arith.constant 0 : index
    %137 = vector.load %arg4[%c22, %c0_71, %c0_72] : memref<27x16x4xbf16, #tpu.memory_space<vmem>>, vector<1x16x4xbf16>
    %138 = vector.shape_cast %137 : vector<1x16x4xbf16> to vector<16x4xbf16>
    %cst_73 = arith.constant dense<0.000000e+00> : vector<16x256xf32>
    %139 = tpu.matmul %138, %136, %cst_73 {dimension_numbers = #tpu.dot_dimension_numbers<[1], [1], [0], [0], [0, 0, 1, 0], [], []>} : vector<16x4xbf16>, vector<256x4xbf16>, vector<16x256xf32> -> vector<16x256xf32>
    %140 = arith.addf %134, %139 : vector<16x256xf32>
    %141 = vector.extract_strided_slice %1 {offsets = [2, 1, 2, 0], sizes = [4, 8, 8, 4], strides = [1, 1, 1, 1]} : vector<6x10x10x4xbf16> to vector<4x8x8x4xbf16>
    %142 = vector.shape_cast %141 : vector<4x8x8x4xbf16> to vector<256x4xbf16>
    %c23 = arith.constant 23 : index
    %c0_74 = arith.constant 0 : index
    %c0_75 = arith.constant 0 : index
    %143 = vector.load %arg4[%c23, %c0_74, %c0_75] : memref<27x16x4xbf16, #tpu.memory_space<vmem>>, vector<1x16x4xbf16>
    %144 = vector.shape_cast %143 : vector<1x16x4xbf16> to vector<16x4xbf16>
    %cst_76 = arith.constant dense<0.000000e+00> : vector<16x256xf32>
    %145 = tpu.matmul %144, %142, %cst_76 {dimension_numbers = #tpu.dot_dimension_numbers<[1], [1], [0], [0], [0, 0, 1, 0], [], []>} : vector<16x4xbf16>, vector<256x4xbf16>, vector<16x256xf32> -> vector<16x256xf32>
    %146 = arith.addf %140, %145 : vector<16x256xf32>
    %147 = vector.extract_strided_slice %1 {offsets = [2, 2, 0, 0], sizes = [4, 8, 8, 4], strides = [1, 1, 1, 1]} : vector<6x10x10x4xbf16> to vector<4x8x8x4xbf16>
    %148 = vector.shape_cast %147 : vector<4x8x8x4xbf16> to vector<256x4xbf16>
    %c24 = arith.constant 24 : index
    %c0_77 = arith.constant 0 : index
    %c0_78 = arith.constant 0 : index
    %149 = vector.load %arg4[%c24, %c0_77, %c0_78] : memref<27x16x4xbf16, #tpu.memory_space<vmem>>, vector<1x16x4xbf16>
    %150 = vector.shape_cast %149 : vector<1x16x4xbf16> to vector<16x4xbf16>
    %cst_79 = arith.constant dense<0.000000e+00> : vector<16x256xf32>
    %151 = tpu.matmul %150, %148, %cst_79 {dimension_numbers = #tpu.dot_dimension_numbers<[1], [1], [0], [0], [0, 0, 1, 0], [], []>} : vector<16x4xbf16>, vector<256x4xbf16>, vector<16x256xf32> -> vector<16x256xf32>
    %152 = arith.addf %146, %151 : vector<16x256xf32>
    %153 = vector.extract_strided_slice %1 {offsets = [2, 2, 1, 0], sizes = [4, 8, 8, 4], strides = [1, 1, 1, 1]} : vector<6x10x10x4xbf16> to vector<4x8x8x4xbf16>
    %154 = vector.shape_cast %153 : vector<4x8x8x4xbf16> to vector<256x4xbf16>
    %c25 = arith.constant 25 : index
    %c0_80 = arith.constant 0 : index
    %c0_81 = arith.constant 0 : index
    %155 = vector.load %arg4[%c25, %c0_80, %c0_81] : memref<27x16x4xbf16, #tpu.memory_space<vmem>>, vector<1x16x4xbf16>
    %156 = vector.shape_cast %155 : vector<1x16x4xbf16> to vector<16x4xbf16>
    %cst_82 = arith.constant dense<0.000000e+00> : vector<16x256xf32>
    %157 = tpu.matmul %156, %154, %cst_82 {dimension_numbers = #tpu.dot_dimension_numbers<[1], [1], [0], [0], [0, 0, 1, 0], [], []>} : vector<16x4xbf16>, vector<256x4xbf16>, vector<16x256xf32> -> vector<16x256xf32>
    %158 = arith.addf %152, %157 : vector<16x256xf32>
    %159 = vector.extract_strided_slice %1 {offsets = [2, 2, 2, 0], sizes = [4, 8, 8, 4], strides = [1, 1, 1, 1]} : vector<6x10x10x4xbf16> to vector<4x8x8x4xbf16>
    %160 = vector.shape_cast %159 : vector<4x8x8x4xbf16> to vector<256x4xbf16>
    %c26 = arith.constant 26 : index
    %c0_83 = arith.constant 0 : index
    %c0_84 = arith.constant 0 : index
    %161 = vector.load %arg4[%c26, %c0_83, %c0_84] : memref<27x16x4xbf16, #tpu.memory_space<vmem>>, vector<1x16x4xbf16>
    %162 = vector.shape_cast %161 : vector<1x16x4xbf16> to vector<16x4xbf16>
    %cst_85 = arith.constant dense<0.000000e+00> : vector<16x256xf32>
    %163 = tpu.matmul %162, %160, %cst_85 {dimension_numbers = #tpu.dot_dimension_numbers<[1], [1], [0], [0], [0, 0, 1, 0], [], []>} : vector<16x4xbf16>, vector<256x4xbf16>, vector<16x256xf32> -> vector<16x256xf32>
    %164 = arith.addf %158, %163 : vector<16x256xf32>
    %c0_i32 = arith.constant 0 : i32
    %165 = arith.cmpi eq, %arg1, %c0_i32 : i32
    %c0_i32_86 = arith.constant 0 : i32
    %166 = arith.cmpi eq, %arg2, %c0_i32_86 : i32
    %167 = arith.andi %165, %166 : i1
    %168 = arith.extui %167 : i1 to i32
    %c0_i32_87 = arith.constant 0 : i32
    %169 = arith.cmpi ne, %168, %c0_i32_87 : i32
    scf.if %169 {
      %cst_91 = arith.constant 0.000000e+00 : f32
      %176 = vector.broadcast %cst_91 : f32 to vector<16x1xf32>
      %c0_92 = arith.constant 0 : index
      %c0_93 = arith.constant 0 : index
      %177 = vector.load %arg8[%c0_92, %c0_93] : memref<16x1xf32, #tpu.memory_space<vmem>>, vector<16x1xf32>
      tpu.vector_store %arg8[%c0_92, %c0_93], %176 {strides = array<i32>} : memref<16x1xf32, #tpu.memory_space<vmem>>, vector<16x1xf32>,
      %cst_94 = arith.constant 0.000000e+00 : f32
      %178 = vector.broadcast %cst_94 : f32 to vector<16x1xf32>
      %c0_95 = arith.constant 0 : index
      %c0_96 = arith.constant 0 : index
      %179 = vector.load %arg9[%c0_95, %c0_96] : memref<16x1xf32, #tpu.memory_space<vmem>>, vector<16x1xf32>
      tpu.vector_store %arg9[%c0_95, %c0_96], %178 {strides = array<i32>} : memref<16x1xf32, #tpu.memory_space<vmem>>, vector<16x1xf32>,
    } else {
    }
    %c0_i32_88 = arith.constant 0 : i32
    %170 = arith.cmpi eq, %arg1, %c0_i32_88 : i32
    %171 = arith.extui %170 : i1 to i32
    %c0_i32_89 = arith.constant 0 : i32
    %172 = arith.cmpi ne, %171, %c0_i32_89 : i32
    scf.if %172 {
      %c0_91 = arith.constant 0 : index
      %c0_92 = arith.constant 0 : index
      %176 = vector.load %arg8[%c0_91, %c0_92] : memref<16x1xf32, #tpu.memory_space<vmem>>, vector<16x1xf32>
      %cst_93 = arith.constant dense<0.000000e+00> : vector<16xf32>
      %177 = vector.multi_reduction <add>, %164, %cst_93 [1] : vector<16x256xf32> to vector<16xf32>
      %178 = vector.shape_cast %177 : vector<16xf32> to vector<16x1xf32>
      %179 = arith.addf %176, %178 : vector<16x1xf32>
      %c0_94 = arith.constant 0 : index
      %c0_95 = arith.constant 0 : index
      %180 = vector.load %arg8[%c0_94, %c0_95] : memref<16x1xf32, #tpu.memory_space<vmem>>, vector<16x1xf32>
      tpu.vector_store %arg8[%c0_94, %c0_95], %179 {strides = array<i32>} : memref<16x1xf32, #tpu.memory_space<vmem>>, vector<16x1xf32>,
      %c0_96 = arith.constant 0 : index
      %c0_97 = arith.constant 0 : index
      %181 = vector.load %arg9[%c0_96, %c0_97] : memref<16x1xf32, #tpu.memory_space<vmem>>, vector<16x1xf32>
      %182 = arith.mulf %164, %164 : vector<16x256xf32>
      %cst_98 = arith.constant dense<0.000000e+00> : vector<16xf32>
      %183 = vector.multi_reduction <add>, %182, %cst_98 [1] : vector<16x256xf32> to vector<16xf32>
      %184 = vector.shape_cast %183 : vector<16xf32> to vector<16x1xf32>
      %185 = arith.addf %181, %184 : vector<16x1xf32>
      %c0_99 = arith.constant 0 : index
      %c0_100 = arith.constant 0 : index
      %186 = vector.load %arg9[%c0_99, %c0_100] : memref<16x1xf32, #tpu.memory_space<vmem>>, vector<16x1xf32>
      tpu.vector_store %arg9[%c0_99, %c0_100], %185 {strides = array<i32>} : memref<16x1xf32, #tpu.memory_space<vmem>>, vector<16x1xf32>,
    } else {
    }
    %c1_i32 = arith.constant 1 : i32
    %173 = arith.cmpi eq, %arg1, %c1_i32 : i32
    %174 = arith.extui %173 : i1 to i32
    %c0_i32_90 = arith.constant 0 : i32
    %175 = arith.cmpi ne, %174, %c0_i32_90 : i32
    scf.if %175 {
      %c0_91 = arith.constant 0 : index
      %c0_92 = arith.constant 0 : index
      %176 = vector.load %arg8[%c0_91, %c0_92] : memref<16x1xf32, #tpu.memory_space<vmem>>, vector<16x1xf32>
      %cst_93 = arith.constant 0.001953125 : f32
      %177 = vector.broadcast %cst_93 : f32 to vector<16x1xf32>
      %178 = arith.mulf %176, %177 : vector<16x1xf32>
      %c0_94 = arith.constant 0 : index
      %c0_95 = arith.constant 0 : index
      %179 = vector.load %arg9[%c0_94, %c0_95] : memref<16x1xf32, #tpu.memory_space<vmem>>, vector<16x1xf32>
      %cst_96 = arith.constant 0.001953125 : f32
      %180 = vector.broadcast %cst_96 : f32 to vector<16x1xf32>
      %181 = arith.mulf %179, %180 : vector<16x1xf32>
      %182 = arith.mulf %178, %178 : vector<16x1xf32>
      %183 = arith.subf %181, %182 : vector<16x1xf32>
      %cst_97 = arith.constant 9.99999974E-6 : f32
      %184 = vector.broadcast %cst_97 : f32 to vector<16x1xf32>
      %185 = arith.addf %183, %184 : vector<16x1xf32>
      %186 = math.rsqrt %185 : vector<16x1xf32>
      %c0_98 = arith.constant 0 : index
      %c0_99 = arith.constant 0 : index
      %187 = vector.load %arg5[%c0_98, %c0_99] : memref<16x1xf32, #tpu.memory_space<vmem>>, vector<16x1xf32>
      %188 = arith.mulf %187, %186 : vector<16x1xf32>
      %c0_100 = arith.constant 0 : index
      %c0_101 = arith.constant 0 : index
      %189 = vector.load %arg6[%c0_100, %c0_101] : memref<16x1xf32, #tpu.memory_space<vmem>>, vector<16x1xf32>
      %190 = arith.mulf %178, %188 : vector<16x1xf32>
      %191 = arith.subf %189, %190 : vector<16x1xf32>
      %192 = vector.broadcast %188 : vector<16x1xf32> to vector<16x256xf32>
      %193 = arith.mulf %164, %192 : vector<16x256xf32>
      %194 = vector.broadcast %191 : vector<16x1xf32> to vector<16x256xf32>
      %195 = arith.addf %193, %194 : vector<16x256xf32>
      %cst_102 = arith.constant 0.000000e+00 : f32
      %196 = vector.broadcast %cst_102 : f32 to vector<16x256xf32>
      %197 = arith.cmpf ogt, %195, %196 : vector<16x256xf32>
      %cst_103 = arith.constant 0.000000e+00 : f32
      %198 = vector.broadcast %cst_103 : f32 to vector<16x256xf32>
      %199 = arith.mulf %198, %195 : vector<16x256xf32>
      %200 = arith.select %197, %195, %199 : vector<16x256xi1>, vector<16x256xf32>
      %c0_104 = arith.constant 0 : index
      %c0_105 = arith.constant 0 : index
      %c0_106 = arith.constant 0 : index
      %201 = vector.load %arg7[%c0_104, %c0_105, %c0_106] : memref<1x16x256xf32, #tpu.memory_space<vmem>>, vector<1x16x256xf32>
      %202 = vector.shape_cast %201 : vector<1x16x256xf32> to vector<16x256xf32>
      %203 = vector.shape_cast %200 : vector<16x256xf32> to vector<1x16x256xf32>
      tpu.vector_store %arg7[%c0_104, %c0_105, %c0_106], %203 {strides = array<i32>} : memref<1x16x256xf32, #tpu.memory_space<vmem>>, vector<1x16x256xf32>,
    } else {
    }
    return
  }
  func.func @transform_0(%arg0: i32, %arg1: i32, %arg2: i32) -> (i32, i32, i32, i32, i32) {
    %c2_i32 = arith.constant 2 : i32
    %0 = arith.muli %arg0, %c2_i32 : i32
    %1 = arith.addi %0, %arg2 : i32
    %c0_i32 = arith.constant 0 : i32
    %c0_i32_0 = arith.constant 0 : i32
    %c0_i32_1 = arith.constant 0 : i32
    %c0_i32_2 = arith.constant 0 : i32
    %c0_i32_3 = arith.constant 0 : i32
    return %1, %c0_i32, %c0_i32_0, %c0_i32_1, %c0_i32_2 : i32, i32, i32, i32, i32
  }
  func.func @transform_1(%arg0: i32, %arg1: i32, %arg2: i32) -> (i32, i32, i32) {
    %c0_i32 = arith.constant 0 : i32
    %c0_i32_0 = arith.constant 0 : i32
    %c0_i32_1 = arith.constant 0 : i32
    %c0_i32_2 = arith.constant 0 : i32
    return %c0_i32, %c0_i32_0, %c0_i32_1 : i32, i32, i32
  }
  func.func @transform_2(%arg0: i32, %arg1: i32, %arg2: i32) -> (i32, i32) {
    %c0_i32 = arith.constant 0 : i32
    %c0_i32_0 = arith.constant 0 : i32
    %c0_i32_1 = arith.constant 0 : i32
    return %c0_i32, %c0_i32_0 : i32, i32
  }
  func.func @transform_3(%arg0: i32, %arg1: i32, %arg2: i32) -> (i32, i32) {
    %c0_i32 = arith.constant 0 : i32
    %c0_i32_0 = arith.constant 0 : i32
    %c0_i32_1 = arith.constant 0 : i32
    return %c0_i32, %c0_i32_0 : i32, i32
  }
  func.func @transform_4(%arg0: i32, %arg1: i32, %arg2: i32) -> (i32, i32, i32) {
    %0 = arith.muli %arg1, %arg2 : i32
    %c0_i32 = arith.constant 0 : i32
    %c0_i32_0 = arith.constant 0 : i32
    return %arg0, %c0_i32, %0 : i32, i32, i32
  }
}

</mosaic_0001>

<llo_original>
// kernel: tpu_custom_call.1
$region0: #{tpu_custom_call.1}
  #allocation0 [shape = 'u32[]', space=smem, size = 0x4, offset = 0x4, fixed_abs, tag = 'smem constant byte address 0x4 - core index']
  #allocation1 [shape = 'u32[144,128]{1,0:T(1,128)}', space=vmem, size = 0x12000, scoped, tag = 'internal scratch']
  #allocation2 [shape = 'f32[16,1]{1,0:T(8,128)}', space=vmem, size = 0x2000, scoped, tag = 'scratch operand']
  #allocation3 [shape = 'f32[16,1]{1,0:T(8,128)}', space=vmem, size = 0x2000, scoped, tag = 'scratch operand']
  %s0 = inlined_call_operand.vmem [shape: bf16[4,6,10,10,4], index: 0, kind: input, shape index: {}]
  %s1 = inlined_call_operand.vmem [shape: bf16[27,16,4], index: 1, kind: input, shape index: {}]
  %s2 = inlined_call_operand.vmem [shape: f32[16,1], index: 2, kind: input, shape index: {}]
  %s3 = inlined_call_operand.vmem [shape: f32[16,1], index: 3, kind: input, shape index: {}]
  %s4 = inlined_call_operand.hbm [shape: f32[2,16,512], index: 4, kind: output, shape index: {}]
  %s5 = sld [smem:[#allocation0]]
  $region61: #{tpu_custom_call.1} parent=0
    _
  %s7 = ssub.s32 1, %s5
  %s8 = scalar_select 0, %s7, %s5
  $region1: #{tpu_custom_call.1} parent=0
    #allocation4 [shape = 'u8[32768]{0}', space=vmem, size = 0x8000, scoped, tag = 'output window, operand 0']
    #allocation5 [shape = 's32[2]{0}', space=sflag, size = 0x8, scoped, tag = 'scoped memory for tpu_custom_call.1']
    %9 = vsyncpa [#allocation5], 0
    %s10 = scalar_lea.sflag [#allocation5], 1
    %11 = vsyncpa %s10, 0
    loop: start=0, step=1, limit=10
    $region2: #{tpu_custom_call.1} parent=1 // loop_pre_header
      _
    $region3: #{tpu_custom_call.1} parent=1 // loop_header
      %s13 = sphi 0, %s17
      %p14 = scmp.ge.s32.totalorder %s13, 10
      %s20 = sphi 0, %s39
      %s21 = sphi 0, %s35
      %s22 = sphi 0, %s31
      %s23 = sphi 0, %s20
      %s24 = sphi 0, %s21
      %s25 = sphi 0, %s22
      %s26 = sphi 0, %s23
      %s27 = sphi 0, %s24
      %s28 = sphi 0, %s25
      %s46 = sphi 0, %s48
      %s49 = sphi 0, %s46
      %s50 = sphi 0, %s49
      %s66 = sphi 0, %s50
      %s70 = sphi 0, %s70
      %s72 = sphi 0, %s70
      %s73 = sphi 0, %s72
      %s87 = sphi 0, %s73
      %s91 = sphi 0, %s91
      %s93 = sphi 0, %s91
      %s94 = sphi 0, %s93
      %s108 = sphi 0, %s94
      %s112 = sphi 0, %s112
      %s114 = sphi 0, %s112
      %s115 = sphi 0, %s114
      %s129 = sphi 0, %s115
      %s139 = sphi 0, %s141
      %s142 = sphi 0, %s139
      %s143 = sphi 0, %s142
      %s159 = sphi 0, %s143
    $region4: #{tpu_custom_call.1} parent=1 // loop_header_branch
      %16 = sbr.rel (%p14) target = $region8
    $region5: #{tpu_custom_call.1} parent=1 // loop_body
      %s18 = ssub.s32 %s13, 1
      %s19 = ssub.s32 %s13, 2
      %s29 = sadd.s32 1, %s22
      %p30 = scmp.ge.s32.totalorder %s29, 2
      %s31 = scalar_select %p30, 0, %s29
      %s32 = sadd.s32 1, %s21
      %s33 = scalar_select %p30, %s32, %s21
      %p34 = scmp.ge.s32.totalorder %s33, 2
      %s35 = scalar_select %p34, 0, %s33
      %s36 = sadd.s32 1, %s20
      %s37 = scalar_select %p34, %s36, %s20
      %p38 = scmp.ge.s32.totalorder %s37, 2
      %s39 = scalar_select %p38, 0, %s37
      %s40 = smul.u32 %s20, 2
      %s41 = sadd.s32 %s40, %s22
      %s42 = smul.u32 %s39, 2
      %s43 = sadd.s32 %s42, %s31
      %s44 = ssub.s32 %s41, %s43
      %p45 = scmp.eq.s32.totalorder %s44, 0
      %s47 = sadd.s32 %s46, 1
      %s48 = scalar_select %p45, %s46, %s47
      %p51 = pneg %p45
      %p52 = scmp.eq.s32.totalorder %s13, 7
      %p53 = por %p51, %p52
      %p54 = scmp.ne.s32.totalorder %s46, %s49
      %p55 = scmp.eq.s32.totalorder %s13, 0
      %p56 = por %p54, %p55
      %p57 = scmp.ne.s32.totalorder %s46, %s49
      %p58 = scmp.eq.s32.totalorder %s18, 7
      %p59 = por %p57, %p58
      %p60 = scmp.ne.s32.totalorder %s49, %s50
      %p61 = scmp.eq.s32.totalorder %s18, 0
      %p62 = por %p60, %p61
      %p63 = scmp.ne.s32.totalorder %s49, %s50
      %p64 = scmp.eq.s32.totalorder %s19, 7
      %p65 = por %p63, %p64
      %p67 = scmp.ne.s32.totalorder %s50, %s66
      %p68 = scmp.eq.s32.totalorder %s19, 0
      %p69 = por %p67, %p68
      %s71 = sadd.s32 %s70, 1
      %p74 = scmp.eq.s32.totalorder %s13, 7
      %p75 = scmp.ne.s32.totalorder %s70, %s72
      %p76 = scmp.eq.s32.totalorder %s13, 0
      %p77 = por %p75, %p76
      %p78 = scmp.ne.s32.totalorder %s70, %s72
      %p79 = scmp.eq.s32.totalorder %s18, 7
      %p80 = por %p78, %p79
      %p81 = scmp.ne.s32.totalorder %s72, %s73
      %p82 = scmp.eq.s32.totalorder %s18, 0
      %p83 = por %p81, %p82
      %p84 = scmp.ne.s32.totalorder %s72, %s73
      %p85 = scmp.eq.s32.totalorder %s19, 7
      %p86 = por %p84, %p85
      %p88 = scmp.ne.s32.totalorder %s73, %s87
      %p89 = scmp.eq.s32.totalorder %s19, 0
      %p90 = por %p88, %p89
      %s92 = sadd.s32 %s91, 1
      %p95 = scmp.eq.s32.totalorder %s13, 7
      %p96 = scmp.ne.s32.totalorder %s91, %s93
      %p97 = scmp.eq.s32.totalorder %s13, 0
      %p98 = por %p96, %p97
      %p99 = scmp.ne.s32.totalorder %s91, %s93
      %p100 = scmp.eq.s32.totalorder %s18, 7
      %p101 = por %p99, %p100
      %p102 = scmp.ne.s32.totalorder %s93, %s94
      %p103 = scmp.eq.s32.totalorder %s18, 0
      %p104 = por %p102, %p103
      %p105 = scmp.ne.s32.totalorder %s93, %s94
      %p106 = scmp.eq.s32.totalorder %s19, 7
      %p107 = por %p105, %p106
      %p109 = scmp.ne.s32.totalorder %s94, %s108
      %p110 = scmp.eq.s32.totalorder %s19, 0
      %p111 = por %p109, %p110
      %s113 = sadd.s32 %s112, 1
      %p116 = scmp.eq.s32.totalorder %s13, 7
      %p117 = scmp.ne.s32.totalorder %s112, %s114
      %p118 = scmp.eq.s32.totalorder %s13, 0
      %p119 = por %p117, %p118
      %p120 = scmp.ne.s32.totalorder %s112, %s114
      %p121 = scmp.eq.s32.totalorder %s18, 7
      %p122 = por %p120, %p121
      %p123 = scmp.ne.s32.totalorder %s114, %s115
      %p124 = scmp.eq.s32.totalorder %s18, 0
      %p125 = por %p123, %p124
      %p126 = scmp.ne.s32.totalorder %s114, %s115
      %p127 = scmp.eq.s32.totalorder %s19, 7
      %p128 = por %p126, %p127
      %p130 = scmp.ne.s32.totalorder %s115, %s129
      %p131 = scmp.eq.s32.totalorder %s19, 0
      %p132 = por %p130, %p131
      %s133 = smul.u32 %s21, %s22
      %s134 = smul.u32 %s35, %s31
      %s135 = ssub.s32 %s20, %s39
      %s136 = ssub.s32 %s133, %s134
      %s137 = sor.u32 %s135, %s136
      %p138 = scmp.eq.s32.totalorder %s137, 0
      %s140 = sadd.s32 %s139, 1
      %s141 = scalar_select %p138, %s139, %s140
      %p144 = pneg %p138
      %p145 = scmp.eq.s32.totalorder %s13, 7
      %p146 = por %p144, %p145
      %p147 = scmp.ne.s32.totalorder %s139, %s142
      %p148 = scmp.eq.s32.totalorder %s13, 0
      %p149 = por %p147, %p148
      %p150 = scmp.ne.s32.totalorder %s139, %s142
      %p151 = scmp.eq.s32.totalorder %s18, 7
      %p152 = por %p150, %p151
      %p153 = scmp.ne.s32.totalorder %s142, %s143
      %p154 = scmp.eq.s32.totalorder %s18, 0
      %p155 = por %p153, %p154
      %p156 = scmp.ne.s32.totalorder %s142, %s143
      %p157 = scmp.eq.s32.totalorder %s19, 7
      %p158 = por %p156, %p157
      %p160 = scmp.ne.s32.totalorder %s143, %s159
      %p161 = scmp.eq.s32.totalorder %s19, 0
      %p162 = por %p160, %p161
      %p163 = scmp.le.s32.totalorder 1, %s13
      %p164 = scmp.lt.s32.totalorder %s13, 9
      %p165 = pnand %p163, %p164
      %p166 = pneg %p165
      // Predicated region
      $region9: #{tpu_custom_call.1} parent=5 // pred_check
        _
      $region10: #{tpu_custom_call.1} parent=5 // pred_check_branch
        %168 = sbr.rel (%p165) target = $region12
      $region11: #{tpu_custom_call.1} parent=5 // pred_region
        %s169 = ssub.s32 %s13, 1
        // Predicated region
        $region13: #{tpu_custom_call.1} parent=11 // pred_check
          %p170 = pneg %p83
        $region14: #{tpu_custom_call.1} parent=11 // pred_check_branch
          %172 = sbr.rel (%p170) target = $region16
        $region15: #{tpu_custom_call.1} parent=11 // pred_region
          _
        $region16: #{tpu_custom_call.1} parent=11 // pred_fallthru
          _
        // Predicated region
        $region17: #{tpu_custom_call.1} parent=11 // pred_check
          %p173 = pneg %p104
        $region18: #{tpu_custom_call.1} parent=11 // pred_check_branch
          %175 = sbr.rel (%p173) target = $region20
        $region19: #{tpu_custom_call.1} parent=11 // pred_region
          _
        $region20: #{tpu_custom_call.1} parent=11 // pred_fallthru
          _
        // Predicated region
        $region21: #{tpu_custom_call.1} parent=11 // pred_check
          %p176 = pneg %p125
        $region22: #{tpu_custom_call.1} parent=11 // pred_check_branch
          %178 = sbr.rel (%p176) target = $region24
        $region23: #{tpu_custom_call.1} parent=11 // pred_region
          _
        $region24: #{tpu_custom_call.1} parent=11 // pred_fallthru
          _
      $region12: #{tpu_custom_call.1} parent=5 // pred_fallthru
        _
      %p179 = scmp.lt.s32.totalorder %s13, 8
      // Predicated region
      $region25: #{tpu_custom_call.1} parent=5 // pred_check
        %p180 = pneg %p179
      $region26: #{tpu_custom_call.1} parent=5 // pred_check_branch
        %182 = sbr.rel (%p180) target = $region28
      $region27: #{tpu_custom_call.1} parent=5 // pred_region
        // Predicated region
        $region29: #{tpu_custom_call.1} parent=27 // pred_check
          %p183 = pneg %p56
        $region30: #{tpu_custom_call.1} parent=27 // pred_check_branch
          %185 = sbr.rel (%p183) target = $region32
        $region31: #{tpu_custom_call.1} parent=27 // pred_region
          %s186 = smul.u32 %s20, 2
          %s187 = sadd.s32 %s186, %s22
          %p188 = scmp.lt.s32.totalorder %s187, 3
          %s189 = scalar_select %p188, %s187, 3
          %s190 = smul.addr %s189, 120
          %s191 = smul.addr %s190, 4
          %s192 = scalar_lea.vmem %s0, %s191
          %s193 = smul.u32 %s20, 2
          %s194 = sadd.s32 %s193, %s22
        $region32: #{tpu_custom_call.1} parent=27 // pred_fallthru
          _
      $region28: #{tpu_custom_call.1} parent=5 // pred_fallthru
        _
      %p195 = scmp.le.s32.totalorder 1, %s13
      %p196 = scmp.lt.s32.totalorder %s13, 9
      %p197 = pnand %p195, %p196
      %p198 = pneg %p197
      // Predicated region
      $region33: #{tpu_custom_call.1} parent=5 // pred_check
        _
      $region34: #{tpu_custom_call.1} parent=5 // pred_check_branch
        %200 = sbr.rel (%p197) target = $region36
      $region35: #{tpu_custom_call.1} parent=5 // pred_region
        %s201 = ssub.s32 %s13, 1
        %s202 = smul.u32 %s23, 2
        %s203 = sadd.s32 %s202, %s25
        %p204 = scmp.lt.s32.totalorder %s203, 3
        %s205 = scalar_select %p204, %s203, 3
        %s206 = smul.addr %s205, 120
        %s207 = smul.addr %s206, 4
        %s208 = scalar_lea.vmem %s0, %s207
        %p209 = pneg %p62
        %p210 = pneg %p59
        %p211 = pneg %p83
        %p212 = pneg %p80
        %p213 = pneg %p104
        %p214 = pneg %p101
        %p215 = pneg %p125
        %p216 = pneg %p122
        %p217 = pneg %p155
        %p218 = pneg %p152
        %s219 = sand.u32 %s142, 1
        %s220 = scalar_lea.sflag [#allocation5], %s219
        %s221 = sand.u32 %s142, 1
        %s222 = smul.addr %s221, 32
        %s223 = scalar_lea.vmem [#allocation4], %s222
        %s224 = smul.u32 %s23, 2
        %s225 = sadd.s32 %s224, %s25
        %p226 = scmp.lt.s32.totalorder %s225, 3
        %s227 = scalar_select %p226, %s225, 3
        %s228 = smul.addr %s227, 120
        %s229 = smul.addr %s228, 4
        %s230 = scalar_lea.vmem %s0, %s229
        %s231 = smul.u32 %s23, 2
        %s232 = sadd.s32 %s231, %s25
        %s233 = smul.u32 %s24, %s25
        %s234 = smul.u32 2, %s233
        %v236 = vld [vmem:[%s230] sm:$0xf]
        %v237 = vld [vmem:[%s230 + $0x4] sm:$0x1]
        %v238 = vld [vmem:[%s230 + $0x8] sm:$0xf]
        %v239 = vld [vmem:[%s230 + $0xc] sm:$0x1]
        %v240 = vld [vmem:[%s230 + $0x10] sm:$0xf]
        %v241 = vld [vmem:[%s230 + $0x14] sm:$0x1]
        %v242 = vld [vmem:[%s230 + $0x18] sm:$0xf]
        %v243 = vld [vmem:[%s230 + $0x1c] sm:$0x1]
        %v244 = vld [vmem:[%s230 + $0x20] sm:$0xf]
        %v245 = vld [vmem:[%s230 + $0x24] sm:$0x1]
        %v246 = vld [vmem:[%s230 + $0x28] sm:$0xf]
        %v247 = vld [vmem:[%s230 + $0x2c] sm:$0x1]
        %v248 = vld [vmem:[%s230 + $0x30] sm:$0xf]
        %v249 = vld [vmem:[%s230 + $0x34] sm:$0x1]
        %v250 = vld [vmem:[%s230 + $0x38] sm:$0xf]
        %v251 = vld [vmem:[%s230 + $0x3c] sm:$0x1]
        %v252 = vld [vmem:[%s230 + $0x40] sm:$0xf]
        %v253 = vld [vmem:[%s230 + $0x44] sm:$0x1]
        %v254 = vld [vmem:[%s230 + $0x48] sm:$0xf]
        %v255 = vld [vmem:[%s230 + $0x4c] sm:$0x1]
        %v256 = vld [vmem:[%s230 + $0x50] sm:$0xf]
        %v257 = vld [vmem:[%s230 + $0x54] sm:$0x1]
        %v258 = vld [vmem:[%s230 + $0x58] sm:$0xf]
        %v259 = vld [vmem:[%s230 + $0x5c] sm:$0x1]
        %v260 = vld [vmem:[%s230 + $0x60] sm:$0xf]
        %v261 = vld [vmem:[%s230 + $0x64] sm:$0x1]
        %v262 = vld [vmem:[%s230 + $0x68] sm:$0xf]
        %v263 = vld [vmem:[%s230 + $0x6c] sm:$0x1]
        %v264 = vld [vmem:[%s230 + $0x70] sm:$0xf]
        %v265 = vld [vmem:[%s230 + $0x74] sm:$0x1]
        %v266 = vld [vmem:[%s230 + $0x78] sm:$0xf]
        %v267 = vld [vmem:[%s230 + $0x7c] sm:$0x1]
        %v268 = vld [vmem:[%s230 + $0x80] sm:$0xf]
        %v269 = vld [vmem:[%s230 + $0x84] sm:$0x1]
        %v270 = vld [vmem:[%s230 + $0x88] sm:$0xf]
        %v271 = vld [vmem:[%s230 + $0x8c] sm:$0x1]
        %v272 = vld [vmem:[%s230 + $0x90] sm:$0xf]
        %v273 = vld [vmem:[%s230 + $0x94] sm:$0x1]
        %v274 = vld [vmem:[%s230 + $0x98] sm:$0xf]
        %v275 = vld [vmem:[%s230 + $0x9c] sm:$0x1]
        %v276 = vld [vmem:[%s230 + $0xa0] sm:$0xf]
        %v277 = vld [vmem:[%s230 + $0xa4] sm:$0x1]
        %v278 = vld [vmem:[%s230 + $0xa8] sm:$0xf]
        %v279 = vld [vmem:[%s230 + $0xac] sm:$0x1]
        %v280 = vld [vmem:[%s230 + $0xb0] sm:$0xf]
        %v281 = vld [vmem:[%s230 + $0xb4] sm:$0x1]
        %v282 = vld [vmem:[%s230 + $0xb8] sm:$0xf]
        %v283 = vld [vmem:[%s230 + $0xbc] sm:$0x1]
        %v284 = vld [vmem:[%s230 + $0xc0] sm:$0xf]
        %v285 = vld [vmem:[%s230 + $0xc4] sm:$0x1]
        %v286 = vld [vmem:[%s230 + $0xc8] sm:$0xf]
        %v287 = vld [vmem:[%s230 + $0xcc] sm:$0x1]
        %v288 = vld [vmem:[%s230 + $0xd0] sm:$0xf]
        %v289 = vld [vmem:[%s230 + $0xd4] sm:$0x1]
        %v290 = vld [vmem:[%s230 + $0xd8] sm:$0xf]
        %v291 = vld [vmem:[%s230 + $0xdc] sm:$0x1]
        %v292 = vld [vmem:[%s230 + $0xe0] sm:$0xf]
        %v293 = vld [vmem:[%s230 + $0xe4] sm:$0x1]
        %v294 = vld [vmem:[%s230 + $0xe8] sm:$0xf]
        %v295 = vld [vmem:[%s230 + $0xec] sm:$0x1]
        %v296 = vld [vmem:[%s230 + $0xf0] sm:$0xf]
        %v297 = vld [vmem:[%s230 + $0xf4] sm:$0x1]
        %v298 = vld [vmem:[%s230 + $0xf8] sm:$0xf]
        %v299 = vld [vmem:[%s230 + $0xfc] sm:$0x1]
        %v300 = vld [vmem:[%s230 + $0x100] sm:$0xf]
        %v301 = vld [vmem:[%s230 + $0x104] sm:$0x1]
        %v302 = vld [vmem:[%s230 + $0x108] sm:$0xf]
        %v303 = vld [vmem:[%s230 + $0x10c] sm:$0x1]
        %v304 = vld [vmem:[%s230 + $0x110] sm:$0xf]
        %v305 = vld [vmem:[%s230 + $0x114] sm:$0x1]
        %v306 = vld [vmem:[%s230 + $0x118] sm:$0xf]
        %v307 = vld [vmem:[%s230 + $0x11c] sm:$0x1]
        %v308 = vld [vmem:[%s230 + $0x120] sm:$0xf]
        %v309 = vld [vmem:[%s230 + $0x124] sm:$0x1]
        %v310 = vld [vmem:[%s230 + $0x128] sm:$0xf]
        %v311 = vld [vmem:[%s230 + $0x12c] sm:$0x1]
        %v312 = vld [vmem:[%s230 + $0x130] sm:$0xf]
        %v313 = vld [vmem:[%s230 + $0x134] sm:$0x1]
        %v314 = vld [vmem:[%s230 + $0x138] sm:$0xf]
        %v315 = vld [vmem:[%s230 + $0x13c] sm:$0x1]
        %v316 = vld [vmem:[%s230 + $0x140] sm:$0xf]
        %v317 = vld [vmem:[%s230 + $0x144] sm:$0x1]
        %v318 = vld [vmem:[%s230 + $0x148] sm:$0xf]
        %v319 = vld [vmem:[%s230 + $0x14c] sm:$0x1]
        %v320 = vld [vmem:[%s230 + $0x150] sm:$0xf]
        %v321 = vld [vmem:[%s230 + $0x154] sm:$0x1]
        %v322 = vld [vmem:[%s230 + $0x158] sm:$0xf]
        %v323 = vld [vmem:[%s230 + $0x15c] sm:$0x1]
        %v324 = vld [vmem:[%s230 + $0x160] sm:$0xf]
        %v325 = vld [vmem:[%s230 + $0x164] sm:$0x1]
        %v326 = vld [vmem:[%s230 + $0x168] sm:$0xf]
        %v327 = vld [vmem:[%s230 + $0x16c] sm:$0x1]
        %v328 = vld [vmem:[%s230 + $0x170] sm:$0xf]
        %v329 = vld [vmem:[%s230 + $0x174] sm:$0x1]
        %v330 = vld [vmem:[%s230 + $0x178] sm:$0xf]
        %v331 = vld [vmem:[%s230 + $0x17c] sm:$0x1]
        %v332 = vld [vmem:[%s230 + $0x180] sm:$0xf]
        %v333 = vld [vmem:[%s230 + $0x184] sm:$0x1]
        %v334 = vld [vmem:[%s230 + $0x188] sm:$0xf]
        %v335 = vld [vmem:[%s230 + $0x18c] sm:$0x1]
        %v336 = vld [vmem:[%s230 + $0x190] sm:$0xf]
        %v337 = vld [vmem:[%s230 + $0x194] sm:$0x1]
        %v338 = vld [vmem:[%s230 + $0x198] sm:$0xf]
        %v339 = vld [vmem:[%s230 + $0x19c] sm:$0x1]
        %v340 = vld [vmem:[%s230 + $0x1a0] sm:$0xf]
        %v341 = vld [vmem:[%s230 + $0x1a4] sm:$0x1]
        %v342 = vld [vmem:[%s230 + $0x1a8] sm:$0xf]
        %v343 = vld [vmem:[%s230 + $0x1ac] sm:$0x1]
        %v344 = vld [vmem:[%s230 + $0x1b0] sm:$0xf]
        %v345 = vld [vmem:[%s230 + $0x1b4] sm:$0x1]
        %v346 = vld [vmem:[%s230 + $0x1b8] sm:$0xf]
        %v347 = vld [vmem:[%s230 + $0x1bc] sm:$0x1]
        %v348 = vld [vmem:[%s230 + $0x1c0] sm:$0xf]
        %v349 = vld [vmem:[%s230 + $0x1c4] sm:$0x1]
        %v350 = vld [vmem:[%s230 + $0x1c8] sm:$0xf]
        %v351 = vld [vmem:[%s230 + $0x1cc] sm:$0x1]
        %v352 = vld [vmem:[%s230 + $0x1d0] sm:$0xf]
        %v353 = vld [vmem:[%s230 + $0x1d4] sm:$0x1]
        %v354 = vld [vmem:[%s230 + $0x1d8] sm:$0xf]
        %v355 = vld [vmem:[%s230 + $0x1dc] sm:$0x1]
        %v356 = vld [vmem:[%s1] sm:$0xf]
        %v357 = vld [vmem:[%s1 + $0x4] sm:$0xf]
        %vm358 = vsmask.f32 3328
        %vm359 = vsmask.f32 7440
        %vm360 = vmor %vm358, %vm359
        %v362 = vshrl.u32 %v236, 16
        %v364 = vrot.slane %v362, 4
        %v365 = vshll.u32 %v236, 16
        %v367 = vrot.slane %v365, 5
        %v368 = vor.u32 %v364, %v367
        %v369 = vrot.slane %v368, 4
        %v371 = vshll.u32 %v237, 16
        %v373 = vrot.slane %v371, 5
        %v374 = vsel %vm360, %v369, %v373
        %v376 = vshrl.u32 %v238, 16
        %v378 = vrot.slane %v376, 4
        %v379 = vshll.u32 %v238, 16
        %v381 = vrot.slane %v379, 5
        %v382 = vor.u32 %v378, %v381
        %v383 = vrot.slane %v382, 4
        %v385 = vshll.u32 %v239, 16
        %v387 = vrot.slane %v385, 5
        %v388 = vsel %vm360, %v383, %v387
        %v390 = vshrl.u32 %v240, 16
        %v392 = vrot.slane %v390, 4
        %v393 = vshll.u32 %v240, 16
        %v395 = vrot.slane %v393, 5
        %v396 = vor.u32 %v392, %v395
        %v397 = vrot.slane %v396, 4
        %v399 = vshll.u32 %v241, 16
        %v401 = vrot.slane %v399, 5
        %v402 = vsel %vm360, %v397, %v401
        %v404 = vshrl.u32 %v242, 16
        %v406 = vrot.slane %v404, 4
        %v407 = vshll.u32 %v242, 16
        %v409 = vrot.slane %v407, 5
        %v410 = vor.u32 %v406, %v409
        %v411 = vrot.slane %v410, 4
        %v413 = vshll.u32 %v243, 16
        %v415 = vrot.slane %v413, 5
        %v416 = vsel %vm360, %v411, %v415
        %v418 = vshrl.u32 %v244, 16
        %v420 = vrot.slane %v418, 4
        %v421 = vshll.u32 %v244, 16
        %v423 = vrot.slane %v421, 5
        %v424 = vor.u32 %v420, %v423
        %v425 = vrot.slane %v424, 4
        %v427 = vshll.u32 %v245, 16
        %v429 = vrot.slane %v427, 5
        %v430 = vsel %vm360, %v425, %v429
        %v432 = vshrl.u32 %v246, 16
        %v434 = vrot.slane %v432, 4
        %v435 = vshll.u32 %v246, 16
        %v437 = vrot.slane %v435, 5
        %v438 = vor.u32 %v434, %v437
        %v439 = vrot.slane %v438, 4
        %v441 = vshll.u32 %v247, 16
        %v443 = vrot.slane %v441, 5
        %v444 = vsel %vm360, %v439, %v443
        %v446 = vshrl.u32 %v248, 16
        %v448 = vrot.slane %v446, 4
        %v449 = vshll.u32 %v248, 16
        %v451 = vrot.slane %v449, 5
        %v452 = vor.u32 %v448, %v451
        %v453 = vrot.slane %v452, 4
        %v455 = vshll.u32 %v249, 16
        %v457 = vrot.slane %v455, 5
        %v458 = vsel %vm360, %v453, %v457
        %v460 = vshrl.u32 %v250, 16
        %v462 = vrot.slane %v460, 4
        %v463 = vshll.u32 %v250, 16
        %v465 = vrot.slane %v463, 5
        %v466 = vor.u32 %v462, %v465
        %v467 = vrot.slane %v466, 4
        %v469 = vshll.u32 %v251, 16
        %v471 = vrot.slane %v469, 5
        %v472 = vsel %vm360, %v467, %v471
        %v474 = vshrl.u32 %v256, 16
        %v476 = vrot.slane %v474, 4
        %v477 = vshll.u32 %v256, 16
        %v479 = vrot.slane %v477, 5
        %v480 = vor.u32 %v476, %v479
        %v481 = vrot.slane %v480, 4
        %v483 = vshll.u32 %v257, 16
        %v485 = vrot.slane %v483, 5
        %v486 = vsel %vm360, %v481, %v485
        %v488 = vshrl.u32 %v258, 16
        %v490 = vrot.slane %v488, 4
        %v491 = vshll.u32 %v258, 16
        %v493 = vrot.slane %v491, 5
        %v494 = vor.u32 %v490, %v493
        %v495 = vrot.slane %v494, 4
        %v497 = vshll.u32 %v259, 16
        %v499 = vrot.slane %v497, 5
        %v500 = vsel %vm360, %v495, %v499
        %v502 = vshrl.u32 %v260, 16
        %v504 = vrot.slane %v502, 4
        %v505 = vshll.u32 %v260, 16
        %v507 = vrot.slane %v505, 5
        %v508 = vor.u32 %v504, %v507
        %v509 = vrot.slane %v508, 4
        %v511 = vshll.u32 %v261, 16
        %v513 = vrot.slane %v511, 5
        %v514 = vsel %vm360, %v509, %v513
        %v516 = vshrl.u32 %v262, 16
        %v518 = vrot.slane %v516, 4
        %v519 = vshll.u32 %v262, 16
        %v521 = vrot.slane %v519, 5
        %v522 = vor.u32 %v518, %v521
        %v523 = vrot.slane %v522, 4
        %v525 = vshll.u32 %v263, 16
        %v527 = vrot.slane %v525, 5
        %v528 = vsel %vm360, %v523, %v527
        %v530 = vshrl.u32 %v264, 16
        %v532 = vrot.slane %v530, 4
        %v533 = vshll.u32 %v264, 16
        %v535 = vrot.slane %v533, 5
        %v536 = vor.u32 %v532, %v535
        %v537 = vrot.slane %v536, 4
        %v539 = vshll.u32 %v265, 16
        %v541 = vrot.slane %v539, 5
        %v542 = vsel %vm360, %v537, %v541
        %v544 = vshrl.u32 %v266, 16
        %v546 = vrot.slane %v544, 4
        %v547 = vshll.u32 %v266, 16
        %v549 = vrot.slane %v547, 5
        %v550 = vor.u32 %v546, %v549
        %v551 = vrot.slane %v550, 4
        %v553 = vshll.u32 %v267, 16
        %v555 = vrot.slane %v553, 5
        %v556 = vsel %vm360, %v551, %v555
        %v558 = vshrl.u32 %v268, 16
        %v560 = vrot.slane %v558, 4
        %v561 = vshll.u32 %v268, 16
        %v563 = vrot.slane %v561, 5
        %v564 = vor.u32 %v560, %v563
        %v565 = vrot.slane %v564, 4
        %v567 = vshll.u32 %v269, 16
        %v569 = vrot.slane %v567, 5
        %v570 = vsel %vm360, %v565, %v569
        %v572 = vshrl.u32 %v270, 16
        %v574 = vrot.slane %v572, 4
        %v575 = vshll.u32 %v270, 16
        %v577 = vrot.slane %v575, 5
        %v578 = vor.u32 %v574, %v577
        %v579 = vrot.slane %v578, 4
        %v581 = vshll.u32 %v271, 16
        %v583 = vrot.slane %v581, 5
        %v584 = vsel %vm360, %v579, %v583
        %v586 = vshrl.u32 %v276, 16
        %v588 = vrot.slane %v586, 4
        %v589 = vshll.u32 %v276, 16
        %v591 = vrot.slane %v589, 5
        %v592 = vor.u32 %v588, %v591
        %v593 = vrot.slane %v592, 4
        %v595 = vshll.u32 %v277, 16
        %v597 = vrot.slane %v595, 5
        %v598 = vsel %vm360, %v593, %v597
        %v600 = vshrl.u32 %v278, 16
        %v602 = vrot.slane %v600, 4
        %v603 = vshll.u32 %v278, 16
        %v605 = vrot.slane %v603, 5
        %v606 = vor.u32 %v602, %v605
        %v607 = vrot.slane %v606, 4
        %v609 = vshll.u32 %v279, 16
        %v611 = vrot.slane %v609, 5
        %v612 = vsel %vm360, %v607, %v611
        %v614 = vshrl.u32 %v280, 16
        %v616 = vrot.slane %v614, 4
        %v617 = vshll.u32 %v280, 16
        %v619 = vrot.slane %v617, 5
        %v620 = vor.u32 %v616, %v619
        %v621 = vrot.slane %v620, 4
        %v623 = vshll.u32 %v281, 16
        %v625 = vrot.slane %v623, 5
        %v626 = vsel %vm360, %v621, %v625
        %v628 = vshrl.u32 %v282, 16
        %v630 = vrot.slane %v628, 4
        %v631 = vshll.u32 %v282, 16
        %v633 = vrot.slane %v631, 5
        %v634 = vor.u32 %v630, %v633
        %v635 = vrot.slane %v634, 4
        %v637 = vshll.u32 %v283, 16
        %v639 = vrot.slane %v637, 5
        %v640 = vsel %vm360, %v635, %v639
        %v642 = vshrl.u32 %v284, 16
        %v644 = vrot.slane %v642, 4
        %v645 = vshll.u32 %v284, 16
        %v647 = vrot.slane %v645, 5
        %v648 = vor.u32 %v644, %v647
        %v649 = vrot.slane %v648, 4
        %v651 = vshll.u32 %v285, 16
        %v653 = vrot.slane %v651, 5
        %v654 = vsel %vm360, %v649, %v653
        %v656 = vshrl.u32 %v286, 16
        %v658 = vrot.slane %v656, 4
        %v659 = vshll.u32 %v286, 16
        %v661 = vrot.slane %v659, 5
        %v662 = vor.u32 %v658, %v661
        %v663 = vrot.slane %v662, 4
        %v665 = vshll.u32 %v287, 16
        %v667 = vrot.slane %v665, 5
        %v668 = vsel %vm360, %v663, %v667
        %v670 = vshrl.u32 %v288, 16
        %v672 = vrot.slane %v670, 4
        %v673 = vshll.u32 %v288, 16
        %v675 = vrot.slane %v673, 5
        %v676 = vor.u32 %v672, %v675
        %v677 = vrot.slane %v676, 4
        %v679 = vshll.u32 %v289, 16
        %v681 = vrot.slane %v679, 5
        %v682 = vsel %vm360, %v677, %v681
        %v684 = vshrl.u32 %v290, 16
        %v686 = vrot.slane %v684, 4
        %v687 = vshll.u32 %v290, 16
        %v689 = vrot.slane %v687, 5
        %v690 = vor.u32 %v686, %v689
        %v691 = vrot.slane %v690, 4
        %v693 = vshll.u32 %v291, 16
        %v695 = vrot.slane %v693, 5
        %v696 = vsel %vm360, %v691, %v695
        %v698 = vshrl.u32 %v296, 16
        %v700 = vrot.slane %v698, 4
        %v701 = vshll.u32 %v296, 16
        %v703 = vrot.slane %v701, 5
        %v704 = vor.u32 %v700, %v703
        %v705 = vrot.slane %v704, 4
        %v707 = vshll.u32 %v297, 16
        %v709 = vrot.slane %v707, 5
        %v710 = vsel %vm360, %v705, %v709
        %v712 = vshrl.u32 %v298, 16
        %v714 = vrot.slane %v712, 4
        %v715 = vshll.u32 %v298, 16
        %v717 = vrot.slane %v715, 5
        %v718 = vor.u32 %v714, %v717
        %v719 = vrot.slane %v718, 4
        %v721 = vshll.u32 %v299, 16
        %v723 = vrot.slane %v721, 5
        %v724 = vsel %vm360, %v719, %v723
        %v726 = vshrl.u32 %v300, 16
        %v728 = vrot.slane %v726, 4
        %v729 = vshll.u32 %v300, 16
        %v731 = vrot.slane %v729, 5
        %v732 = vor.u32 %v728, %v731
        %v733 = vrot.slane %v732, 4
        %v735 = vshll.u32 %v301, 16
        %v737 = vrot.slane %v735, 5
        %v738 = vsel %vm360, %v733, %v737
        %v740 = vshrl.u32 %v302, 16
        %v742 = vrot.slane %v740, 4
        %v743 = vshll.u32 %v302, 16
        %v745 = vrot.slane %v743, 5
        %v746 = vor.u32 %v742, %v745
        %v747 = vrot.slane %v746, 4
        %v749 = vshll.u32 %v303, 16
        %v751 = vrot.slane %v749, 5
        %v752 = vsel %vm360, %v747, %v751
        %v754 = vshrl.u32 %v304, 16
        %v756 = vrot.slane %v754, 4
        %v757 = vshll.u32 %v304, 16
        %v759 = vrot.slane %v757, 5
        %v760 = vor.u32 %v756, %v759
        %v761 = vrot.slane %v760, 4
        %v763 = vshll.u32 %v305, 16
        %v765 = vrot.slane %v763, 5
        %v766 = vsel %vm360, %v761, %v765
        %v768 = vshrl.u32 %v306, 16
        %v770 = vrot.slane %v768, 4
        %v771 = vshll.u32 %v306, 16
        %v773 = vrot.slane %v771, 5
        %v774 = vor.u32 %v770, %v773
        %v775 = vrot.slane %v774, 4
        %v777 = vshll.u32 %v307, 16
        %v779 = vrot.slane %v777, 5
        %v780 = vsel %vm360, %v775, %v779
        %v782 = vshrl.u32 %v308, 16
        %v784 = vrot.slane %v782, 4
        %v785 = vshll.u32 %v308, 16
        %v787 = vrot.slane %v785, 5
        %v788 = vor.u32 %v784, %v787
        %v789 = vrot.slane %v788, 4
        %v791 = vshll.u32 %v309, 16
        %v793 = vrot.slane %v791, 5
        %v794 = vsel %vm360, %v789, %v793
        %v796 = vshrl.u32 %v310, 16
        %v798 = vrot.slane %v796, 4
        %v799 = vshll.u32 %v310, 16
        %v801 = vrot.slane %v799, 5
        %v802 = vor.u32 %v798, %v801
        %v803 = vrot.slane %v802, 4
        %v805 = vshll.u32 %v311, 16
        %v807 = vrot.slane %v805, 5
        %v808 = vsel %vm360, %v803, %v807
        %s809 = scalar_lea.vmem %s1, 8
        %v810 = vld [vmem:[%s809] sm:$0xf]
        %v811 = vld [vmem:[%s809 + $0x4] sm:$0xf]
        %v814 = vunpack.c.l.b16 %v810
        %v815 = vunpack.c.l.b16 %v811
        %v816 = vpack.c.b16 %v815, %v814
        %v817 = vunpack.c.l.b16 %v374
        %v818 = vunpack.c.l.b16 %v388
        %v819 = vunpack.c.l.b16 %v402
        %v820 = vunpack.c.l.b16 %v416
        %v821 = vunpack.c.l.b16 %v430
        %v822 = vunpack.c.l.b16 %v444
        %v823 = vunpack.c.l.b16 %v458
        %v824 = vunpack.c.l.b16 %v472
        %v825 = vunpack.c.l.b16 %v486
        %v826 = vunpack.c.l.b16 %v500
        %v827 = vunpack.c.l.b16 %v514
        %v828 = vunpack.c.l.b16 %v528
        %v829 = vunpack.c.l.b16 %v542
        %v830 = vunpack.c.l.b16 %v556
        %v831 = vunpack.c.l.b16 %v570
        %v832 = vunpack.c.l.b16 %v584
        %v833 = vunpack.c.l.b16 %v598
        %v834 = vunpack.c.l.b16 %v612
        %v835 = vunpack.c.l.b16 %v626
        %v836 = vunpack.c.l.b16 %v640
        %v837 = vunpack.c.l.b16 %v654
        %v838 = vunpack.c.l.b16 %v668
        %v839 = vunpack.c.l.b16 %v682
        %v840 = vunpack.c.l.b16 %v696
        %v841 = vunpack.c.l.b16 %v710
        %v842 = vunpack.c.l.b16 %v724
        %v843 = vunpack.c.l.b16 %v738
        %v844 = vunpack.c.l.b16 %v752
        %v845 = vunpack.c.l.b16 %v766
        %v846 = vunpack.c.l.b16 %v780
        %v847 = vunpack.c.l.b16 %v794
        %v848 = vunpack.c.l.b16 %v808
        %v849 = vpack.c.b16 %v818, %v817
        %v850 = vpack.c.b16 %v820, %v819
        %v851 = vpack.c.b16 %v822, %v821
        %v852 = vpack.c.b16 %v824, %v823
        %v853 = vpack.c.b16 %v826, %v825
        %v854 = vpack.c.b16 %v828, %v827
        %v855 = vpack.c.b16 %v830, %v829
        %v856 = vpack.c.b16 %v832, %v831
        %v857 = vpack.c.b16 %v834, %v833
        %v858 = vpack.c.b16 %v836, %v835
        %v859 = vpack.c.b16 %v838, %v837
        %v860 = vpack.c.b16 %v840, %v839
        %v861 = vpack.c.b16 %v842, %v841
        %v862 = vpack.c.b16 %v844, %v843
        %v863 = vpack.c.b16 %v846, %v845
        %v864 = vpack.c.b16 %v848, %v847
        %vm865 = vcmask 31744
        %v867 = vsel %vm865, %v816, 0
        %v870 = vsel %vm865, %v849, 0
        %v873 = vsel %vm865, %v850, 0
        %v876 = vsel %vm865, %v851, 0
        %v879 = vsel %vm865, %v852, 0
        %v882 = vsel %vm865, %v853, 0
        %v885 = vsel %vm865, %v854, 0
        %v888 = vsel %vm865, %v855, 0
        %v891 = vsel %vm865, %v856, 0
        %v894 = vsel %vm865, %v857, 0
        %v897 = vsel %vm865, %v858, 0
        %v900 = vsel %vm865, %v859, 0
        %v903 = vsel %vm865, %v860, 0
        %v906 = vsel %vm865, %v861, 0
        %v909 = vsel %vm865, %v862, 0
        %v912 = vsel %vm865, %v863, 0
        %v915 = vsel %vm865, %v864, 0
        %917 = vmatprep.subr.bf16.mxu0 0
        %918 = vmatpush1.bf16.xpose.msra.mxu0 %v891
        %919 = vmatprep.subr.bf16.mxu0 0
        %920 = vmatpush1.bf16.xpose.msra.mxu0 %v888
        %921 = vmatprep.subr.bf16.mxu0 0
        %922 = vmatpush1.bf16.xpose.msra.mxu0 %v885
        %923 = vmatprep.subr.bf16.mxu0 0
        %924 = vmatpush1.bf16.xpose.msra.mxu0 %v882
        %925 = vmatprep.subr.bf16.mxu0 0
        %926 = vmatpush1.bf16.xpose.msra.mxu0 %v879
        %927 = vmatprep.subr.bf16.mxu0 0
        %928 = vmatpush1.bf16.xpose.msra.mxu0 %v876
        %929 = vmatprep.subr.bf16.mxu0 0
        %930 = vmatpush1.bf16.xpose.msra.mxu0 %v873
        %931 = vmatprep.subr.bf16.mxu0 0
        %932 = vmatpush1.bf16.xpose.msra.mxu0 %v870
        %933 = vmatprep.subr.bf16.mxu0 0
        %934 = vmatpush2.bf16.xpose.msra.mxu0 %v915
        %935 = vmatprep.subr.bf16.mxu0 0
        %936 = vmatpush2.bf16.xpose.msra.mxu0 %v912
        %937 = vmatprep.subr.bf16.mxu0 0
        %938 = vmatpush2.bf16.xpose.msra.mxu0 %v909
        %939 = vmatprep.subr.bf16.mxu0 0
        %940 = vmatpush2.bf16.xpose.msra.mxu0 %v906
        %941 = vmatprep.subr.bf16.mxu0 0
        %942 = vmatpush2.bf16.xpose.msra.mxu0 %v903
        %943 = vmatprep.subr.bf16.mxu0 0
        %944 = vmatpush2.bf16.xpose.msra.mxu0 %v900
        %945 = vmatprep.subr.bf16.mxu0 0
        %946 = vmatpush2.bf16.xpose.msra.mxu0 %v897
        %947 = vmatprep.subr.bf16.mxu0 0
        %948 = vmatpush2.bf16.xpose.msra.mxu0 %v894
        %949 = vmatprep.mubr.bf16.mxu0 0
        %950 = vmatmul.mubr.bf16.gmra.mxu0 %v867
        %v951 = vpop.f32.mrf.mxu0
        %v952 = vadd.f32 0.0, %v951
        %v953 = vpop.f32.mrf.mxu0
        %v954 = vadd.f32 0.0, %v953
        %v955 = vpop.f32.mrf.mxu0
        %v956 = vadd.f32 0.0, %v955
        %v957 = vpop.f32.mrf.mxu0
        %v958 = vadd.f32 0.0, %v957
        %959 = vdwg.mxu0
        %v962 = vunpack.c.l.b16 %v356
        %v963 = vunpack.c.l.b16 %v357
        %v964 = vpack.c.b16 %v963, %v962
        %v997 = vunpack.c.l.b16 %v236
        %v998 = vunpack.c.l.b16 %v238
        %v999 = vunpack.c.l.b16 %v240
        %v1000 = vunpack.c.l.b16 %v242
        %v1001 = vunpack.c.l.b16 %v244
        %v1002 = vunpack.c.l.b16 %v246
        %v1003 = vunpack.c.l.b16 %v248
        %v1004 = vunpack.c.l.b16 %v250
        %v1005 = vunpack.c.l.b16 %v256
        %v1006 = vunpack.c.l.b16 %v258
        %v1007 = vunpack.c.l.b16 %v260
        %v1008 = vunpack.c.l.b16 %v262
        %v1009 = vunpack.c.l.b16 %v264
        %v1010 = vunpack.c.l.b16 %v266
        %v1011 = vunpack.c.l.b16 %v268
        %v1012 = vunpack.c.l.b16 %v270
        %v1013 = vunpack.c.l.b16 %v276
        %v1014 = vunpack.c.l.b16 %v278
        %v1015 = vunpack.c.l.b16 %v280
        %v1016 = vunpack.c.l.b16 %v282
        %v1017 = vunpack.c.l.b16 %v284
        %v1018 = vunpack.c.l.b16 %v286
        %v1019 = vunpack.c.l.b16 %v288
        %v1020 = vunpack.c.l.b16 %v290
        %v1021 = vunpack.c.l.b16 %v296
        %v1022 = vunpack.c.l.b16 %v298
        %v1023 = vunpack.c.l.b16 %v300
        %v1024 = vunpack.c.l.b16 %v302
        %v1025 = vunpack.c.l.b16 %v304
        %v1026 = vunpack.c.l.b16 %v306
        %v1027 = vunpack.c.l.b16 %v308
        %v1028 = vunpack.c.l.b16 %v310
        %v1029 = vpack.c.b16 %v998, %v997
        %v1030 = vpack.c.b16 %v1000, %v999
        %v1031 = vpack.c.b16 %v1002, %v1001
        %v1032 = vpack.c.b16 %v1004, %v1003
        %v1033 = vpack.c.b16 %v1006, %v1005
        %v1034 = vpack.c.b16 %v1008, %v1007
        %v1035 = vpack.c.b16 %v1010, %v1009
        %v1036 = vpack.c.b16 %v1012, %v1011
        %v1037 = vpack.c.b16 %v1014, %v1013
        %v1038 = vpack.c.b16 %v1016, %v1015
        %v1039 = vpack.c.b16 %v1018, %v1017
        %v1040 = vpack.c.b16 %v1020, %v1019
        %v1041 = vpack.c.b16 %v1022, %v1021
        %v1042 = vpack.c.b16 %v1024, %v1023
        %v1043 = vpack.c.b16 %v1026, %v1025
        %v1044 = vpack.c.b16 %v1028, %v1027
        %v1046 = vsel %vm865, %v964, 0
        %v1049 = vsel %vm865, %v1029, 0
        %v1052 = vsel %vm865, %v1030, 0
        %v1055 = vsel %vm865, %v1031, 0
        %v1058 = vsel %vm865, %v1032, 0
        %v1061 = vsel %vm865, %v1033, 0
        %v1064 = vsel %vm865, %v1034, 0
        %v1067 = vsel %vm865, %v1035, 0
        %v1070 = vsel %vm865, %v1036, 0
        %v1073 = vsel %vm865, %v1037, 0
        %v1076 = vsel %vm865, %v1038, 0
        %v1079 = vsel %vm865, %v1039, 0
        %v1082 = vsel %vm865, %v1040, 0
        %v1085 = vsel %vm865, %v1041, 0
        %v1088 = vsel %vm865, %v1042, 0
        %v1091 = vsel %vm865, %v1043, 0
        %v1094 = vsel %vm865, %v1044, 0
        %1096 = vmatprep.subr.bf16.mxu0 0
        %1097 = vmatpush1.bf16.xpose.msra.mxu0 %v1070
        %1098 = vmatprep.subr.bf16.mxu0 0
        %1099 = vmatpush1.bf16.xpose.msra.mxu0 %v1067
        %1100 = vmatprep.subr.bf16.mxu0 0
        %1101 = vmatpush1.bf16.xpose.msra.mxu0 %v1064
        %1102 = vmatprep.subr.bf16.mxu0 0
        %1103 = vmatpush1.bf16.xpose.msra.mxu0 %v1061
        %1104 = vmatprep.subr.bf16.mxu0 0
        %1105 = vmatpush1.bf16.xpose.msra.mxu0 %v1058
        %1106 = vmatprep.subr.bf16.mxu0 0
        %1107 = vmatpush1.bf16.xpose.msra.mxu0 %v1055
        %1108 = vmatprep.subr.bf16.mxu0 0
        %1109 = vmatpush1.bf16.xpose.msra.mxu0 %v1052
        %1110 = vmatprep.subr.bf16.mxu0 0
        %1111 = vmatpush1.bf16.xpose.msra.mxu0 %v1049
        %1112 = vmatprep.subr.bf16.mxu0 0
        %1113 = vmatpush2.bf16.xpose.msra.mxu0 %v1094
        %1114 = vmatprep.subr.bf16.mxu0 0
        %1115 = vmatpush2.bf16.xpose.msra.mxu0 %v1091
        %1116 = vmatprep.subr.bf16.mxu0 0
        %1117 = vmatpush2.bf16.xpose.msra.mxu0 %v1088
        %1118 = vmatprep.subr.bf16.mxu0 0
        %1119 = vmatpush2.bf16.xpose.msra.mxu0 %v1085
        %1120 = vmatprep.subr.bf16.mxu0 0
        %1121 = vmatpush2.bf16.xpose.msra.mxu0 %v1082
        %1122 = vmatprep.subr.bf16.mxu0 0
        %1123 = vmatpush2.bf16.xpose.msra.mxu0 %v1079
        %1124 = vmatprep.subr.bf16.mxu0 0
        %1125 = vmatpush2.bf16.xpose.msra.mxu0 %v1076
        %1126 = vmatprep.subr.bf16.mxu0 0
        %1127 = vmatpush2.bf16.xpose.msra.mxu0 %v1073
        %1128 = vmatprep.mubr.bf16.mxu0 0
        %1129 = vmatmul.mubr.bf16.gmra.mxu0 %v1046
        %v1130 = vpop.f32.mrf.mxu0
        %v1131 = vadd.f32 %v952, %v1130
        %v1132 = vpop.f32.mrf.mxu0
        %v1133 = vadd.f32 %v954, %v1132
        %v1134 = vpop.f32.mrf.mxu0
        %v1135 = vadd.f32 %v956, %v1134
        %v1136 = vpop.f32.mrf.mxu0
        %v1137 = vadd.f32 %v958, %v1136
        %1138 = vdwg.mxu0
        %vm1171 = vcmask 1042432
        %vm1172 = vcmask 1046532
        %vm1173 = vmor %vm1171, %vm1172
        %v1174 = vrot.slane %v236, 5
        %v1175 = vrot.slane %v1174, 4
        %v1176 = vrot.slane %v237, 5
        %v1177 = vsel %vm1173, %v1175, %v1176
        %v1178 = vrot.slane %v238, 5
        %v1179 = vrot.slane %v1178, 4
        %v1180 = vrot.slane %v239, 5
        %v1181 = vsel %vm1173, %v1179, %v1180
        %v1182 = vrot.slane %v240, 5
        %v1183 = vrot.slane %v1182, 4
        %v1184 = vrot.slane %v241, 5
        %v1185 = vsel %vm1173, %v1183, %v1184
        %v1186 = vrot.slane %v242, 5
        %v1187 = vrot.slane %v1186, 4
        %v1188 = vrot.slane %v243, 5
        %v1189 = vsel %vm1173, %v1187, %v1188
        %v1190 = vrot.slane %v244, 5
        %v1191 = vrot.slane %v1190, 4
        %v1192 = vrot.slane %v245, 5
        %v1193 = vsel %vm1173, %v1191, %v1192
        %v1194 = vrot.slane %v246, 5
        %v1195 = vrot.slane %v1194, 4
        %v1196 = vrot.slane %v247, 5
        %v1197 = vsel %vm1173, %v1195, %v1196
        %v1198 = vrot.slane %v248, 5
        %v1199 = vrot.slane %v1198, 4
        %v1200 = vrot.slane %v249, 5
        %v1201 = vsel %vm1173, %v1199, %v1200
        %v1202 = vrot.slane %v250, 5
        %v1203 = vrot.slane %v1202, 4
        %v1204 = vrot.slane %v251, 5
        %v1205 = vsel %vm1173, %v1203, %v1204
        %v1206 = vrot.slane %v256, 5
        %v1207 = vrot.slane %v1206, 4
        %v1208 = vrot.slane %v257, 5
        %v1209 = vsel %vm1173, %v1207, %v1208
        %v1210 = vrot.slane %v258, 5
        %v1211 = vrot.slane %v1210, 4
        %v1212 = vrot.slane %v259, 5
        %v1213 = vsel %vm1173, %v1211, %v1212
        %v1214 = vrot.slane %v260, 5
        %v1215 = vrot.slane %v1214, 4
        %v1216 = vrot.slane %v261, 5
        %v1217 = vsel %vm1173, %v1215, %v1216
        %v1218 = vrot.slane %v262, 5
        %v1219 = vrot.slane %v1218, 4
        %v1220 = vrot.slane %v263, 5
        %v1221 = vsel %vm1173, %v1219, %v1220
        %v1222 = vrot.slane %v264, 5
        %v1223 = vrot.slane %v1222, 4
        %v1224 = vrot.slane %v265, 5
        %v1225 = vsel %vm1173, %v1223, %v1224
        %v1226 = vrot.slane %v266, 5
        %v1227 = vrot.slane %v1226, 4
        %v1228 = vrot.slane %v267, 5
        %v1229 = vsel %vm1173, %v1227, %v1228
        %v1230 = vrot.slane %v268, 5
        %v1231 = vrot.slane %v1230, 4
        %v1232 = vrot.slane %v269, 5
        %v1233 = vsel %vm1173, %v1231, %v1232
        %v1234 = vrot.slane %v270, 5
        %v1235 = vrot.slane %v1234, 4
        %v1236 = vrot.slane %v271, 5
        %v1237 = vsel %vm1173, %v1235, %v1236
        %v1238 = vrot.slane %v276, 5
        %v1239 = vrot.slane %v1238, 4
        %v1240 = vrot.slane %v277, 5
        %v1241 = vsel %vm1173, %v1239, %v1240
        %v1242 = vrot.slane %v278, 5
        %v1243 = vrot.slane %v1242, 4
        %v1244 = vrot.slane %v279, 5
        %v1245 = vsel %vm1173, %v1243, %v1244
        %v1246 = vrot.slane %v280, 5
        %v1247 = vrot.slane %v1246, 4
        %v1248 = vrot.slane %v281, 5
        %v1249 = vsel %vm1173, %v1247, %v1248
        %v1250 = vrot.slane %v282, 5
        %v1251 = vrot.slane %v1250, 4
        %v1252 = vrot.slane %v283, 5
        %v1253 = vsel %vm1173, %v1251, %v1252
        %v1254 = vrot.slane %v284, 5
        %v1255 = vrot.slane %v1254, 4
        %v1256 = vrot.slane %v285, 5
        %v1257 = vsel %vm1173, %v1255, %v1256
        %v1258 = vrot.slane %v286, 5
        %v1259 = vrot.slane %v1258, 4
        %v1260 = vrot.slane %v287, 5
        %v1261 = vsel %vm1173, %v1259, %v1260
        %v1262 = vrot.slane %v288, 5
        %v1263 = vrot.slane %v1262, 4
        %v1264 = vrot.slane %v289, 5
        %v1265 = vsel %vm1173, %v1263, %v1264
        %v1266 = vrot.slane %v290, 5
        %v1267 = vrot.slane %v1266, 4
        %v1268 = vrot.slane %v291, 5
        %v1269 = vsel %vm1173, %v1267, %v1268
        %v1270 = vrot.slane %v296, 5
        %v1271 = vrot.slane %v1270, 4
        %v1272 = vrot.slane %v297, 5
        %v1273 = vsel %vm1173, %v1271, %v1272
        %v1274 = vrot.slane %v298, 5
        %v1275 = vrot.slane %v1274, 4
        %v1276 = vrot.slane %v299, 5
        %v1277 = vsel %vm1173, %v1275, %v1276
        %v1278 = vrot.slane %v300, 5
        %v1279 = vrot.slane %v1278, 4
        %v1280 = vrot.slane %v301, 5
        %v1281 = vsel %vm1173, %v1279, %v1280
        %v1282 = vrot.slane %v302, 5
        %v1283 = vrot.slane %v1282, 4
        %v1284 = vrot.slane %v303, 5
        %v1285 = vsel %vm1173, %v1283, %v1284
        %v1286 = vrot.slane %v304, 5
        %v1287 = vrot.slane %v1286, 4
        %v1288 = vrot.slane %v305, 5
        %v1289 = vsel %vm1173, %v1287, %v1288
        %v1290 = vrot.slane %v306, 5
        %v1291 = vrot.slane %v1290, 4
        %v1292 = vrot.slane %v307, 5
        %v1293 = vsel %vm1173, %v1291, %v1292
        %v1294 = vrot.slane %v308, 5
        %v1295 = vrot.slane %v1294, 4
        %v1296 = vrot.slane %v309, 5
        %v1297 = vsel %vm1173, %v1295, %v1296
        %v1298 = vrot.slane %v310, 5
        %v1299 = vrot.slane %v1298, 4
        %v1300 = vrot.slane %v311, 5
        %v1301 = vsel %vm1173, %v1299, %v1300
        %s1302 = scalar_lea.vmem %s1, 16
        %v1303 = vld [vmem:[%s1302] sm:$0xf]
        %v1304 = vld [vmem:[%s1302 + $0x4] sm:$0xf]
        %v1307 = vunpack.c.l.b16 %v1303
        %v1308 = vunpack.c.l.b16 %v1304
        %v1309 = vpack.c.b16 %v1308, %v1307
        %v1310 = vunpack.c.l.b16 %v1177
        %v1311 = vunpack.c.l.b16 %v1181
        %v1312 = vunpack.c.l.b16 %v1185
        %v1313 = vunpack.c.l.b16 %v1189
        %v1314 = vunpack.c.l.b16 %v1193
        %v1315 = vunpack.c.l.b16 %v1197
        %v1316 = vunpack.c.l.b16 %v1201
        %v1317 = vunpack.c.l.b16 %v1205
        %v1318 = vunpack.c.l.b16 %v1209
        %v1319 = vunpack.c.l.b16 %v1213
        %v1320 = vunpack.c.l.b16 %v1217
        %v1321 = vunpack.c.l.b16 %v1221
        %v1322 = vunpack.c.l.b16 %v1225
        %v1323 = vunpack.c.l.b16 %v1229
        %v1324 = vunpack.c.l.b16 %v1233
        %v1325 = vunpack.c.l.b16 %v1237
        %v1326 = vunpack.c.l.b16 %v1241
        %v1327 = vunpack.c.l.b16 %v1245
        %v1328 = vunpack.c.l.b16 %v1249
        %v1329 = vunpack.c.l.b16 %v1253
        %v1330 = vunpack.c.l.b16 %v1257
        %v1331 = vunpack.c.l.b16 %v1261
        %v1332 = vunpack.c.l.b16 %v1265
        %v1333 = vunpack.c.l.b16 %v1269
        %v1334 = vunpack.c.l.b16 %v1273
        %v1335 = vunpack.c.l.b16 %v1277
        %v1336 = vunpack.c.l.b16 %v1281
        %v1337 = vunpack.c.l.b16 %v1285
        %v1338 = vunpack.c.l.b16 %v1289
        %v1339 = vunpack.c.l.b16 %v1293
        %v1340 = vunpack.c.l.b16 %v1297
        %v1341 = vunpack.c.l.b16 %v1301
        %v1342 = vpack.c.b16 %v1311, %v1310
        %v1343 = vpack.c.b16 %v1313, %v1312
        %v1344 = vpack.c.b16 %v1315, %v1314
        %v1345 = vpack.c.b16 %v1317, %v1316
        %v1346 = vpack.c.b16 %v1319, %v1318
        %v1347 = vpack.c.b16 %v1321, %v1320
        %v1348 = vpack.c.b16 %v1323, %v1322
        %v1349 = vpack.c.b16 %v1325, %v1324
        %v1350 = vpack.c.b16 %v1327, %v1326
        %v1351 = vpack.c.b16 %v1329, %v1328
        %v1352 = vpack.c.b16 %v1331, %v1330
        %v1353 = vpack.c.b16 %v1333, %v1332
        %v1354 = vpack.c.b16 %v1335, %v1334
        %v1355 = vpack.c.b16 %v1337, %v1336
        %v1356 = vpack.c.b16 %v1339, %v1338
        %v1357 = vpack.c.b16 %v1341, %v1340
        %v1359 = vsel %vm865, %v1309, 0
        %v1362 = vsel %vm865, %v1342, 0
        %v1365 = vsel %vm865, %v1343, 0
        %v1368 = vsel %vm865, %v1344, 0
        %v1371 = vsel %vm865, %v1345, 0
        %v1374 = vsel %vm865, %v1346, 0
        %v1377 = vsel %vm865, %v1347, 0
        %v1380 = vsel %vm865, %v1348, 0
        %v1383 = vsel %vm865, %v1349, 0
        %v1386 = vsel %vm865, %v1350, 0
        %v1389 = vsel %vm865, %v1351, 0
        %v1392 = vsel %vm865, %v1352, 0
        %v1395 = vsel %vm865, %v1353, 0
        %v1398 = vsel %vm865, %v1354, 0
        %v1401 = vsel %vm865, %v1355, 0
        %v1404 = vsel %vm865, %v1356, 0
        %v1407 = vsel %vm865, %v1357, 0
        %1409 = vmatprep.subr.bf16.mxu0 0
        %1410 = vmatpush1.bf16.xpose.msra.mxu0 %v1383
        %1411 = vmatprep.subr.bf16.mxu0 0
        %1412 = vmatpush1.bf16.xpose.msra.mxu0 %v1380
        %1413 = vmatprep.subr.bf16.mxu0 0
        %1414 = vmatpush1.bf16.xpose.msra.mxu0 %v1377
        %1415 = vmatprep.subr.bf16.mxu0 0
        %1416 = vmatpush1.bf16.xpose.msra.mxu0 %v1374
        %1417 = vmatprep.subr.bf16.mxu0 0
        %1418 = vmatpush1.bf16.xpose.msra.mxu0 %v1371
        %1419 = vmatprep.subr.bf16.mxu0 0
        %1420 = vmatpush1.bf16.xpose.msra.mxu0 %v1368
        %1421 = vmatprep.subr.bf16.mxu0 0
        %1422 = vmatpush1.bf16.xpose.msra.mxu0 %v1365
        %1423 = vmatprep.subr.bf16.mxu0 0
        %1424 = vmatpush1.bf16.xpose.msra.mxu0 %v1362
        %1425 = vmatprep.subr.bf16.mxu0 0
        %1426 = vmatpush2.bf16.xpose.msra.mxu0 %v1407
        %1427 = vmatprep.subr.bf16.mxu0 0
        %1428 = vmatpush2.bf16.xpose.msra.mxu0 %v1404
        %1429 = vmatprep.subr.bf16.mxu0 0
        %1430 = vmatpush2.bf16.xpose.msra.mxu0 %v1401
        %1431 = vmatprep.subr.bf16.mxu0 0
        %1432 = vmatpush2.bf16.xpose.msra.mxu0 %v1398
        %1433 = vmatprep.subr.bf16.mxu0 0
        %1434 = vmatpush2.bf16.xpose.msra.mxu0 %v1395
        %1435 = vmatprep.subr.bf16.mxu0 0
        %1436 = vmatpush2.bf16.xpose.msra.mxu0 %v1392
        %1437 = vmatprep.subr.bf16.mxu0 0
        %1438 = vmatpush2.bf16.xpose.msra.mxu0 %v1389
        %1439 = vmatprep.subr.bf16.mxu0 0
        %1440 = vmatpush2.bf16.xpose.msra.mxu0 %v1386
        %1441 = vmatprep.mubr.bf16.mxu0 0
        %1442 = vmatmul.mubr.bf16.gmra.mxu0 %v1359
        %v1443 = vpop.f32.mrf.mxu0
        %v1444 = vadd.f32 0.0, %v1443
        %v1445 = vpop.f32.mrf.mxu0
        %v1446 = vadd.f32 0.0, %v1445
        %v1447 = vpop.f32.mrf.mxu0
        %v1448 = vadd.f32 0.0, %v1447
        %v1449 = vpop.f32.mrf.mxu0
        %v1450 = vadd.f32 0.0, %v1449
        %1451 = vdwg.mxu0
        %v1452 = vadd.f32 %v1131, %v1444
        %v1453 = vadd.f32 %v1133, %v1446
        %v1454 = vadd.f32 %v1135, %v1448
        %v1455 = vadd.f32 %v1137, %v1450
        %s1456 = scalar_lea.vmem %s1, 24
        %v1457 = vld [vmem:[%s1456] sm:$0xf]
        %v1458 = vld [vmem:[%s1456 + $0x4] sm:$0xf]
        %v1461 = vunpack.c.l.b16 %v1457
        %v1462 = vunpack.c.l.b16 %v1458
        %v1463 = vpack.c.b16 %v1462, %v1461
        %v1468 = vunpack.c.l.b16 %v252
        %v1469 = vunpack.c.l.b16 %v272
        %v1470 = vunpack.c.l.b16 %v292
        %v1471 = vunpack.c.l.b16 %v312
        %v1472 = vpack.c.b16 %v999, %v998
        %v1473 = vpack.c.b16 %v1001, %v1000
        %v1474 = vpack.c.b16 %v1003, %v1002
        %v1475 = vpack.c.b16 %v1468, %v1004
        %v1476 = vpack.c.b16 %v1007, %v1006
        %v1477 = vpack.c.b16 %v1009, %v1008
        %v1478 = vpack.c.b16 %v1011, %v1010
        %v1479 = vpack.c.b16 %v1469, %v1012
        %v1480 = vpack.c.b16 %v1015, %v1014
        %v1481 = vpack.c.b16 %v1017, %v1016
        %v1482 = vpack.c.b16 %v1019, %v1018
        %v1483 = vpack.c.b16 %v1470, %v1020
        %v1484 = vpack.c.b16 %v1023, %v1022
        %v1485 = vpack.c.b16 %v1025, %v1024
        %v1486 = vpack.c.b16 %v1027, %v1026
        %v1487 = vpack.c.b16 %v1471, %v1028
        %v1489 = vsel %vm865, %v1463, 0
        %v1492 = vsel %vm865, %v1472, 0
        %v1495 = vsel %vm865, %v1473, 0
        %v1498 = vsel %vm865, %v1474, 0
        %v1501 = vsel %vm865, %v1475, 0
        %v1504 = vsel %vm865, %v1476, 0
        %v1507 = vsel %vm865, %v1477, 0
        %v1510 = vsel %vm865, %v1478, 0
        %v1513 = vsel %vm865, %v1479, 0
        %v1516 = vsel %vm865, %v1480, 0
        %v1519 = vsel %vm865, %v1481, 0
        %v1522 = vsel %vm865, %v1482, 0
        %v1525 = vsel %vm865, %v1483, 0
        %v1528 = vsel %vm865, %v1484, 0
        %v1531 = vsel %vm865, %v1485, 0
        %v1534 = vsel %vm865, %v1486, 0
        %v1537 = vsel %vm865, %v1487, 0
        %1539 = vmatprep.subr.bf16.mxu0 0
        %1540 = vmatpush1.bf16.xpose.msra.mxu0 %v1513
        %1541 = vmatprep.subr.bf16.mxu0 0
        %1542 = vmatpush1.bf16.xpose.msra.mxu0 %v1510
        %1543 = vmatprep.subr.bf16.mxu0 0
        %1544 = vmatpush1.bf16.xpose.msra.mxu0 %v1507
        %1545 = vmatprep.subr.bf16.mxu0 0
        %1546 = vmatpush1.bf16.xpose.msra.mxu0 %v1504
        %1547 = vmatprep.subr.bf16.mxu0 0
        %1548 = vmatpush1.bf16.xpose.msra.mxu0 %v1501
        %1549 = vmatprep.subr.bf16.mxu0 0
        %1550 = vmatpush1.bf16.xpose.msra.mxu0 %v1498
        %1551 = vmatprep.subr.bf16.mxu0 0
        %1552 = vmatpush1.bf16.xpose.msra.mxu0 %v1495
        %1553 = vmatprep.subr.bf16.mxu0 0
        %1554 = vmatpush1.bf16.xpose.msra.mxu0 %v1492
        %1555 = vmatprep.subr.bf16.mxu0 0
        %1556 = vmatpush2.bf16.xpose.msra.mxu0 %v1537
        %1557 = vmatprep.subr.bf16.mxu0 0
        %1558 = vmatpush2.bf16.xpose.msra.mxu0 %v1534
        %1559 = vmatprep.subr.bf16.mxu0 0
        %1560 = vmatpush2.bf16.xpose.msra.mxu0 %v1531
        %1561 = vmatprep.subr.bf16.mxu0 0
        %1562 = vmatpush2.bf16.xpose.msra.mxu0 %v1528
        %1563 = vmatprep.subr.bf16.mxu0 0
        %1564 = vmatpush2.bf16.xpose.msra.mxu0 %v1525
        %1565 = vmatprep.subr.bf16.mxu0 0
        %1566 = vmatpush2.bf16.xpose.msra.mxu0 %v1522
        %1567 = vmatprep.subr.bf16.mxu0 0
        %1568 = vmatpush2.bf16.xpose.msra.mxu0 %v1519
        %1569 = vmatprep.subr.bf16.mxu0 0
        %1570 = vmatpush2.bf16.xpose.msra.mxu0 %v1516
        %1571 = vmatprep.mubr.bf16.mxu0 0
        %1572 = vmatmul.mubr.bf16.gmra.mxu0 %v1489
        %v1573 = vpop.f32.mrf.mxu0
        %v1574 = vadd.f32 0.0, %v1573
        %v1575 = vpop.f32.mrf.mxu0
        %v1576 = vadd.f32 0.0, %v1575
        %v1577 = vpop.f32.mrf.mxu0
        %v1578 = vadd.f32 0.0, %v1577
        %v1579 = vpop.f32.mrf.mxu0
        %v1580 = vadd.f32 0.0, %v1579
        %1581 = vdwg.mxu0
        %v1582 = vadd.f32 %v1452, %v1574
        %v1583 = vadd.f32 %v1453, %v1576
        %v1584 = vadd.f32 %v1454, %v1578
        %v1585 = vadd.f32 %v1455, %v1580
        %v1587 = vshrl.u32 %v252, 16
        %v1589 = vrot.slane %v1587, 4
        %v1590 = vshll.u32 %v252, 16
        %v1592 = vrot.slane %v1590, 5
        %v1593 = vor.u32 %v1589, %v1592
        %v1594 = vrot.slane %v1593, 4
        %v1596 = vshll.u32 %v253, 16
        %v1598 = vrot.slane %v1596, 5
        %v1599 = vsel %vm360, %v1594, %v1598
        %v1601 = vshrl.u32 %v272, 16
        %v1603 = vrot.slane %v1601, 4
        %v1604 = vshll.u32 %v272, 16
        %v1606 = vrot.slane %v1604, 5
        %v1607 = vor.u32 %v1603, %v1606
        %v1608 = vrot.slane %v1607, 4
        %v1610 = vshll.u32 %v273, 16
        %v1612 = vrot.slane %v1610, 5
        %v1613 = vsel %vm360, %v1608, %v1612
        %v1615 = vshrl.u32 %v292, 16
        %v1617 = vrot.slane %v1615, 4
        %v1618 = vshll.u32 %v292, 16
        %v1620 = vrot.slane %v1618, 5
        %v1621 = vor.u32 %v1617, %v1620
        %v1622 = vrot.slane %v1621, 4
        %v1624 = vshll.u32 %v293, 16
        %v1626 = vrot.slane %v1624, 5
        %v1627 = vsel %vm360, %v1622, %v1626
        %v1629 = vshrl.u32 %v312, 16
        %v1631 = vrot.slane %v1629, 4
        %v1632 = vshll.u32 %v312, 16
        %v1634 = vrot.slane %v1632, 5
        %v1635 = vor.u32 %v1631, %v1634
        %v1636 = vrot.slane %v1635, 4
        %v1638 = vshll.u32 %v313, 16
        %v1640 = vrot.slane %v1638, 5
        %v1641 = vsel %vm360, %v1636, %v1640
        %s1642 = scalar_lea.vmem %s1, 32
        %v1643 = vld [vmem:[%s1642] sm:$0xf]
        %v1644 = vld [vmem:[%s1642 + $0x4] sm:$0xf]
        %v1647 = vunpack.c.l.b16 %v1643
        %v1648 = vunpack.c.l.b16 %v1644
        %v1649 = vpack.c.b16 %v1648, %v1647
        %v1650 = vunpack.c.l.b16 %v1599
        %v1651 = vunpack.c.l.b16 %v1613
        %v1652 = vunpack.c.l.b16 %v1627
        %v1653 = vunpack.c.l.b16 %v1641
        %v1654 = vpack.c.b16 %v819, %v818
        %v1655 = vpack.c.b16 %v821, %v820
        %v1656 = vpack.c.b16 %v823, %v822
        %v1657 = vpack.c.b16 %v1650, %v824
        %v1658 = vpack.c.b16 %v827, %v826
        %v1659 = vpack.c.b16 %v829, %v828
        %v1660 = vpack.c.b16 %v831, %v830
        %v1661 = vpack.c.b16 %v1651, %v832
        %v1662 = vpack.c.b16 %v835, %v834
        %v1663 = vpack.c.b16 %v837, %v836
        %v1664 = vpack.c.b16 %v839, %v838
        %v1665 = vpack.c.b16 %v1652, %v840
        %v1666 = vpack.c.b16 %v843, %v842
        %v1667 = vpack.c.b16 %v845, %v844
        %v1668 = vpack.c.b16 %v847, %v846
        %v1669 = vpack.c.b16 %v1653, %v848
        %v1671 = vsel %vm865, %v1649, 0
        %v1674 = vsel %vm865, %v1654, 0
        %v1677 = vsel %vm865, %v1655, 0
        %v1680 = vsel %vm865, %v1656, 0
        %v1683 = vsel %vm865, %v1657, 0
        %v1686 = vsel %vm865, %v1658, 0
        %v1689 = vsel %vm865, %v1659, 0
        %v1692 = vsel %vm865, %v1660, 0
        %v1695 = vsel %vm865, %v1661, 0
        %v1698 = vsel %vm865, %v1662, 0
        %v1701 = vsel %vm865, %v1663, 0
        %v1704 = vsel %vm865, %v1664, 0
        %v1707 = vsel %vm865, %v1665, 0
        %v1710 = vsel %vm865, %v1666, 0
        %v1713 = vsel %vm865, %v1667, 0
        %v1716 = vsel %vm865, %v1668, 0
        %v1719 = vsel %vm865, %v1669, 0
        %1721 = vmatprep.subr.bf16.mxu0 0
        %1722 = vmatpush1.bf16.xpose.msra.mxu0 %v1695
        %1723 = vmatprep.subr.bf16.mxu0 0
        %1724 = vmatpush1.bf16.xpose.msra.mxu0 %v1692
        %1725 = vmatprep.subr.bf16.mxu0 0
        %1726 = vmatpush1.bf16.xpose.msra.mxu0 %v1689
        %1727 = vmatprep.subr.bf16.mxu0 0
        %1728 = vmatpush1.bf16.xpose.msra.mxu0 %v1686
        %1729 = vmatprep.subr.bf16.mxu0 0
        %1730 = vmatpush1.bf16.xpose.msra.mxu0 %v1683
        %1731 = vmatprep.subr.bf16.mxu0 0
        %1732 = vmatpush1.bf16.xpose.msra.mxu0 %v1680
        %1733 = vmatprep.subr.bf16.mxu0 0
        %1734 = vmatpush1.bf16.xpose.msra.mxu0 %v1677
        %1735 = vmatprep.subr.bf16.mxu0 0
        %1736 = vmatpush1.bf16.xpose.msra.mxu0 %v1674
        %1737 = vmatprep.subr.bf16.mxu0 0
        %1738 = vmatpush2.bf16.xpose.msra.mxu0 %v1719
        %1739 = vmatprep.subr.bf16.mxu0 0
        %1740 = vmatpush2.bf16.xpose.msra.mxu0 %v1716
        %1741 = vmatprep.subr.bf16.mxu0 0
        %1742 = vmatpush2.bf16.xpose.msra.mxu0 %v1713
        %1743 = vmatprep.subr.bf16.mxu0 0
        %1744 = vmatpush2.bf16.xpose.msra.mxu0 %v1710
        %1745 = vmatprep.subr.bf16.mxu0 0
        %1746 = vmatpush2.bf16.xpose.msra.mxu0 %v1707
        %1747 = vmatprep.subr.bf16.mxu0 0
        %1748 = vmatpush2.bf16.xpose.msra.mxu0 %v1704
        %1749 = vmatprep.subr.bf16.mxu0 0
        %1750 = vmatpush2.bf16.xpose.msra.mxu0 %v1701
        %1751 = vmatprep.subr.bf16.mxu0 0
        %1752 = vmatpush2.bf16.xpose.msra.mxu0 %v1698
        %1753 = vmatprep.mubr.bf16.mxu0 0
        %1754 = vmatmul.mubr.bf16.gmra.mxu0 %v1671
        %v1755 = vpop.f32.mrf.mxu0
        %v1756 = vadd.f32 0.0, %v1755
        %v1757 = vpop.f32.mrf.mxu0
        %v1758 = vadd.f32 0.0, %v1757
        %v1759 = vpop.f32.mrf.mxu0
        %v1760 = vadd.f32 0.0, %v1759
        %v1761 = vpop.f32.mrf.mxu0
        %v1762 = vadd.f32 0.0, %v1761
        %1763 = vdwg.mxu0
        %v1764 = vadd.f32 %v1582, %v1756
        %v1765 = vadd.f32 %v1583, %v1758
        %v1766 = vadd.f32 %v1584, %v1760
        %v1767 = vadd.f32 %v1585, %v1762
        %v1772 = vrot.slane %v252, 5
        %v1773 = vrot.slane %v1772, 4
        %v1774 = vrot.slane %v253, 5
        %v1775 = vsel %vm1173, %v1773, %v1774
        %v1776 = vrot.slane %v272, 5
        %v1777 = vrot.slane %v1776, 4
        %v1778 = vrot.slane %v273, 5
        %v1779 = vsel %vm1173, %v1777, %v1778
        %v1780 = vrot.slane %v292, 5
        %v1781 = vrot.slane %v1780, 4
        %v1782 = vrot.slane %v293, 5
        %v1783 = vsel %vm1173, %v1781, %v1782
        %v1784 = vrot.slane %v312, 5
        %v1785 = vrot.slane %v1784, 4
        %v1786 = vrot.slane %v313, 5
        %v1787 = vsel %vm1173, %v1785, %v1786
        %s1788 = scalar_lea.vmem %s1, 40
        %v1789 = vld [vmem:[%s1788] sm:$0xf]
        %v1790 = vld [vmem:[%s1788 + $0x4] sm:$0xf]
        %v1793 = vunpack.c.l.b16 %v1789
        %v1794 = vunpack.c.l.b16 %v1790
        %v1795 = vpack.c.b16 %v1794, %v1793
        %v1796 = vunpack.c.l.b16 %v1775
        %v1797 = vunpack.c.l.b16 %v1779
        %v1798 = vunpack.c.l.b16 %v1783
        %v1799 = vunpack.c.l.b16 %v1787
        %v1800 = vpack.c.b16 %v1312, %v1311
        %v1801 = vpack.c.b16 %v1314, %v1313
        %v1802 = vpack.c.b16 %v1316, %v1315
        %v1803 = vpack.c.b16 %v1796, %v1317
        %v1804 = vpack.c.b16 %v1320, %v1319
        %v1805 = vpack.c.b16 %v1322, %v1321
        %v1806 = vpack.c.b16 %v1324, %v1323
        %v1807 = vpack.c.b16 %v1797, %v1325
        %v1808 = vpack.c.b16 %v1328, %v1327
        %v1809 = vpack.c.b16 %v1330, %v1329
        %v1810 = vpack.c.b16 %v1332, %v1331
        %v1811 = vpack.c.b16 %v1798, %v1333
        %v1812 = vpack.c.b16 %v1336, %v1335
        %v1813 = vpack.c.b16 %v1338, %v1337
        %v1814 = vpack.c.b16 %v1340, %v1339
        %v1815 = vpack.c.b16 %v1799, %v1341
        %v1817 = vsel %vm865, %v1795, 0
        %v1820 = vsel %vm865, %v1800, 0
        %v1823 = vsel %vm865, %v1801, 0
        %v1826 = vsel %vm865, %v1802, 0
        %v1829 = vsel %vm865, %v1803, 0
        %v1832 = vsel %vm865, %v1804, 0
        %v1835 = vsel %vm865, %v1805, 0
        %v1838 = vsel %vm865, %v1806, 0
        %v1841 = vsel %vm865, %v1807, 0
        %v1844 = vsel %vm865, %v1808, 0
        %v1847 = vsel %vm865, %v1809, 0
        %v1850 = vsel %vm865, %v1810, 0
        %v1853 = vsel %vm865, %v1811, 0
        %v1856 = vsel %vm865, %v1812, 0
        %v1859 = vsel %vm865, %v1813, 0
        %v1862 = vsel %vm865, %v1814, 0
        %v1865 = vsel %vm865, %v1815, 0
        %1867 = vmatprep.subr.bf16.mxu0 0
        %1868 = vmatpush1.bf16.xpose.msra.mxu0 %v1841
        %1869 = vmatprep.subr.bf16.mxu0 0
        %1870 = vmatpush1.bf16.xpose.msra.mxu0 %v1838
        %1871 = vmatprep.subr.bf16.mxu0 0
        %1872 = vmatpush1.bf16.xpose.msra.mxu0 %v1835
        %1873 = vmatprep.subr.bf16.mxu0 0
        %1874 = vmatpush1.bf16.xpose.msra.mxu0 %v1832
        %1875 = vmatprep.subr.bf16.mxu0 0
        %1876 = vmatpush1.bf16.xpose.msra.mxu0 %v1829
        %1877 = vmatprep.subr.bf16.mxu0 0
        %1878 = vmatpush1.bf16.xpose.msra.mxu0 %v1826
        %1879 = vmatprep.subr.bf16.mxu0 0
        %1880 = vmatpush1.bf16.xpose.msra.mxu0 %v1823
        %1881 = vmatprep.subr.bf16.mxu0 0
        %1882 = vmatpush1.bf16.xpose.msra.mxu0 %v1820
        %1883 = vmatprep.subr.bf16.mxu0 0
        %1884 = vmatpush2.bf16.xpose.msra.mxu0 %v1865
        %1885 = vmatprep.subr.bf16.mxu0 0
        %1886 = vmatpush2.bf16.xpose.msra.mxu0 %v1862
        %1887 = vmatprep.subr.bf16.mxu0 0
        %1888 = vmatpush2.bf16.xpose.msra.mxu0 %v1859
        %1889 = vmatprep.subr.bf16.mxu0 0
        %1890 = vmatpush2.bf16.xpose.msra.mxu0 %v1856
        %1891 = vmatprep.subr.bf16.mxu0 0
        %1892 = vmatpush2.bf16.xpose.msra.mxu0 %v1853
        %1893 = vmatprep.subr.bf16.mxu0 0
        %1894 = vmatpush2.bf16.xpose.msra.mxu0 %v1850
        %1895 = vmatprep.subr.bf16.mxu0 0
        %1896 = vmatpush2.bf16.xpose.msra.mxu0 %v1847
        %1897 = vmatprep.subr.bf16.mxu0 0
        %1898 = vmatpush2.bf16.xpose.msra.mxu0 %v1844
        %1899 = vmatprep.mubr.bf16.mxu0 0
        %1900 = vmatmul.mubr.bf16.gmra.mxu0 %v1817
        %v1901 = vpop.f32.mrf.mxu0
        %v1902 = vadd.f32 0.0, %v1901
        %v1903 = vpop.f32.mrf.mxu0
        %v1904 = vadd.f32 0.0, %v1903
        %v1905 = vpop.f32.mrf.mxu0
        %v1906 = vadd.f32 0.0, %v1905
        %v1907 = vpop.f32.mrf.mxu0
        %v1908 = vadd.f32 0.0, %v1907
        %1909 = vdwg.mxu0
        %v1910 = vadd.f32 %v1764, %v1902
        %v1911 = vadd.f32 %v1765, %v1904
        %v1912 = vadd.f32 %v1766, %v1906
        %v1913 = vadd.f32 %v1767, %v1908
        %s1914 = scalar_lea.vmem %s1, 48
        %v1915 = vld [vmem:[%s1914] sm:$0xf]
        %v1916 = vld [vmem:[%s1914 + $0x4] sm:$0xf]
        %v1919 = vunpack.c.l.b16 %v1915
        %v1920 = vunpack.c.l.b16 %v1916
        %v1921 = vpack.c.b16 %v1920, %v1919
        %v1926 = vunpack.c.l.b16 %v254
        %v1927 = vunpack.c.l.b16 %v274
        %v1928 = vunpack.c.l.b16 %v294
        %v1929 = vunpack.c.l.b16 %v314
        %v1930 = vpack.c.b16 %v1926, %v1468
        %v1931 = vpack.c.b16 %v1927, %v1469
        %v1932 = vpack.c.b16 %v1928, %v1470
        %v1933 = vpack.c.b16 %v1929, %v1471
        %v1935 = vsel %vm865, %v1921, 0
        %v1938 = vsel %vm865, %v1930, 0
        %v1941 = vsel %vm865, %v1931, 0
        %v1944 = vsel %vm865, %v1932, 0
        %v1947 = vsel %vm865, %v1933, 0
        %1949 = vmatprep.subr.bf16.mxu0 0
        %1950 = vmatpush1.bf16.xpose.msra.mxu0 %v1941
        %1951 = vmatprep.subr.bf16.mxu0 0
        %1952 = vmatpush1.bf16.xpose.msra.mxu0 %v1070
        %1953 = vmatprep.subr.bf16.mxu0 0
        %1954 = vmatpush1.bf16.xpose.msra.mxu0 %v1067
        %1955 = vmatprep.subr.bf16.mxu0 0
        %1956 = vmatpush1.bf16.xpose.msra.mxu0 %v1064
        %1957 = vmatprep.subr.bf16.mxu0 0
        %1958 = vmatpush1.bf16.xpose.msra.mxu0 %v1938
        %1959 = vmatprep.subr.bf16.mxu0 0
        %1960 = vmatpush1.bf16.xpose.msra.mxu0 %v1058
        %1961 = vmatprep.subr.bf16.mxu0 0
        %1962 = vmatpush1.bf16.xpose.msra.mxu0 %v1055
        %1963 = vmatprep.subr.bf16.mxu0 0
        %1964 = vmatpush1.bf16.xpose.msra.mxu0 %v1052
        %1965 = vmatprep.subr.bf16.mxu0 0
        %1966 = vmatpush2.bf16.xpose.msra.mxu0 %v1947
        %1967 = vmatprep.subr.bf16.mxu0 0
        %1968 = vmatpush2.bf16.xpose.msra.mxu0 %v1094
        %1969 = vmatprep.subr.bf16.mxu0 0
        %1970 = vmatpush2.bf16.xpose.msra.mxu0 %v1091
        %1971 = vmatprep.subr.bf16.mxu0 0
        %1972 = vmatpush2.bf16.xpose.msra.mxu0 %v1088
        %1973 = vmatprep.subr.bf16.mxu0 0
        %1974 = vmatpush2.bf16.xpose.msra.mxu0 %v1944
        %1975 = vmatprep.subr.bf16.mxu0 0
        %1976 = vmatpush2.bf16.xpose.msra.mxu0 %v1082
        %1977 = vmatprep.subr.bf16.mxu0 0
        %1978 = vmatpush2.bf16.xpose.msra.mxu0 %v1079
        %1979 = vmatprep.subr.bf16.mxu0 0
        %1980 = vmatpush2.bf16.xpose.msra.mxu0 %v1076
        %1981 = vmatprep.mubr.bf16.mxu0 0
        %1982 = vmatmul.mubr.bf16.gmra.mxu0 %v1935
        %v1983 = vpop.f32.mrf.mxu0
        %v1984 = vadd.f32 0.0, %v1983
        %v1985 = vpop.f32.mrf.mxu0
        %v1986 = vadd.f32 0.0, %v1985
        %v1987 = vpop.f32.mrf.mxu0
        %v1988 = vadd.f32 0.0, %v1987
        %v1989 = vpop.f32.mrf.mxu0
        %v1990 = vadd.f32 0.0, %v1989
        %1991 = vdwg.mxu0
        %v1992 = vadd.f32 %v1910, %v1984
        %v1993 = vadd.f32 %v1911, %v1986
        %v1994 = vadd.f32 %v1912, %v1988
        %v1995 = vadd.f32 %v1913, %v1990
        %v1997 = vshrl.u32 %v254, 16
        %v1999 = vrot.slane %v1997, 4
        %v2000 = vshll.u32 %v254, 16
        %v2002 = vrot.slane %v2000, 5
        %v2003 = vor.u32 %v1999, %v2002
        %v2004 = vrot.slane %v2003, 4
        %v2006 = vshll.u32 %v255, 16
        %v2008 = vrot.slane %v2006, 5
        %v2009 = vsel %vm360, %v2004, %v2008
        %v2011 = vshrl.u32 %v274, 16
        %v2013 = vrot.slane %v2011, 4
        %v2014 = vshll.u32 %v274, 16
        %v2016 = vrot.slane %v2014, 5
        %v2017 = vor.u32 %v2013, %v2016
        %v2018 = vrot.slane %v2017, 4
        %v2020 = vshll.u32 %v275, 16
        %v2022 = vrot.slane %v2020, 5
        %v2023 = vsel %vm360, %v2018, %v2022
        %v2025 = vshrl.u32 %v294, 16
        %v2027 = vrot.slane %v2025, 4
        %v2028 = vshll.u32 %v294, 16
        %v2030 = vrot.slane %v2028, 5
        %v2031 = vor.u32 %v2027, %v2030
        %v2032 = vrot.slane %v2031, 4
        %v2034 = vshll.u32 %v295, 16
        %v2036 = vrot.slane %v2034, 5
        %v2037 = vsel %vm360, %v2032, %v2036
        %v2039 = vshrl.u32 %v314, 16
        %v2041 = vrot.slane %v2039, 4
        %v2042 = vshll.u32 %v314, 16
        %v2044 = vrot.slane %v2042, 5
        %v2045 = vor.u32 %v2041, %v2044
        %v2046 = vrot.slane %v2045, 4
        %v2048 = vshll.u32 %v315, 16
        %v2050 = vrot.slane %v2048, 5
        %v2051 = vsel %vm360, %v2046, %v2050
        %s2052 = scalar_lea.vmem %s1, 56
        %v2053 = vld [vmem:[%s2052] sm:$0xf]
        %v2054 = vld [vmem:[%s2052 + $0x4] sm:$0xf]
        %v2057 = vunpack.c.l.b16 %v2053
        %v2058 = vunpack.c.l.b16 %v2054
        %v2059 = vpack.c.b16 %v2058, %v2057
        %v2060 = vunpack.c.l.b16 %v2009
        %v2061 = vunpack.c.l.b16 %v2023
        %v2062 = vunpack.c.l.b16 %v2037
        %v2063 = vunpack.c.l.b16 %v2051
        %v2064 = vpack.c.b16 %v2060, %v1650
        %v2065 = vpack.c.b16 %v2061, %v1651
        %v2066 = vpack.c.b16 %v2062, %v1652
        %v2067 = vpack.c.b16 %v2063, %v1653
        %v2069 = vsel %vm865, %v2059, 0
        %v2072 = vsel %vm865, %v2064, 0
        %v2075 = vsel %vm865, %v2065, 0
        %v2078 = vsel %vm865, %v2066, 0
        %v2081 = vsel %vm865, %v2067, 0
        %2083 = vmatprep.subr.bf16.mxu0 0
        %2084 = vmatpush1.bf16.xpose.msra.mxu0 %v2075
        %2085 = vmatprep.subr.bf16.mxu0 0
        %2086 = vmatpush1.bf16.xpose.msra.mxu0 %v891
        %2087 = vmatprep.subr.bf16.mxu0 0
        %2088 = vmatpush1.bf16.xpose.msra.mxu0 %v888
        %2089 = vmatprep.subr.bf16.mxu0 0
        %2090 = vmatpush1.bf16.xpose.msra.mxu0 %v885
        %2091 = vmatprep.subr.bf16.mxu0 0
        %2092 = vmatpush1.bf16.xpose.msra.mxu0 %v2072
        %2093 = vmatprep.subr.bf16.mxu0 0
        %2094 = vmatpush1.bf16.xpose.msra.mxu0 %v879
        %2095 = vmatprep.subr.bf16.mxu0 0
        %2096 = vmatpush1.bf16.xpose.msra.mxu0 %v876
        %2097 = vmatprep.subr.bf16.mxu0 0
        %2098 = vmatpush1.bf16.xpose.msra.mxu0 %v873
        %2099 = vmatprep.subr.bf16.mxu0 0
        %2100 = vmatpush2.bf16.xpose.msra.mxu0 %v2081
        %2101 = vmatprep.subr.bf16.mxu0 0
        %2102 = vmatpush2.bf16.xpose.msra.mxu0 %v915
        %2103 = vmatprep.subr.bf16.mxu0 0
        %2104 = vmatpush2.bf16.xpose.msra.mxu0 %v912
        %2105 = vmatprep.subr.bf16.mxu0 0
        %2106 = vmatpush2.bf16.xpose.msra.mxu0 %v909
        %2107 = vmatprep.subr.bf16.mxu0 0
        %2108 = vmatpush2.bf16.xpose.msra.mxu0 %v2078
        %2109 = vmatprep.subr.bf16.mxu0 0
        %2110 = vmatpush2.bf16.xpose.msra.mxu0 %v903
        %2111 = vmatprep.subr.bf16.mxu0 0
        %2112 = vmatpush2.bf16.xpose.msra.mxu0 %v900
        %2113 = vmatprep.subr.bf16.mxu0 0
        %2114 = vmatpush2.bf16.xpose.msra.mxu0 %v897
        %2115 = vmatprep.mubr.bf16.mxu0 0
        %2116 = vmatmul.mubr.bf16.gmra.mxu0 %v2069
        %v2117 = vpop.f32.mrf.mxu0
        %v2118 = vadd.f32 0.0, %v2117
        %v2119 = vpop.f32.mrf.mxu0
        %v2120 = vadd.f32 0.0, %v2119
        %v2121 = vpop.f32.mrf.mxu0
        %v2122 = vadd.f32 0.0, %v2121
        %v2123 = vpop.f32.mrf.mxu0
        %v2124 = vadd.f32 0.0, %v2123
        %2125 = vdwg.mxu0
        %v2126 = vadd.f32 %v1992, %v2118
        %v2127 = vadd.f32 %v1993, %v2120
        %v2128 = vadd.f32 %v1994, %v2122
        %v2129 = vadd.f32 %v1995, %v2124
        %v2134 = vrot.slane %v254, 5
        %v2135 = vrot.slane %v2134, 4
        %v2136 = vrot.slane %v255, 5
        %v2137 = vsel %vm1173, %v2135, %v2136
        %v2138 = vrot.slane %v274, 5
        %v2139 = vrot.slane %v2138, 4
        %v2140 = vrot.slane %v275, 5
        %v2141 = vsel %vm1173, %v2139, %v2140
        %v2142 = vrot.slane %v294, 5
        %v2143 = vrot.slane %v2142, 4
        %v2144 = vrot.slane %v295, 5
        %v2145 = vsel %vm1173, %v2143, %v2144
        %v2146 = vrot.slane %v314, 5
        %v2147 = vrot.slane %v2146, 4
        %v2148 = vrot.slane %v315, 5
        %v2149 = vsel %vm1173, %v2147, %v2148
        %s2150 = scalar_lea.vmem %s1, 64
        %v2151 = vld [vmem:[%s2150] sm:$0xf]
        %v2152 = vld [vmem:[%s2150 + $0x4] sm:$0xf]
        %v2155 = vunpack.c.l.b16 %v2151
        %v2156 = vunpack.c.l.b16 %v2152
        %v2157 = vpack.c.b16 %v2156, %v2155
        %v2158 = vunpack.c.l.b16 %v2137
        %v2159 = vunpack.c.l.b16 %v2141
        %v2160 = vunpack.c.l.b16 %v2145
        %v2161 = vunpack.c.l.b16 %v2149
        %v2162 = vpack.c.b16 %v2158, %v1796
        %v2163 = vpack.c.b16 %v2159, %v1797
        %v2164 = vpack.c.b16 %v2160, %v1798
        %v2165 = vpack.c.b16 %v2161, %v1799
        %v2167 = vsel %vm865, %v2157, 0
        %v2170 = vsel %vm865, %v2162, 0
        %v2173 = vsel %vm865, %v2163, 0
        %v2176 = vsel %vm865, %v2164, 0
        %v2179 = vsel %vm865, %v2165, 0
        %2181 = vmatprep.subr.bf16.mxu0 0
        %2182 = vmatpush1.bf16.xpose.msra.mxu0 %v2173
        %2183 = vmatprep.subr.bf16.mxu0 0
        %2184 = vmatpush1.bf16.xpose.msra.mxu0 %v1383
        %2185 = vmatprep.subr.bf16.mxu0 0
        %2186 = vmatpush1.bf16.xpose.msra.mxu0 %v1380
        %2187 = vmatprep.subr.bf16.mxu0 0
        %2188 = vmatpush1.bf16.xpose.msra.mxu0 %v1377
        %2189 = vmatprep.subr.bf16.mxu0 0
        %2190 = vmatpush1.bf16.xpose.msra.mxu0 %v2170
        %2191 = vmatprep.subr.bf16.mxu0 0
        %2192 = vmatpush1.bf16.xpose.msra.mxu0 %v1371
        %2193 = vmatprep.subr.bf16.mxu0 0
        %2194 = vmatpush1.bf16.xpose.msra.mxu0 %v1368
        %2195 = vmatprep.subr.bf16.mxu0 0
        %2196 = vmatpush1.bf16.xpose.msra.mxu0 %v1365
        %2197 = vmatprep.subr.bf16.mxu0 0
        %2198 = vmatpush2.bf16.xpose.msra.mxu0 %v2179
        %2199 = vmatprep.subr.bf16.mxu0 0
        %2200 = vmatpush2.bf16.xpose.msra.mxu0 %v1407
        %2201 = vmatprep.subr.bf16.mxu0 0
        %2202 = vmatpush2.bf16.xpose.msra.mxu0 %v1404
        %2203 = vmatprep.subr.bf16.mxu0 0
        %2204 = vmatpush2.bf16.xpose.msra.mxu0 %v1401
        %2205 = vmatprep.subr.bf16.mxu0 0
        %2206 = vmatpush2.bf16.xpose.msra.mxu0 %v2176
        %2207 = vmatprep.subr.bf16.mxu0 0
        %2208 = vmatpush2.bf16.xpose.msra.mxu0 %v1395
        %2209 = vmatprep.subr.bf16.mxu0 0
        %2210 = vmatpush2.bf16.xpose.msra.mxu0 %v1392
        %2211 = vmatprep.subr.bf16.mxu0 0
        %2212 = vmatpush2.bf16.xpose.msra.mxu0 %v1389
        %2213 = vmatprep.mubr.bf16.mxu0 0
        %2214 = vmatmul.mubr.bf16.gmra.mxu0 %v2167
        %v2215 = vpop.f32.mrf.mxu0
        %v2216 = vadd.f32 0.0, %v2215
        %v2217 = vpop.f32.mrf.mxu0
        %v2218 = vadd.f32 0.0, %v2217
        %v2219 = vpop.f32.mrf.mxu0
        %v2220 = vadd.f32 0.0, %v2219
        %v2221 = vpop.f32.mrf.mxu0
        %v2222 = vadd.f32 0.0, %v2221
        %2223 = vdwg.mxu0
        %v2224 = vadd.f32 %v2126, %v2216
        %v2225 = vadd.f32 %v2127, %v2218
        %v2226 = vadd.f32 %v2128, %v2220
        %v2227 = vadd.f32 %v2129, %v2222
        %s2228 = scalar_lea.vmem %s1, 72
        %v2229 = vld [vmem:[%s2228] sm:$0xf]
        %v2230 = vld [vmem:[%s2228 + $0x4] sm:$0xf]
        %v2233 = vunpack.c.l.b16 %v2229
        %v2234 = vunpack.c.l.b16 %v2230
        %v2235 = vpack.c.b16 %v2234, %v2233
        %v2244 = vunpack.c.l.b16 %v316
        %v2245 = vunpack.c.l.b16 %v318
        %v2246 = vunpack.c.l.b16 %v320
        %v2247 = vunpack.c.l.b16 %v322
        %v2248 = vunpack.c.l.b16 %v324
        %v2249 = vunpack.c.l.b16 %v326
        %v2250 = vunpack.c.l.b16 %v328
        %v2251 = vunpack.c.l.b16 %v330
        %v2252 = vpack.c.b16 %v2245, %v2244
        %v2253 = vpack.c.b16 %v2247, %v2246
        %v2254 = vpack.c.b16 %v2249, %v2248
        %v2255 = vpack.c.b16 %v2251, %v2250
        %v2257 = vsel %vm865, %v2235, 0
        %v2260 = vsel %vm865, %v2252, 0
        %v2263 = vsel %vm865, %v2253, 0
        %v2266 = vsel %vm865, %v2254, 0
        %v2269 = vsel %vm865, %v2255, 0
        %2271 = vmatprep.subr.bf16.mxu0 0
        %2272 = vmatpush1.bf16.xpose.msra.mxu0 %v1082
        %2273 = vmatprep.subr.bf16.mxu0 0
        %2274 = vmatpush1.bf16.xpose.msra.mxu0 %v1079
        %2275 = vmatprep.subr.bf16.mxu0 0
        %2276 = vmatpush1.bf16.xpose.msra.mxu0 %v1076
        %2277 = vmatprep.subr.bf16.mxu0 0
        %2278 = vmatpush1.bf16.xpose.msra.mxu0 %v1073
        %2279 = vmatprep.subr.bf16.mxu0 0
        %2280 = vmatpush1.bf16.xpose.msra.mxu0 %v1070
        %2281 = vmatprep.subr.bf16.mxu0 0
        %2282 = vmatpush1.bf16.xpose.msra.mxu0 %v1067
        %2283 = vmatprep.subr.bf16.mxu0 0
        %2284 = vmatpush1.bf16.xpose.msra.mxu0 %v1064
        %2285 = vmatprep.subr.bf16.mxu0 0
        %2286 = vmatpush1.bf16.xpose.msra.mxu0 %v1061
        %2287 = vmatprep.subr.bf16.mxu0 0
        %2288 = vmatpush2.bf16.xpose.msra.mxu0 %v2269
        %2289 = vmatprep.subr.bf16.mxu0 0
        %2290 = vmatpush2.bf16.xpose.msra.mxu0 %v2266
        %2291 = vmatprep.subr.bf16.mxu0 0
        %2292 = vmatpush2.bf16.xpose.msra.mxu0 %v2263
        %2293 = vmatprep.subr.bf16.mxu0 0
        %2294 = vmatpush2.bf16.xpose.msra.mxu0 %v2260
        %2295 = vmatprep.subr.bf16.mxu0 0
        %2296 = vmatpush2.bf16.xpose.msra.mxu0 %v1094
        %2297 = vmatprep.subr.bf16.mxu0 0
        %2298 = vmatpush2.bf16.xpose.msra.mxu0 %v1091
        %2299 = vmatprep.subr.bf16.mxu0 0
        %2300 = vmatpush2.bf16.xpose.msra.mxu0 %v1088
        %2301 = vmatprep.subr.bf16.mxu0 0
        %2302 = vmatpush2.bf16.xpose.msra.mxu0 %v1085
        %2303 = vmatprep.mubr.bf16.mxu0 0
        %2304 = vmatmul.mubr.bf16.gmra.mxu0 %v2257
        %v2305 = vpop.f32.mrf.mxu0
        %v2306 = vadd.f32 0.0, %v2305
        %v2307 = vpop.f32.mrf.mxu0
        %v2308 = vadd.f32 0.0, %v2307
        %v2309 = vpop.f32.mrf.mxu0
        %v2310 = vadd.f32 0.0, %v2309
        %v2311 = vpop.f32.mrf.mxu0
        %v2312 = vadd.f32 0.0, %v2311
        %2313 = vdwg.mxu0
        %v2314 = vadd.f32 %v2224, %v2306
        %v2315 = vadd.f32 %v2225, %v2308
        %v2316 = vadd.f32 %v2226, %v2310
        %v2317 = vadd.f32 %v2227, %v2312
        %v2319 = vshrl.u32 %v316, 16
        %v2321 = vrot.slane %v2319, 4
        %v2322 = vshll.u32 %v316, 16
        %v2324 = vrot.slane %v2322, 5
        %v2325 = vor.u32 %v2321, %v2324
        %v2326 = vrot.slane %v2325, 4
        %v2328 = vshll.u32 %v317, 16
        %v2330 = vrot.slane %v2328, 5
        %v2331 = vsel %vm360, %v2326, %v2330
        %v2333 = vshrl.u32 %v318, 16
        %v2335 = vrot.slane %v2333, 4
        %v2336 = vshll.u32 %v318, 16
        %v2338 = vrot.slane %v2336, 5
        %v2339 = vor.u32 %v2335, %v2338
        %v2340 = vrot.slane %v2339, 4
        %v2342 = vshll.u32 %v319, 16
        %v2344 = vrot.slane %v2342, 5
        %v2345 = vsel %vm360, %v2340, %v2344
        %v2347 = vshrl.u32 %v320, 16
        %v2349 = vrot.slane %v2347, 4
        %v2350 = vshll.u32 %v320, 16
        %v2352 = vrot.slane %v2350, 5
        %v2353 = vor.u32 %v2349, %v2352
        %v2354 = vrot.slane %v2353, 4
        %v2356 = vshll.u32 %v321, 16
        %v2358 = vrot.slane %v2356, 5
        %v2359 = vsel %vm360, %v2354, %v2358
        %v2361 = vshrl.u32 %v322, 16
        %v2363 = vrot.slane %v2361, 4
        %v2364 = vshll.u32 %v322, 16
        %v2366 = vrot.slane %v2364, 5
        %v2367 = vor.u32 %v2363, %v2366
        %v2368 = vrot.slane %v2367, 4
        %v2370 = vshll.u32 %v323, 16
        %v2372 = vrot.slane %v2370, 5
        %v2373 = vsel %vm360, %v2368, %v2372
        %v2375 = vshrl.u32 %v324, 16
        %v2377 = vrot.slane %v2375, 4
        %v2378 = vshll.u32 %v324, 16
        %v2380 = vrot.slane %v2378, 5
        %v2381 = vor.u32 %v2377, %v2380
        %v2382 = vrot.slane %v2381, 4
        %v2384 = vshll.u32 %v325, 16
        %v2386 = vrot.slane %v2384, 5
        %v2387 = vsel %vm360, %v2382, %v2386
        %v2389 = vshrl.u32 %v326, 16
        %v2391 = vrot.slane %v2389, 4
        %v2392 = vshll.u32 %v326, 16
        %v2394 = vrot.slane %v2392, 5
        %v2395 = vor.u32 %v2391, %v2394
        %v2396 = vrot.slane %v2395, 4
        %v2398 = vshll.u32 %v327, 16
        %v2400 = vrot.slane %v2398, 5
        %v2401 = vsel %vm360, %v2396, %v2400
        %v2403 = vshrl.u32 %v328, 16
        %v2405 = vrot.slane %v2403, 4
        %v2406 = vshll.u32 %v328, 16
        %v2408 = vrot.slane %v2406, 5
        %v2409 = vor.u32 %v2405, %v2408
        %v2410 = vrot.slane %v2409, 4
        %v2412 = vshll.u32 %v329, 16
        %v2414 = vrot.slane %v2412, 5
        %v2415 = vsel %vm360, %v2410, %v2414
        %v2417 = vshrl.u32 %v330, 16
        %v2419 = vrot.slane %v2417, 4
        %v2420 = vshll.u32 %v330, 16
        %v2422 = vrot.slane %v2420, 5
        %v2423 = vor.u32 %v2419, %v2422
        %v2424 = vrot.slane %v2423, 4
        %v2426 = vshll.u32 %v331, 16
        %v2428 = vrot.slane %v2426, 5
        %v2429 = vsel %vm360, %v2424, %v2428
        %s2430 = scalar_lea.vmem %s1, 80
        %v2431 = vld [vmem:[%s2430] sm:$0xf]
        %v2432 = vld [vmem:[%s2430 + $0x4] sm:$0xf]
        %v2435 = vunpack.c.l.b16 %v2431
        %v2436 = vunpack.c.l.b16 %v2432
        %v2437 = vpack.c.b16 %v2436, %v2435
        %v2438 = vunpack.c.l.b16 %v2331
        %v2439 = vunpack.c.l.b16 %v2345
        %v2440 = vunpack.c.l.b16 %v2359
        %v2441 = vunpack.c.l.b16 %v2373
        %v2442 = vunpack.c.l.b16 %v2387
        %v2443 = vunpack.c.l.b16 %v2401
        %v2444 = vunpack.c.l.b16 %v2415
        %v2445 = vunpack.c.l.b16 %v2429
        %v2446 = vpack.c.b16 %v2439, %v2438
        %v2447 = vpack.c.b16 %v2441, %v2440
        %v2448 = vpack.c.b16 %v2443, %v2442
        %v2449 = vpack.c.b16 %v2445, %v2444
        %v2451 = vsel %vm865, %v2437, 0
        %v2454 = vsel %vm865, %v2446, 0
        %v2457 = vsel %vm865, %v2447, 0
        %v2460 = vsel %vm865, %v2448, 0
        %v2463 = vsel %vm865, %v2449, 0
        %2465 = vmatprep.subr.bf16.mxu0 0
        %2466 = vmatpush1.bf16.xpose.msra.mxu0 %v903
        %2467 = vmatprep.subr.bf16.mxu0 0
        %2468 = vmatpush1.bf16.xpose.msra.mxu0 %v900
        %2469 = vmatprep.subr.bf16.mxu0 0
        %2470 = vmatpush1.bf16.xpose.msra.mxu0 %v897
        %2471 = vmatprep.subr.bf16.mxu0 0
        %2472 = vmatpush1.bf16.xpose.msra.mxu0 %v894
        %2473 = vmatprep.subr.bf16.mxu0 0
        %2474 = vmatpush1.bf16.xpose.msra.mxu0 %v891
        %2475 = vmatprep.subr.bf16.mxu0 0
        %2476 = vmatpush1.bf16.xpose.msra.mxu0 %v888
        %2477 = vmatprep.subr.bf16.mxu0 0
        %2478 = vmatpush1.bf16.xpose.msra.mxu0 %v885
        %2479 = vmatprep.subr.bf16.mxu0 0
        %2480 = vmatpush1.bf16.xpose.msra.mxu0 %v882
        %2481 = vmatprep.subr.bf16.mxu0 0
        %2482 = vmatpush2.bf16.xpose.msra.mxu0 %v2463
        %2483 = vmatprep.subr.bf16.mxu0 0
        %2484 = vmatpush2.bf16.xpose.msra.mxu0 %v2460
        %2485 = vmatprep.subr.bf16.mxu0 0
        %2486 = vmatpush2.bf16.xpose.msra.mxu0 %v2457
        %2487 = vmatprep.subr.bf16.mxu0 0
        %2488 = vmatpush2.bf16.xpose.msra.mxu0 %v2454
        %2489 = vmatprep.subr.bf16.mxu0 0
        %2490 = vmatpush2.bf16.xpose.msra.mxu0 %v915
        %2491 = vmatprep.subr.bf16.mxu0 0
        %2492 = vmatpush2.bf16.xpose.msra.mxu0 %v912
        %2493 = vmatprep.subr.bf16.mxu0 0
        %2494 = vmatpush2.bf16.xpose.msra.mxu0 %v909
        %2495 = vmatprep.subr.bf16.mxu0 0
        %2496 = vmatpush2.bf16.xpose.msra.mxu0 %v906
        %2497 = vmatprep.mubr.bf16.mxu0 0
        %2498 = vmatmul.mubr.bf16.gmra.mxu0 %v2451
        %v2499 = vpop.f32.mrf.mxu0
        %v2500 = vadd.f32 0.0, %v2499
        %v2501 = vpop.f32.mrf.mxu0
        %v2502 = vadd.f32 0.0, %v2501
        %v2503 = vpop.f32.mrf.mxu0
        %v2504 = vadd.f32 0.0, %v2503
        %v2505 = vpop.f32.mrf.mxu0
        %v2506 = vadd.f32 0.0, %v2505
        %2507 = vdwg.mxu0
        %v2508 = vadd.f32 %v2314, %v2500
        %v2509 = vadd.f32 %v2315, %v2502
        %v2510 = vadd.f32 %v2316, %v2504
        %v2511 = vadd.f32 %v2317, %v2506
        %v2520 = vrot.slane %v316, 5
        %v2521 = vrot.slane %v2520, 4
        %v2522 = vrot.slane %v317, 5
        %v2523 = vsel %vm1173, %v2521, %v2522
        %v2524 = vrot.slane %v318, 5
        %v2525 = vrot.slane %v2524, 4
        %v2526 = vrot.slane %v319, 5
        %v2527 = vsel %vm1173, %v2525, %v2526
        %v2528 = vrot.slane %v320, 5
        %v2529 = vrot.slane %v2528, 4
        %v2530 = vrot.slane %v321, 5
        %v2531 = vsel %vm1173, %v2529, %v2530
        %v2532 = vrot.slane %v322, 5
        %v2533 = vrot.slane %v2532, 4
        %v2534 = vrot.slane %v323, 5
        %v2535 = vsel %vm1173, %v2533, %v2534
        %v2536 = vrot.slane %v324, 5
        %v2537 = vrot.slane %v2536, 4
        %v2538 = vrot.slane %v325, 5
        %v2539 = vsel %vm1173, %v2537, %v2538
        %v2540 = vrot.slane %v326, 5
        %v2541 = vrot.slane %v2540, 4
        %v2542 = vrot.slane %v327, 5
        %v2543 = vsel %vm1173, %v2541, %v2542
        %v2544 = vrot.slane %v328, 5
        %v2545 = vrot.slane %v2544, 4
        %v2546 = vrot.slane %v329, 5
        %v2547 = vsel %vm1173, %v2545, %v2546
        %v2548 = vrot.slane %v330, 5
        %v2549 = vrot.slane %v2548, 4
        %v2550 = vrot.slane %v331, 5
        %v2551 = vsel %vm1173, %v2549, %v2550
        %s2552 = scalar_lea.vmem %s1, 88
        %v2553 = vld [vmem:[%s2552] sm:$0xf]
        %v2554 = vld [vmem:[%s2552 + $0x4] sm:$0xf]
        %v2557 = vunpack.c.l.b16 %v2553
        %v2558 = vunpack.c.l.b16 %v2554
        %v2559 = vpack.c.b16 %v2558, %v2557
        %v2560 = vunpack.c.l.b16 %v2523
        %v2561 = vunpack.c.l.b16 %v2527
        %v2562 = vunpack.c.l.b16 %v2531
        %v2563 = vunpack.c.l.b16 %v2535
        %v2564 = vunpack.c.l.b16 %v2539
        %v2565 = vunpack.c.l.b16 %v2543
        %v2566 = vunpack.c.l.b16 %v2547
        %v2567 = vunpack.c.l.b16 %v2551
        %v2568 = vpack.c.b16 %v2561, %v2560
        %v2569 = vpack.c.b16 %v2563, %v2562
        %v2570 = vpack.c.b16 %v2565, %v2564
        %v2571 = vpack.c.b16 %v2567, %v2566
        %v2573 = vsel %vm865, %v2559, 0
        %v2576 = vsel %vm865, %v2568, 0
        %v2579 = vsel %vm865, %v2569, 0
        %v2582 = vsel %vm865, %v2570, 0
        %v2585 = vsel %vm865, %v2571, 0
        %2587 = vmatprep.subr.bf16.mxu0 0
        %2588 = vmatpush1.bf16.xpose.msra.mxu0 %v1395
        %2589 = vmatprep.subr.bf16.mxu0 0
        %2590 = vmatpush1.bf16.xpose.msra.mxu0 %v1392
        %2591 = vmatprep.subr.bf16.mxu0 0
        %2592 = vmatpush1.bf16.xpose.msra.mxu0 %v1389
        %2593 = vmatprep.subr.bf16.mxu0 0
        %2594 = vmatpush1.bf16.xpose.msra.mxu0 %v1386
        %2595 = vmatprep.subr.bf16.mxu0 0
        %2596 = vmatpush1.bf16.xpose.msra.mxu0 %v1383
        %2597 = vmatprep.subr.bf16.mxu0 0
        %2598 = vmatpush1.bf16.xpose.msra.mxu0 %v1380
        %2599 = vmatprep.subr.bf16.mxu0 0
        %2600 = vmatpush1.bf16.xpose.msra.mxu0 %v1377
        %2601 = vmatprep.subr.bf16.mxu0 0
        %2602 = vmatpush1.bf16.xpose.msra.mxu0 %v1374
        %2603 = vmatprep.subr.bf16.mxu0 0
        %2604 = vmatpush2.bf16.xpose.msra.mxu0 %v2585
        %2605 = vmatprep.subr.bf16.mxu0 0
        %2606 = vmatpush2.bf16.xpose.msra.mxu0 %v2582
        %2607 = vmatprep.subr.bf16.mxu0 0
        %2608 = vmatpush2.bf16.xpose.msra.mxu0 %v2579
        %2609 = vmatprep.subr.bf16.mxu0 0
        %2610 = vmatpush2.bf16.xpose.msra.mxu0 %v2576
        %2611 = vmatprep.subr.bf16.mxu0 0
        %2612 = vmatpush2.bf16.xpose.msra.mxu0 %v1407
        %2613 = vmatprep.subr.bf16.mxu0 0
        %2614 = vmatpush2.bf16.xpose.msra.mxu0 %v1404
        %2615 = vmatprep.subr.bf16.mxu0 0
        %2616 = vmatpush2.bf16.xpose.msra.mxu0 %v1401
        %2617 = vmatprep.subr.bf16.mxu0 0
        %2618 = vmatpush2.bf16.xpose.msra.mxu0 %v1398
        %2619 = vmatprep.mubr.bf16.mxu0 0
        %2620 = vmatmul.mubr.bf16.gmra.mxu0 %v2573
        %v2621 = vpop.f32.mrf.mxu0
        %v2622 = vadd.f32 0.0, %v2621
        %v2623 = vpop.f32.mrf.mxu0
        %v2624 = vadd.f32 0.0, %v2623
        %v2625 = vpop.f32.mrf.mxu0
        %v2626 = vadd.f32 0.0, %v2625
        %v2627 = vpop.f32.mrf.mxu0
        %v2628 = vadd.f32 0.0, %v2627
        %2629 = vdwg.mxu0
        %v2630 = vadd.f32 %v2508, %v2622
        %v2631 = vadd.f32 %v2509, %v2624
        %v2632 = vadd.f32 %v2510, %v2626
        %v2633 = vadd.f32 %v2511, %v2628
        %s2634 = scalar_lea.vmem %s1, 96
        %v2635 = vld [vmem:[%s2634] sm:$0xf]
        %v2636 = vld [vmem:[%s2634 + $0x4] sm:$0xf]
        %v2639 = vunpack.c.l.b16 %v2635
        %v2640 = vunpack.c.l.b16 %v2636
        %v2641 = vpack.c.b16 %v2640, %v2639
        %v2643 = vunpack.c.l.b16 %v332
        %v2644 = vpack.c.b16 %v2246, %v2245
        %v2645 = vpack.c.b16 %v2248, %v2247
        %v2646 = vpack.c.b16 %v2250, %v2249
        %v2647 = vpack.c.b16 %v2643, %v2251
        %v2649 = vsel %vm865, %v2641, 0
        %v2652 = vsel %vm865, %v2644, 0
        %v2655 = vsel %vm865, %v2645, 0
        %v2658 = vsel %vm865, %v2646, 0
        %v2661 = vsel %vm865, %v2647, 0
        %2663 = vmatprep.subr.bf16.mxu0 0
        %2664 = vmatpush1.bf16.xpose.msra.mxu0 %v1525
        %2665 = vmatprep.subr.bf16.mxu0 0
        %2666 = vmatpush1.bf16.xpose.msra.mxu0 %v1522
        %2667 = vmatprep.subr.bf16.mxu0 0
        %2668 = vmatpush1.bf16.xpose.msra.mxu0 %v1519
        %2669 = vmatprep.subr.bf16.mxu0 0
        %2670 = vmatpush1.bf16.xpose.msra.mxu0 %v1516
        %2671 = vmatprep.subr.bf16.mxu0 0
        %2672 = vmatpush1.bf16.xpose.msra.mxu0 %v1513
        %2673 = vmatprep.subr.bf16.mxu0 0
        %2674 = vmatpush1.bf16.xpose.msra.mxu0 %v1510
        %2675 = vmatprep.subr.bf16.mxu0 0
        %2676 = vmatpush1.bf16.xpose.msra.mxu0 %v1507
        %2677 = vmatprep.subr.bf16.mxu0 0
        %2678 = vmatpush1.bf16.xpose.msra.mxu0 %v1504
        %2679 = vmatprep.subr.bf16.mxu0 0
        %2680 = vmatpush2.bf16.xpose.msra.mxu0 %v2661
        %2681 = vmatprep.subr.bf16.mxu0 0
        %2682 = vmatpush2.bf16.xpose.msra.mxu0 %v2658
        %2683 = vmatprep.subr.bf16.mxu0 0
        %2684 = vmatpush2.bf16.xpose.msra.mxu0 %v2655
        %2685 = vmatprep.subr.bf16.mxu0 0
        %2686 = vmatpush2.bf16.xpose.msra.mxu0 %v2652
        %2687 = vmatprep.subr.bf16.mxu0 0
        %2688 = vmatpush2.bf16.xpose.msra.mxu0 %v1537
        %2689 = vmatprep.subr.bf16.mxu0 0
        %2690 = vmatpush2.bf16.xpose.msra.mxu0 %v1534
        %2691 = vmatprep.subr.bf16.mxu0 0
        %2692 = vmatpush2.bf16.xpose.msra.mxu0 %v1531
        %2693 = vmatprep.subr.bf16.mxu0 0
        %2694 = vmatpush2.bf16.xpose.msra.mxu0 %v1528
        %2695 = vmatprep.mubr.bf16.mxu0 0
        %2696 = vmatmul.mubr.bf16.gmra.mxu0 %v2649
        %v2697 = vpop.f32.mrf.mxu0
        %v2698 = vadd.f32 0.0, %v2697
        %v2699 = vpop.f32.mrf.mxu0
        %v2700 = vadd.f32 0.0, %v2699
        %v2701 = vpop.f32.mrf.mxu0
        %v2702 = vadd.f32 0.0, %v2701
        %v2703 = vpop.f32.mrf.mxu0
        %v2704 = vadd.f32 0.0, %v2703
        %2705 = vdwg.mxu0
        %v2706 = vadd.f32 %v2630, %v2698
        %v2707 = vadd.f32 %v2631, %v2700
        %v2708 = vadd.f32 %v2632, %v2702
        %v2709 = vadd.f32 %v2633, %v2704
        %v2711 = vshrl.u32 %v332, 16
        %v2713 = vrot.slane %v2711, 4
        %v2714 = vshll.u32 %v332, 16
        %v2716 = vrot.slane %v2714, 5
        %v2717 = vor.u32 %v2713, %v2716
        %v2718 = vrot.slane %v2717, 4
        %v2720 = vshll.u32 %v333, 16
        %v2722 = vrot.slane %v2720, 5
        %v2723 = vsel %vm360, %v2718, %v2722
        %s2724 = scalar_lea.vmem %s1, 104
        %v2725 = vld [vmem:[%s2724] sm:$0xf]
        %v2726 = vld [vmem:[%s2724 + $0x4] sm:$0xf]
        %v2729 = vunpack.c.l.b16 %v2725
        %v2730 = vunpack.c.l.b16 %v2726
        %v2731 = vpack.c.b16 %v2730, %v2729
        %v2732 = vunpack.c.l.b16 %v2723
        %v2733 = vpack.c.b16 %v2440, %v2439
        %v2734 = vpack.c.b16 %v2442, %v2441
        %v2735 = vpack.c.b16 %v2444, %v2443
        %v2736 = vpack.c.b16 %v2732, %v2445
        %v2738 = vsel %vm865, %v2731, 0
        %v2741 = vsel %vm865, %v2733, 0
        %v2744 = vsel %vm865, %v2734, 0
        %v2747 = vsel %vm865, %v2735, 0
        %v2750 = vsel %vm865, %v2736, 0
        %2752 = vmatprep.subr.bf16.mxu0 0
        %2753 = vmatpush1.bf16.xpose.msra.mxu0 %v1707
        %2754 = vmatprep.subr.bf16.mxu0 0
        %2755 = vmatpush1.bf16.xpose.msra.mxu0 %v1704
        %2756 = vmatprep.subr.bf16.mxu0 0
        %2757 = vmatpush1.bf16.xpose.msra.mxu0 %v1701
        %2758 = vmatprep.subr.bf16.mxu0 0
        %2759 = vmatpush1.bf16.xpose.msra.mxu0 %v1698
        %2760 = vmatprep.subr.bf16.mxu0 0
        %2761 = vmatpush1.bf16.xpose.msra.mxu0 %v1695
        %2762 = vmatprep.subr.bf16.mxu0 0
        %2763 = vmatpush1.bf16.xpose.msra.mxu0 %v1692
        %2764 = vmatprep.subr.bf16.mxu0 0
        %2765 = vmatpush1.bf16.xpose.msra.mxu0 %v1689
        %2766 = vmatprep.subr.bf16.mxu0 0
        %2767 = vmatpush1.bf16.xpose.msra.mxu0 %v1686
        %2768 = vmatprep.subr.bf16.mxu0 0
        %2769 = vmatpush2.bf16.xpose.msra.mxu0 %v2750
        %2770 = vmatprep.subr.bf16.mxu0 0
        %2771 = vmatpush2.bf16.xpose.msra.mxu0 %v2747
        %2772 = vmatprep.subr.bf16.mxu0 0
        %2773 = vmatpush2.bf16.xpose.msra.mxu0 %v2744
        %2774 = vmatprep.subr.bf16.mxu0 0
        %2775 = vmatpush2.bf16.xpose.msra.mxu0 %v2741
        %2776 = vmatprep.subr.bf16.mxu0 0
        %2777 = vmatpush2.bf16.xpose.msra.mxu0 %v1719
        %2778 = vmatprep.subr.bf16.mxu0 0
        %2779 = vmatpush2.bf16.xpose.msra.mxu0 %v1716
        %2780 = vmatprep.subr.bf16.mxu0 0
        %2781 = vmatpush2.bf16.xpose.msra.mxu0 %v1713
        %2782 = vmatprep.subr.bf16.mxu0 0
        %2783 = vmatpush2.bf16.xpose.msra.mxu0 %v1710
        %2784 = vmatprep.mubr.bf16.mxu0 0
        %2785 = vmatmul.mubr.bf16.gmra.mxu0 %v2738
        %v2786 = vpop.f32.mrf.mxu0
        %v2787 = vadd.f32 0.0, %v2786
        %v2788 = vpop.f32.mrf.mxu0
        %v2789 = vadd.f32 0.0, %v2788
        %v2790 = vpop.f32.mrf.mxu0
        %v2791 = vadd.f32 0.0, %v2790
        %v2792 = vpop.f32.mrf.mxu0
        %v2793 = vadd.f32 0.0, %v2792
        %2794 = vdwg.mxu0
        %v2795 = vadd.f32 %v2706, %v2787
        %v2796 = vadd.f32 %v2707, %v2789
        %v2797 = vadd.f32 %v2708, %v2791
        %v2798 = vadd.f32 %v2709, %v2793
        %v2800 = vrot.slane %v332, 5
        %v2801 = vrot.slane %v2800, 4
        %v2802 = vrot.slane %v333, 5
        %v2803 = vsel %vm1173, %v2801, %v2802
        %s2804 = scalar_lea.vmem %s1, 112
        %v2805 = vld [vmem:[%s2804] sm:$0xf]
        %v2806 = vld [vmem:[%s2804 + $0x4] sm:$0xf]
        %v2809 = vunpack.c.l.b16 %v2805
        %v2810 = vunpack.c.l.b16 %v2806
        %v2811 = vpack.c.b16 %v2810, %v2809
        %v2812 = vunpack.c.l.b16 %v2803
        %v2813 = vpack.c.b16 %v2562, %v2561
        %v2814 = vpack.c.b16 %v2564, %v2563
        %v2815 = vpack.c.b16 %v2566, %v2565
        %v2816 = vpack.c.b16 %v2812, %v2567
        %v2818 = vsel %vm865, %v2811, 0
        %v2821 = vsel %vm865, %v2813, 0
        %v2824 = vsel %vm865, %v2814, 0
        %v2827 = vsel %vm865, %v2815, 0
        %v2830 = vsel %vm865, %v2816, 0
        %2832 = vmatprep.subr.bf16.mxu0 0
        %2833 = vmatpush1.bf16.xpose.msra.mxu0 %v1853
        %2834 = vmatprep.subr.bf16.mxu0 0
        %2835 = vmatpush1.bf16.xpose.msra.mxu0 %v1850
        %2836 = vmatprep.subr.bf16.mxu0 0
        %2837 = vmatpush1.bf16.xpose.msra.mxu0 %v1847
        %2838 = vmatprep.subr.bf16.mxu0 0
        %2839 = vmatpush1.bf16.xpose.msra.mxu0 %v1844
        %2840 = vmatprep.subr.bf16.mxu0 0
        %2841 = vmatpush1.bf16.xpose.msra.mxu0 %v1841
        %2842 = vmatprep.subr.bf16.mxu0 0
        %2843 = vmatpush1.bf16.xpose.msra.mxu0 %v1838
        %2844 = vmatprep.subr.bf16.mxu0 0
        %2845 = vmatpush1.bf16.xpose.msra.mxu0 %v1835
        %2846 = vmatprep.subr.bf16.mxu0 0
        %2847 = vmatpush1.bf16.xpose.msra.mxu0 %v1832
        %2848 = vmatprep.subr.bf16.mxu0 0
        %2849 = vmatpush2.bf16.xpose.msra.mxu0 %v2830
        %2850 = vmatprep.subr.bf16.mxu0 0
        %2851 = vmatpush2.bf16.xpose.msra.mxu0 %v2827
        %2852 = vmatprep.subr.bf16.mxu0 0
        %2853 = vmatpush2.bf16.xpose.msra.mxu0 %v2824
        %2854 = vmatprep.subr.bf16.mxu0 0
        %2855 = vmatpush2.bf16.xpose.msra.mxu0 %v2821
        %2856 = vmatprep.subr.bf16.mxu0 0
        %2857 = vmatpush2.bf16.xpose.msra.mxu0 %v1865
        %2858 = vmatprep.subr.bf16.mxu0 0
        %2859 = vmatpush2.bf16.xpose.msra.mxu0 %v1862
        %2860 = vmatprep.subr.bf16.mxu0 0
        %2861 = vmatpush2.bf16.xpose.msra.mxu0 %v1859
        %2862 = vmatprep.subr.bf16.mxu0 0
        %2863 = vmatpush2.bf16.xpose.msra.mxu0 %v1856
        %2864 = vmatprep.mubr.bf16.mxu0 0
        %2865 = vmatmul.mubr.bf16.gmra.mxu0 %v2818
        %v2866 = vpop.f32.mrf.mxu0
        %v2867 = vadd.f32 0.0, %v2866
        %v2868 = vpop.f32.mrf.mxu0
        %v2869 = vadd.f32 0.0, %v2868
        %v2870 = vpop.f32.mrf.mxu0
        %v2871 = vadd.f32 0.0, %v2870
        %v2872 = vpop.f32.mrf.mxu0
        %v2873 = vadd.f32 0.0, %v2872
        %2874 = vdwg.mxu0
        %v2875 = vadd.f32 %v2795, %v2867
        %v2876 = vadd.f32 %v2796, %v2869
        %v2877 = vadd.f32 %v2797, %v2871
        %v2878 = vadd.f32 %v2798, %v2873
        %s2879 = scalar_lea.vmem %s1, 120
        %v2880 = vld [vmem:[%s2879] sm:$0xf]
        %v2881 = vld [vmem:[%s2879 + $0x4] sm:$0xf]
        %v2884 = vunpack.c.l.b16 %v2880
        %v2885 = vunpack.c.l.b16 %v2881
        %v2886 = vpack.c.b16 %v2885, %v2884
        %v2888 = vunpack.c.l.b16 %v334
        %v2889 = vpack.c.b16 %v2888, %v2643
        %v2891 = vsel %vm865, %v2886, 0
        %v2894 = vsel %vm865, %v2889, 0
        %2896 = vmatprep.subr.bf16.mxu0 0
        %2897 = vmatpush1.bf16.xpose.msra.mxu0 %v1944
        %2898 = vmatprep.subr.bf16.mxu0 0
        %2899 = vmatpush1.bf16.xpose.msra.mxu0 %v1082
        %2900 = vmatprep.subr.bf16.mxu0 0
        %2901 = vmatpush1.bf16.xpose.msra.mxu0 %v1079
        %2902 = vmatprep.subr.bf16.mxu0 0
        %2903 = vmatpush1.bf16.xpose.msra.mxu0 %v1076
        %2904 = vmatprep.subr.bf16.mxu0 0
        %2905 = vmatpush1.bf16.xpose.msra.mxu0 %v1941
        %2906 = vmatprep.subr.bf16.mxu0 0
        %2907 = vmatpush1.bf16.xpose.msra.mxu0 %v1070
        %2908 = vmatprep.subr.bf16.mxu0 0
        %2909 = vmatpush1.bf16.xpose.msra.mxu0 %v1067
        %2910 = vmatprep.subr.bf16.mxu0 0
        %2911 = vmatpush1.bf16.xpose.msra.mxu0 %v1064
        %2912 = vmatprep.subr.bf16.mxu0 0
        %2913 = vmatpush2.bf16.xpose.msra.mxu0 %v2894
        %2914 = vmatprep.subr.bf16.mxu0 0
        %2915 = vmatpush2.bf16.xpose.msra.mxu0 %v2269
        %2916 = vmatprep.subr.bf16.mxu0 0
        %2917 = vmatpush2.bf16.xpose.msra.mxu0 %v2266
        %2918 = vmatprep.subr.bf16.mxu0 0
        %2919 = vmatpush2.bf16.xpose.msra.mxu0 %v2263
        %2920 = vmatprep.subr.bf16.mxu0 0
        %2921 = vmatpush2.bf16.xpose.msra.mxu0 %v1947
        %2922 = vmatprep.subr.bf16.mxu0 0
        %2923 = vmatpush2.bf16.xpose.msra.mxu0 %v1094
        %2924 = vmatprep.subr.bf16.mxu0 0
        %2925 = vmatpush2.bf16.xpose.msra.mxu0 %v1091
        %2926 = vmatprep.subr.bf16.mxu0 0
        %2927 = vmatpush2.bf16.xpose.msra.mxu0 %v1088
        %2928 = vmatprep.mubr.bf16.mxu0 0
        %2929 = vmatmul.mubr.bf16.gmra.mxu0 %v2891
        %v2930 = vpop.f32.mrf.mxu0
        %v2931 = vadd.f32 0.0, %v2930
        %v2932 = vpop.f32.mrf.mxu0
        %v2933 = vadd.f32 0.0, %v2932
        %v2934 = vpop.f32.mrf.mxu0
        %v2935 = vadd.f32 0.0, %v2934
        %v2936 = vpop.f32.mrf.mxu0
        %v2937 = vadd.f32 0.0, %v2936
        %2938 = vdwg.mxu0
        %v2939 = vadd.f32 %v2875, %v2931
        %v2940 = vadd.f32 %v2876, %v2933
        %v2941 = vadd.f32 %v2877, %v2935
        %v2942 = vadd.f32 %v2878, %v2937
        %v2944 = vshrl.u32 %v334, 16
        %v2946 = vrot.slane %v2944, 4
        %v2947 = vshll.u32 %v334, 16
        %v2949 = vrot.slane %v2947, 5
        %v2950 = vor.u32 %v2946, %v2949
        %v2951 = vrot.slane %v2950, 4
        %v2953 = vshll.u32 %v335, 16
        %v2955 = vrot.slane %v2953, 5
        %v2956 = vsel %vm360, %v2951, %v2955
        %s2957 = scalar_lea.vmem %s1, 128
        %v2958 = vld [vmem:[%s2957] sm:$0xf]
        %v2959 = vld [vmem:[%s2957 + $0x4] sm:$0xf]
        %v2962 = vunpack.c.l.b16 %v2958
        %v2963 = vunpack.c.l.b16 %v2959
        %v2964 = vpack.c.b16 %v2963, %v2962
        %v2965 = vunpack.c.l.b16 %v2956
        %v2966 = vpack.c.b16 %v2965, %v2732
        %v2968 = vsel %vm865, %v2964, 0
        %v2971 = vsel %vm865, %v2966, 0
        %2973 = vmatprep.subr.bf16.mxu0 0
        %2974 = vmatpush1.bf16.xpose.msra.mxu0 %v2078
        %2975 = vmatprep.subr.bf16.mxu0 0
        %2976 = vmatpush1.bf16.xpose.msra.mxu0 %v903
        %2977 = vmatprep.subr.bf16.mxu0 0
        %2978 = vmatpush1.bf16.xpose.msra.mxu0 %v900
        %2979 = vmatprep.subr.bf16.mxu0 0
        %2980 = vmatpush1.bf16.xpose.msra.mxu0 %v897
        %2981 = vmatprep.subr.bf16.mxu0 0
        %2982 = vmatpush1.bf16.xpose.msra.mxu0 %v2075
        %2983 = vmatprep.subr.bf16.mxu0 0
        %2984 = vmatpush1.bf16.xpose.msra.mxu0 %v891
        %2985 = vmatprep.subr.bf16.mxu0 0
        %2986 = vmatpush1.bf16.xpose.msra.mxu0 %v888
        %2987 = vmatprep.subr.bf16.mxu0 0
        %2988 = vmatpush1.bf16.xpose.msra.mxu0 %v885
        %2989 = vmatprep.subr.bf16.mxu0 0
        %2990 = vmatpush2.bf16.xpose.msra.mxu0 %v2971
        %2991 = vmatprep.subr.bf16.mxu0 0
        %2992 = vmatpush2.bf16.xpose.msra.mxu0 %v2463
        %2993 = vmatprep.subr.bf16.mxu0 0
        %2994 = vmatpush2.bf16.xpose.msra.mxu0 %v2460
        %2995 = vmatprep.subr.bf16.mxu0 0
        %2996 = vmatpush2.bf16.xpose.msra.mxu0 %v2457
        %2997 = vmatprep.subr.bf16.mxu0 0
        %2998 = vmatpush2.bf16.xpose.msra.mxu0 %v2081
        %2999 = vmatprep.subr.bf16.mxu0 0
        %3000 = vmatpush2.bf16.xpose.msra.mxu0 %v915
        %3001 = vmatprep.subr.bf16.mxu0 0
        %3002 = vmatpush2.bf16.xpose.msra.mxu0 %v912
        %3003 = vmatprep.subr.bf16.mxu0 0
        %3004 = vmatpush2.bf16.xpose.msra.mxu0 %v909
        %3005 = vmatprep.mubr.bf16.mxu0 0
        %3006 = vmatmul.mubr.bf16.gmra.mxu0 %v2968
        %v3007 = vpop.f32.mrf.mxu0
        %v3008 = vadd.f32 0.0, %v3007
        %v3009 = vpop.f32.mrf.mxu0
        %v3010 = vadd.f32 0.0, %v3009
        %v3011 = vpop.f32.mrf.mxu0
        %v3012 = vadd.f32 0.0, %v3011
        %v3013 = vpop.f32.mrf.mxu0
        %v3014 = vadd.f32 0.0, %v3013
        %3015 = vdwg.mxu0
        %v3016 = vadd.f32 %v2939, %v3008
        %v3017 = vadd.f32 %v2940, %v3010
        %v3018 = vadd.f32 %v2941, %v3012
        %v3019 = vadd.f32 %v2942, %v3014
        %v3021 = vrot.slane %v334, 5
        %v3022 = vrot.slane %v3021, 4
        %v3023 = vrot.slane %v335, 5
        %v3024 = vsel %vm1173, %v3022, %v3023
        %s3025 = scalar_lea.vmem %s1, 136
        %v3026 = vld [vmem:[%s3025] sm:$0xf]
        %v3027 = vld [vmem:[%s3025 + $0x4] sm:$0xf]
        %v3030 = vunpack.c.l.b16 %v3026
        %v3031 = vunpack.c.l.b16 %v3027
        %v3032 = vpack.c.b16 %v3031, %v3030
        %v3033 = vunpack.c.l.b16 %v3024
        %v3034 = vpack.c.b16 %v3033, %v2812
        %v3036 = vsel %vm865, %v3032, 0
        %v3039 = vsel %vm865, %v3034, 0
        %3041 = vmatprep.subr.bf16.mxu0 0
        %3042 = vmatpush1.bf16.xpose.msra.mxu0 %v2176
        %3043 = vmatprep.subr.bf16.mxu0 0
        %3044 = vmatpush1.bf16.xpose.msra.mxu0 %v1395
        %3045 = vmatprep.subr.bf16.mxu0 0
        %3046 = vmatpush1.bf16.xpose.msra.mxu0 %v1392
        %3047 = vmatprep.subr.bf16.mxu0 0
        %3048 = vmatpush1.bf16.xpose.msra.mxu0 %v1389
        %3049 = vmatprep.subr.bf16.mxu0 0
        %3050 = vmatpush1.bf16.xpose.msra.mxu0 %v2173
        %3051 = vmatprep.subr.bf16.mxu0 0
        %3052 = vmatpush1.bf16.xpose.msra.mxu0 %v1383
        %3053 = vmatprep.subr.bf16.mxu0 0
        %3054 = vmatpush1.bf16.xpose.msra.mxu0 %v1380
        %3055 = vmatprep.subr.bf16.mxu0 0
        %3056 = vmatpush1.bf16.xpose.msra.mxu0 %v1377
        %3057 = vmatprep.subr.bf16.mxu0 0
        %3058 = vmatpush2.bf16.xpose.msra.mxu0 %v3039
        %3059 = vmatprep.subr.bf16.mxu0 0
        %3060 = vmatpush2.bf16.xpose.msra.mxu0 %v2585
        %3061 = vmatprep.subr.bf16.mxu0 0
        %3062 = vmatpush2.bf16.xpose.msra.mxu0 %v2582
        %3063 = vmatprep.subr.bf16.mxu0 0
        %3064 = vmatpush2.bf16.xpose.msra.mxu0 %v2579
        %3065 = vmatprep.subr.bf16.mxu0 0
        %3066 = vmatpush2.bf16.xpose.msra.mxu0 %v2179
        %3067 = vmatprep.subr.bf16.mxu0 0
        %3068 = vmatpush2.bf16.xpose.msra.mxu0 %v1407
        %3069 = vmatprep.subr.bf16.mxu0 0
        %3070 = vmatpush2.bf16.xpose.msra.mxu0 %v1404
        %3071 = vmatprep.subr.bf16.mxu0 0
        %3072 = vmatpush2.bf16.xpose.msra.mxu0 %v1401
        %3073 = vmatprep.mubr.bf16.mxu0 0
        %3074 = vmatmul.mubr.bf16.gmra.mxu0 %v3036
        %v3075 = vpop.f32.mrf.mxu0
        %v3076 = vadd.f32 0.0, %v3075
        %v3077 = vpop.f32.mrf.mxu0
        %v3078 = vadd.f32 0.0, %v3077
        %v3079 = vpop.f32.mrf.mxu0
        %v3080 = vadd.f32 0.0, %v3079
        %v3081 = vpop.f32.mrf.mxu0
        %v3082 = vadd.f32 0.0, %v3081
        %3083 = vdwg.mxu0
        %v3084 = vadd.f32 %v3016, %v3076
        %v3085 = vadd.f32 %v3017, %v3078
        %v3086 = vadd.f32 %v3018, %v3080
        %v3087 = vadd.f32 %v3019, %v3082
        %s3088 = scalar_lea.vmem %s1, 144
        %v3089 = vld [vmem:[%s3088] sm:$0xf]
        %v3090 = vld [vmem:[%s3088 + $0x4] sm:$0xf]
        %v3093 = vunpack.c.l.b16 %v3089
        %v3094 = vunpack.c.l.b16 %v3090
        %v3095 = vpack.c.b16 %v3094, %v3093
        %v3104 = vunpack.c.l.b16 %v336
        %v3105 = vunpack.c.l.b16 %v338
        %v3106 = vunpack.c.l.b16 %v340
        %v3107 = vunpack.c.l.b16 %v342
        %v3108 = vunpack.c.l.b16 %v344
        %v3109 = vunpack.c.l.b16 %v346
        %v3110 = vunpack.c.l.b16 %v348
        %v3111 = vunpack.c.l.b16 %v350
        %v3112 = vpack.c.b16 %v3105, %v3104
        %v3113 = vpack.c.b16 %v3107, %v3106
        %v3114 = vpack.c.b16 %v3109, %v3108
        %v3115 = vpack.c.b16 %v3111, %v3110
        %v3117 = vsel %vm865, %v3095, 0
        %v3120 = vsel %vm865, %v3112, 0
        %v3123 = vsel %vm865, %v3113, 0
        %v3126 = vsel %vm865, %v3114, 0
        %v3129 = vsel %vm865, %v3115, 0
        %3131 = vmatprep.subr.bf16.mxu0 0
        %3132 = vmatpush1.bf16.xpose.msra.mxu0 %v1094
        %3133 = vmatprep.subr.bf16.mxu0 0
        %3134 = vmatpush1.bf16.xpose.msra.mxu0 %v1091
        %3135 = vmatprep.subr.bf16.mxu0 0
        %3136 = vmatpush1.bf16.xpose.msra.mxu0 %v1088
        %3137 = vmatprep.subr.bf16.mxu0 0
        %3138 = vmatpush1.bf16.xpose.msra.mxu0 %v1085
        %3139 = vmatprep.subr.bf16.mxu0 0
        %3140 = vmatpush1.bf16.xpose.msra.mxu0 %v1082
        %3141 = vmatprep.subr.bf16.mxu0 0
        %3142 = vmatpush1.bf16.xpose.msra.mxu0 %v1079
        %3143 = vmatprep.subr.bf16.mxu0 0
        %3144 = vmatpush1.bf16.xpose.msra.mxu0 %v1076
        %3145 = vmatprep.subr.bf16.mxu0 0
        %3146 = vmatpush1.bf16.xpose.msra.mxu0 %v1073
        %3147 = vmatprep.subr.bf16.mxu0 0
        %3148 = vmatpush2.bf16.xpose.msra.mxu0 %v3129
        %3149 = vmatprep.subr.bf16.mxu0 0
        %3150 = vmatpush2.bf16.xpose.msra.mxu0 %v3126
        %3151 = vmatprep.subr.bf16.mxu0 0
        %3152 = vmatpush2.bf16.xpose.msra.mxu0 %v3123
        %3153 = vmatprep.subr.bf16.mxu0 0
        %3154 = vmatpush2.bf16.xpose.msra.mxu0 %v3120
        %3155 = vmatprep.subr.bf16.mxu0 0
        %3156 = vmatpush2.bf16.xpose.msra.mxu0 %v2269
        %3157 = vmatprep.subr.bf16.mxu0 0
        %3158 = vmatpush2.bf16.xpose.msra.mxu0 %v2266
        %3159 = vmatprep.subr.bf16.mxu0 0
        %3160 = vmatpush2.bf16.xpose.msra.mxu0 %v2263
        %3161 = vmatprep.subr.bf16.mxu0 0
        %3162 = vmatpush2.bf16.xpose.msra.mxu0 %v2260
        %3163 = vmatprep.mubr.bf16.mxu0 0
        %3164 = vmatmul.mubr.bf16.gmra.mxu0 %v3117
        %v3165 = vpop.f32.mrf.mxu0
        %v3166 = vadd.f32 0.0, %v3165
        %v3167 = vpop.f32.mrf.mxu0
        %v3168 = vadd.f32 0.0, %v3167
        %v3169 = vpop.f32.mrf.mxu0
        %v3170 = vadd.f32 0.0, %v3169
        %v3171 = vpop.f32.mrf.mxu0
        %v3172 = vadd.f32 0.0, %v3171
        %3173 = vdwg.mxu0
        %v3174 = vadd.f32 %v3084, %v3166
        %v3175 = vadd.f32 %v3085, %v3168
        %v3176 = vadd.f32 %v3086, %v3170
        %v3177 = vadd.f32 %v3087, %v3172
        %v3179 = vshrl.u32 %v336, 16
        %v3181 = vrot.slane %v3179, 4
        %v3182 = vshll.u32 %v336, 16
        %v3184 = vrot.slane %v3182, 5
        %v3185 = vor.u32 %v3181, %v3184
        %v3186 = vrot.slane %v3185, 4
        %v3188 = vshll.u32 %v337, 16
        %v3190 = vrot.slane %v3188, 5
        %v3191 = vsel %vm360, %v3186, %v3190
        %v3193 = vshrl.u32 %v338, 16
        %v3195 = vrot.slane %v3193, 4
        %v3196 = vshll.u32 %v338, 16
        %v3198 = vrot.slane %v3196, 5
        %v3199 = vor.u32 %v3195, %v3198
        %v3200 = vrot.slane %v3199, 4
        %v3202 = vshll.u32 %v339, 16
        %v3204 = vrot.slane %v3202, 5
        %v3205 = vsel %vm360, %v3200, %v3204
        %v3207 = vshrl.u32 %v340, 16
        %v3209 = vrot.slane %v3207, 4
        %v3210 = vshll.u32 %v340, 16
        %v3212 = vrot.slane %v3210, 5
        %v3213 = vor.u32 %v3209, %v3212
        %v3214 = vrot.slane %v3213, 4
        %v3216 = vshll.u32 %v341, 16
        %v3218 = vrot.slane %v3216, 5
        %v3219 = vsel %vm360, %v3214, %v3218
        %v3221 = vshrl.u32 %v342, 16
        %v3223 = vrot.slane %v3221, 4
        %v3224 = vshll.u32 %v342, 16
        %v3226 = vrot.slane %v3224, 5
        %v3227 = vor.u32 %v3223, %v3226
        %v3228 = vrot.slane %v3227, 4
        %v3230 = vshll.u32 %v343, 16
        %v3232 = vrot.slane %v3230, 5
        %v3233 = vsel %vm360, %v3228, %v3232
        %v3235 = vshrl.u32 %v344, 16
        %v3237 = vrot.slane %v3235, 4
        %v3238 = vshll.u32 %v344, 16
        %v3240 = vrot.slane %v3238, 5
        %v3241 = vor.u32 %v3237, %v3240
        %v3242 = vrot.slane %v3241, 4
        %v3244 = vshll.u32 %v345, 16
        %v3246 = vrot.slane %v3244, 5
        %v3247 = vsel %vm360, %v3242, %v3246
        %v3249 = vshrl.u32 %v346, 16
        %v3251 = vrot.slane %v3249, 4
        %v3252 = vshll.u32 %v346, 16
        %v3254 = vrot.slane %v3252, 5
        %v3255 = vor.u32 %v3251, %v3254
        %v3256 = vrot.slane %v3255, 4
        %v3258 = vshll.u32 %v347, 16
        %v3260 = vrot.slane %v3258, 5
        %v3261 = vsel %vm360, %v3256, %v3260
        %v3263 = vshrl.u32 %v348, 16
        %v3265 = vrot.slane %v3263, 4
        %v3266 = vshll.u32 %v348, 16
        %v3268 = vrot.slane %v3266, 5
        %v3269 = vor.u32 %v3265, %v3268
        %v3270 = vrot.slane %v3269, 4
        %v3272 = vshll.u32 %v349, 16
        %v3274 = vrot.slane %v3272, 5
        %v3275 = vsel %vm360, %v3270, %v3274
        %v3277 = vshrl.u32 %v350, 16
        %v3279 = vrot.slane %v3277, 4
        %v3280 = vshll.u32 %v350, 16
        %v3282 = vrot.slane %v3280, 5
        %v3283 = vor.u32 %v3279, %v3282
        %v3284 = vrot.slane %v3283, 4
        %v3286 = vshll.u32 %v351, 16
        %v3288 = vrot.slane %v3286, 5
        %v3289 = vsel %vm360, %v3284, %v3288
        %s3290 = scalar_lea.vmem %s1, 152
        %v3291 = vld [vmem:[%s3290] sm:$0xf]
        %v3292 = vld [vmem:[%s3290 + $0x4] sm:$0xf]
        %v3295 = vunpack.c.l.b16 %v3291
        %v3296 = vunpack.c.l.b16 %v3292
        %v3297 = vpack.c.b16 %v3296, %v3295
        %v3298 = vunpack.c.l.b16 %v3191
        %v3299 = vunpack.c.l.b16 %v3205
        %v3300 = vunpack.c.l.b16 %v3219
        %v3301 = vunpack.c.l.b16 %v3233
        %v3302 = vunpack.c.l.b16 %v3247
        %v3303 = vunpack.c.l.b16 %v3261
        %v3304 = vunpack.c.l.b16 %v3275
        %v3305 = vunpack.c.l.b16 %v3289
        %v3306 = vpack.c.b16 %v3299, %v3298
        %v3307 = vpack.c.b16 %v3301, %v3300
        %v3308 = vpack.c.b16 %v3303, %v3302
        %v3309 = vpack.c.b16 %v3305, %v3304
        %v3311 = vsel %vm865, %v3297, 0
        %v3314 = vsel %vm865, %v3306, 0
        %v3317 = vsel %vm865, %v3307, 0
        %v3320 = vsel %vm865, %v3308, 0
        %v3323 = vsel %vm865, %v3309, 0
        %3325 = vmatprep.subr.bf16.mxu0 0
        %3326 = vmatpush1.bf16.xpose.msra.mxu0 %v915
        %3327 = vmatprep.subr.bf16.mxu0 0
        %3328 = vmatpush1.bf16.xpose.msra.mxu0 %v912
        %3329 = vmatprep.subr.bf16.mxu0 0
        %3330 = vmatpush1.bf16.xpose.msra.mxu0 %v909
        %3331 = vmatprep.subr.bf16.mxu0 0
        %3332 = vmatpush1.bf16.xpose.msra.mxu0 %v906
        %3333 = vmatprep.subr.bf16.mxu0 0
        %3334 = vmatpush1.bf16.xpose.msra.mxu0 %v903
        %3335 = vmatprep.subr.bf16.mxu0 0
        %3336 = vmatpush1.bf16.xpose.msra.mxu0 %v900
        %3337 = vmatprep.subr.bf16.mxu0 0
        %3338 = vmatpush1.bf16.xpose.msra.mxu0 %v897
        %3339 = vmatprep.subr.bf16.mxu0 0
        %3340 = vmatpush1.bf16.xpose.msra.mxu0 %v894
        %3341 = vmatprep.subr.bf16.mxu0 0
        %3342 = vmatpush2.bf16.xpose.msra.mxu0 %v3323
        %3343 = vmatprep.subr.bf16.mxu0 0
        %3344 = vmatpush2.bf16.xpose.msra.mxu0 %v3320
        %3345 = vmatprep.subr.bf16.mxu0 0
        %3346 = vmatpush2.bf16.xpose.msra.mxu0 %v3317
        %3347 = vmatprep.subr.bf16.mxu0 0
        %3348 = vmatpush2.bf16.xpose.msra.mxu0 %v3314
        %3349 = vmatprep.subr.bf16.mxu0 0
        %3350 = vmatpush2.bf16.xpose.msra.mxu0 %v2463
        %3351 = vmatprep.subr.bf16.mxu0 0
        %3352 = vmatpush2.bf16.xpose.msra.mxu0 %v2460
        %3353 = vmatprep.subr.bf16.mxu0 0
        %3354 = vmatpush2.bf16.xpose.msra.mxu0 %v2457
        %3355 = vmatprep.subr.bf16.mxu0 0
        %3356 = vmatpush2.bf16.xpose.msra.mxu0 %v2454
        %3357 = vmatprep.mubr.bf16.mxu0 0
        %3358 = vmatmul.mubr.bf16.gmra.mxu0 %v3311
        %v3359 = vpop.f32.mrf.mxu0
        %v3360 = vadd.f32 0.0, %v3359
        %v3361 = vpop.f32.mrf.mxu0
        %v3362 = vadd.f32 0.0, %v3361
        %v3363 = vpop.f32.mrf.mxu0
        %v3364 = vadd.f32 0.0, %v3363
        %v3365 = vpop.f32.mrf.mxu0
        %v3366 = vadd.f32 0.0, %v3365
        %3367 = vdwg.mxu0
        %v3368 = vadd.f32 %v3174, %v3360
        %v3369 = vadd.f32 %v3175, %v3362
        %v3370 = vadd.f32 %v3176, %v3364
        %v3371 = vadd.f32 %v3177, %v3366
        %v3380 = vrot.slane %v336, 5
        %v3381 = vrot.slane %v3380, 4
        %v3382 = vrot.slane %v337, 5
        %v3383 = vsel %vm1173, %v3381, %v3382
        %v3384 = vrot.slane %v338, 5
        %v3385 = vrot.slane %v3384, 4
        %v3386 = vrot.slane %v339, 5
        %v3387 = vsel %vm1173, %v3385, %v3386
        %v3388 = vrot.slane %v340, 5
        %v3389 = vrot.slane %v3388, 4
        %v3390 = vrot.slane %v341, 5
        %v3391 = vsel %vm1173, %v3389, %v3390
        %v3392 = vrot.slane %v342, 5
        %v3393 = vrot.slane %v3392, 4
        %v3394 = vrot.slane %v343, 5
        %v3395 = vsel %vm1173, %v3393, %v3394
        %v3396 = vrot.slane %v344, 5
        %v3397 = vrot.slane %v3396, 4
        %v3398 = vrot.slane %v345, 5
        %v3399 = vsel %vm1173, %v3397, %v3398
        %v3400 = vrot.slane %v346, 5
        %v3401 = vrot.slane %v3400, 4
        %v3402 = vrot.slane %v347, 5
        %v3403 = vsel %vm1173, %v3401, %v3402
        %v3404 = vrot.slane %v348, 5
        %v3405 = vrot.slane %v3404, 4
        %v3406 = vrot.slane %v349, 5
        %v3407 = vsel %vm1173, %v3405, %v3406
        %v3408 = vrot.slane %v350, 5
        %v3409 = vrot.slane %v3408, 4
        %v3410 = vrot.slane %v351, 5
        %v3411 = vsel %vm1173, %v3409, %v3410
        %s3412 = scalar_lea.vmem %s1, 160
        %v3413 = vld [vmem:[%s3412] sm:$0xf]
        %v3414 = vld [vmem:[%s3412 + $0x4] sm:$0xf]
        %v3417 = vunpack.c.l.b16 %v3413
        %v3418 = vunpack.c.l.b16 %v3414
        %v3419 = vpack.c.b16 %v3418, %v3417
        %v3420 = vunpack.c.l.b16 %v3383
        %v3421 = vunpack.c.l.b16 %v3387
        %v3422 = vunpack.c.l.b16 %v3391
        %v3423 = vunpack.c.l.b16 %v3395
        %v3424 = vunpack.c.l.b16 %v3399
        %v3425 = vunpack.c.l.b16 %v3403
        %v3426 = vunpack.c.l.b16 %v3407
        %v3427 = vunpack.c.l.b16 %v3411
        %v3428 = vpack.c.b16 %v3421, %v3420
        %v3429 = vpack.c.b16 %v3423, %v3422
        %v3430 = vpack.c.b16 %v3425, %v3424
        %v3431 = vpack.c.b16 %v3427, %v3426
        %v3433 = vsel %vm865, %v3419, 0
        %v3436 = vsel %vm865, %v3428, 0
        %v3439 = vsel %vm865, %v3429, 0
        %v3442 = vsel %vm865, %v3430, 0
        %v3445 = vsel %vm865, %v3431, 0
        %3447 = vmatprep.subr.bf16.mxu0 0
        %3448 = vmatpush1.bf16.xpose.msra.mxu0 %v1407
        %3449 = vmatprep.subr.bf16.mxu0 0
        %3450 = vmatpush1.bf16.xpose.msra.mxu0 %v1404
        %3451 = vmatprep.subr.bf16.mxu0 0
        %3452 = vmatpush1.bf16.xpose.msra.mxu0 %v1401
        %3453 = vmatprep.subr.bf16.mxu0 0
        %3454 = vmatpush1.bf16.xpose.msra.mxu0 %v1398
        %3455 = vmatprep.subr.bf16.mxu0 0
        %3456 = vmatpush1.bf16.xpose.msra.mxu0 %v1395
        %3457 = vmatprep.subr.bf16.mxu0 0
        %3458 = vmatpush1.bf16.xpose.msra.mxu0 %v1392
        %3459 = vmatprep.subr.bf16.mxu0 0
        %3460 = vmatpush1.bf16.xpose.msra.mxu0 %v1389
        %3461 = vmatprep.subr.bf16.mxu0 0
        %3462 = vmatpush1.bf16.xpose.msra.mxu0 %v1386
        %3463 = vmatprep.subr.bf16.mxu0 0
        %3464 = vmatpush2.bf16.xpose.msra.mxu0 %v3445
        %3465 = vmatprep.subr.bf16.mxu0 0
        %3466 = vmatpush2.bf16.xpose.msra.mxu0 %v3442
        %3467 = vmatprep.subr.bf16.mxu0 0
        %3468 = vmatpush2.bf16.xpose.msra.mxu0 %v3439
        %3469 = vmatprep.subr.bf16.mxu0 0
        %3470 = vmatpush2.bf16.xpose.msra.mxu0 %v3436
        %3471 = vmatprep.subr.bf16.mxu0 0
        %3472 = vmatpush2.bf16.xpose.msra.mxu0 %v2585
        %3473 = vmatprep.subr.bf16.mxu0 0
        %3474 = vmatpush2.bf16.xpose.msra.mxu0 %v2582
        %3475 = vmatprep.subr.bf16.mxu0 0
        %3476 = vmatpush2.bf16.xpose.msra.mxu0 %v2579
        %3477 = vmatprep.subr.bf16.mxu0 0
        %3478 = vmatpush2.bf16.xpose.msra.mxu0 %v2576
        %3479 = vmatprep.mubr.bf16.mxu0 0
        %3480 = vmatmul.mubr.bf16.gmra.mxu0 %v3433
        %v3481 = vpop.f32.mrf.mxu0
        %v3482 = vadd.f32 0.0, %v3481
        %v3483 = vpop.f32.mrf.mxu0
        %v3484 = vadd.f32 0.0, %v3483
        %v3485 = vpop.f32.mrf.mxu0
        %v3486 = vadd.f32 0.0, %v3485
        %v3487 = vpop.f32.mrf.mxu0
        %v3488 = vadd.f32 0.0, %v3487
        %3489 = vdwg.mxu0
        %v3490 = vadd.f32 %v3368, %v3482
        %v3491 = vadd.f32 %v3369, %v3484
        %v3492 = vadd.f32 %v3370, %v3486
        %v3493 = vadd.f32 %v3371, %v3488
        %s3494 = scalar_lea.vmem %s1, 168
        %v3495 = vld [vmem:[%s3494] sm:$0xf]
        %v3496 = vld [vmem:[%s3494 + $0x4] sm:$0xf]
        %v3499 = vunpack.c.l.b16 %v3495
        %v3500 = vunpack.c.l.b16 %v3496
        %v3501 = vpack.c.b16 %v3500, %v3499
        %v3503 = vunpack.c.l.b16 %v352
        %v3504 = vpack.c.b16 %v3106, %v3105
        %v3505 = vpack.c.b16 %v3108, %v3107
        %v3506 = vpack.c.b16 %v3110, %v3109
        %v3507 = vpack.c.b16 %v3503, %v3111
        %v3509 = vsel %vm865, %v3501, 0
        %v3512 = vsel %vm865, %v3504, 0
        %v3515 = vsel %vm865, %v3505, 0
        %v3518 = vsel %vm865, %v3506, 0
        %v3521 = vsel %vm865, %v3507, 0
        %3523 = vmatprep.subr.bf16.mxu0 0
        %3524 = vmatpush1.bf16.xpose.msra.mxu0 %v1537
        %3525 = vmatprep.subr.bf16.mxu0 0
        %3526 = vmatpush1.bf16.xpose.msra.mxu0 %v1534
        %3527 = vmatprep.subr.bf16.mxu0 0
        %3528 = vmatpush1.bf16.xpose.msra.mxu0 %v1531
        %3529 = vmatprep.subr.bf16.mxu0 0
        %3530 = vmatpush1.bf16.xpose.msra.mxu0 %v1528
        %3531 = vmatprep.subr.bf16.mxu0 0
        %3532 = vmatpush1.bf16.xpose.msra.mxu0 %v1525
        %3533 = vmatprep.subr.bf16.mxu0 0
        %3534 = vmatpush1.bf16.xpose.msra.mxu0 %v1522
        %3535 = vmatprep.subr.bf16.mxu0 0
        %3536 = vmatpush1.bf16.xpose.msra.mxu0 %v1519
        %3537 = vmatprep.subr.bf16.mxu0 0
        %3538 = vmatpush1.bf16.xpose.msra.mxu0 %v1516
        %3539 = vmatprep.subr.bf16.mxu0 0
        %3540 = vmatpush2.bf16.xpose.msra.mxu0 %v3521
        %3541 = vmatprep.subr.bf16.mxu0 0
        %3542 = vmatpush2.bf16.xpose.msra.mxu0 %v3518
        %3543 = vmatprep.subr.bf16.mxu0 0
        %3544 = vmatpush2.bf16.xpose.msra.mxu0 %v3515
        %3545 = vmatprep.subr.bf16.mxu0 0
        %3546 = vmatpush2.bf16.xpose.msra.mxu0 %v3512
        %3547 = vmatprep.subr.bf16.mxu0 0
        %3548 = vmatpush2.bf16.xpose.msra.mxu0 %v2661
        %3549 = vmatprep.subr.bf16.mxu0 0
        %3550 = vmatpush2.bf16.xpose.msra.mxu0 %v2658
        %3551 = vmatprep.subr.bf16.mxu0 0
        %3552 = vmatpush2.bf16.xpose.msra.mxu0 %v2655
        %3553 = vmatprep.subr.bf16.mxu0 0
        %3554 = vmatpush2.bf16.xpose.msra.mxu0 %v2652
        %3555 = vmatprep.mubr.bf16.mxu0 0
        %3556 = vmatmul.mubr.bf16.gmra.mxu0 %v3509
        %v3557 = vpop.f32.mrf.mxu0
        %v3558 = vadd.f32 0.0, %v3557
        %v3559 = vpop.f32.mrf.mxu0
        %v3560 = vadd.f32 0.0, %v3559
        %v3561 = vpop.f32.mrf.mxu0
        %v3562 = vadd.f32 0.0, %v3561
        %v3563 = vpop.f32.mrf.mxu0
        %v3564 = vadd.f32 0.0, %v3563
        %3565 = vdwg.mxu0
        %v3566 = vadd.f32 %v3490, %v3558
        %v3567 = vadd.f32 %v3491, %v3560
        %v3568 = vadd.f32 %v3492, %v3562
        %v3569 = vadd.f32 %v3493, %v3564
        %v3571 = vshrl.u32 %v352, 16
        %v3573 = vrot.slane %v3571, 4
        %v3574 = vshll.u32 %v352, 16
        %v3576 = vrot.slane %v3574, 5
        %v3577 = vor.u32 %v3573, %v3576
        %v3578 = vrot.slane %v3577, 4
        %v3580 = vshll.u32 %v353, 16
        %v3582 = vrot.slane %v3580, 5
        %v3583 = vsel %vm360, %v3578, %v3582
        %s3584 = scalar_lea.vmem %s1, 176
        %v3585 = vld [vmem:[%s3584] sm:$0xf]
        %v3586 = vld [vmem:[%s3584 + $0x4] sm:$0xf]
        %v3589 = vunpack.c.l.b16 %v3585
        %v3590 = vunpack.c.l.b16 %v3586
        %v3591 = vpack.c.b16 %v3590, %v3589
        %v3592 = vunpack.c.l.b16 %v3583
        %v3593 = vpack.c.b16 %v3300, %v3299
        %v3594 = vpack.c.b16 %v3302, %v3301
        %v3595 = vpack.c.b16 %v3304, %v3303
        %v3596 = vpack.c.b16 %v3592, %v3305
        %v3598 = vsel %vm865, %v3591, 0
        %v3601 = vsel %vm865, %v3593, 0
        %v3604 = vsel %vm865, %v3594, 0
        %v3607 = vsel %vm865, %v3595, 0
        %v3610 = vsel %vm865, %v3596, 0
        %3612 = vmatprep.subr.bf16.mxu0 0
        %3613 = vmatpush1.bf16.xpose.msra.mxu0 %v1719
        %3614 = vmatprep.subr.bf16.mxu0 0
        %3615 = vmatpush1.bf16.xpose.msra.mxu0 %v1716
        %3616 = vmatprep.subr.bf16.mxu0 0
        %3617 = vmatpush1.bf16.xpose.msra.mxu0 %v1713
        %3618 = vmatprep.subr.bf16.mxu0 0
        %3619 = vmatpush1.bf16.xpose.msra.mxu0 %v1710
        %3620 = vmatprep.subr.bf16.mxu0 0
        %3621 = vmatpush1.bf16.xpose.msra.mxu0 %v1707
        %3622 = vmatprep.subr.bf16.mxu0 0
        %3623 = vmatpush1.bf16.xpose.msra.mxu0 %v1704
        %3624 = vmatprep.subr.bf16.mxu0 0
        %3625 = vmatpush1.bf16.xpose.msra.mxu0 %v1701
        %3626 = vmatprep.subr.bf16.mxu0 0
        %3627 = vmatpush1.bf16.xpose.msra.mxu0 %v1698
        %3628 = vmatprep.subr.bf16.mxu0 0
        %3629 = vmatpush2.bf16.xpose.msra.mxu0 %v3610
        %3630 = vmatprep.subr.bf16.mxu0 0
        %3631 = vmatpush2.bf16.xpose.msra.mxu0 %v3607
        %3632 = vmatprep.subr.bf16.mxu0 0
        %3633 = vmatpush2.bf16.xpose.msra.mxu0 %v3604
        %3634 = vmatprep.subr.bf16.mxu0 0
        %3635 = vmatpush2.bf16.xpose.msra.mxu0 %v3601
        %3636 = vmatprep.subr.bf16.mxu0 0
        %3637 = vmatpush2.bf16.xpose.msra.mxu0 %v2750
        %3638 = vmatprep.subr.bf16.mxu0 0
        %3639 = vmatpush2.bf16.xpose.msra.mxu0 %v2747
        %3640 = vmatprep.subr.bf16.mxu0 0
        %3641 = vmatpush2.bf16.xpose.msra.mxu0 %v2744
        %3642 = vmatprep.subr.bf16.mxu0 0
        %3643 = vmatpush2.bf16.xpose.msra.mxu0 %v2741
        %3644 = vmatprep.mubr.bf16.mxu0 0
        %3645 = vmatmul.mubr.bf16.gmra.mxu0 %v3598
        %v3646 = vpop.f32.mrf.mxu0
        %v3647 = vadd.f32 0.0, %v3646
        %v3648 = vpop.f32.mrf.mxu0
        %v3649 = vadd.f32 0.0, %v3648
        %v3650 = vpop.f32.mrf.mxu0
        %v3651 = vadd.f32 0.0, %v3650
        %v3652 = vpop.f32.mrf.mxu0
        %v3653 = vadd.f32 0.0, %v3652
        %3654 = vdwg.mxu0
        %v3655 = vadd.f32 %v3566, %v3647
        %v3656 = vadd.f32 %v3567, %v3649
        %v3657 = vadd.f32 %v3568, %v3651
        %v3658 = vadd.f32 %v3569, %v3653
        %v3660 = vrot.slane %v352, 5
        %v3661 = vrot.slane %v3660, 4
        %v3662 = vrot.slane %v353, 5
        %v3663 = vsel %vm1173, %v3661, %v3662
        %s3664 = scalar_lea.vmem %s1, 184
        %v3665 = vld [vmem:[%s3664] sm:$0xf]
        %v3666 = vld [vmem:[%s3664 + $0x4] sm:$0xf]
        %v3669 = vunpack.c.l.b16 %v3665
        %v3670 = vunpack.c.l.b16 %v3666
        %v3671 = vpack.c.b16 %v3670, %v3669
        %v3672 = vunpack.c.l.b16 %v3663
        %v3673 = vpack.c.b16 %v3422, %v3421
        %v3674 = vpack.c.b16 %v3424, %v3423
        %v3675 = vpack.c.b16 %v3426, %v3425
        %v3676 = vpack.c.b16 %v3672, %v3427
        %v3678 = vsel %vm865, %v3671, 0
        %v3681 = vsel %vm865, %v3673, 0
        %v3684 = vsel %vm865, %v3674, 0
        %v3687 = vsel %vm865, %v3675, 0
        %v3690 = vsel %vm865, %v3676, 0
        %3692 = vmatprep.subr.bf16.mxu0 0
        %3693 = vmatpush1.bf16.xpose.msra.mxu0 %v1865
        %3694 = vmatprep.subr.bf16.mxu0 0
        %3695 = vmatpush1.bf16.xpose.msra.mxu0 %v1862
        %3696 = vmatprep.subr.bf16.mxu0 0
        %3697 = vmatpush1.bf16.xpose.msra.mxu0 %v1859
        %3698 = vmatprep.subr.bf16.mxu0 0
        %3699 = vmatpush1.bf16.xpose.msra.mxu0 %v1856
        %3700 = vmatprep.subr.bf16.mxu0 0
        %3701 = vmatpush1.bf16.xpose.msra.mxu0 %v1853
        %3702 = vmatprep.subr.bf16.mxu0 0
        %3703 = vmatpush1.bf16.xpose.msra.mxu0 %v1850
        %3704 = vmatprep.subr.bf16.mxu0 0
        %3705 = vmatpush1.bf16.xpose.msra.mxu0 %v1847
        %3706 = vmatprep.subr.bf16.mxu0 0
        %3707 = vmatpush1.bf16.xpose.msra.mxu0 %v1844
        %3708 = vmatprep.subr.bf16.mxu0 0
        %3709 = vmatpush2.bf16.xpose.msra.mxu0 %v3690
        %3710 = vmatprep.subr.bf16.mxu0 0
        %3711 = vmatpush2.bf16.xpose.msra.mxu0 %v3687
        %3712 = vmatprep.subr.bf16.mxu0 0
        %3713 = vmatpush2.bf16.xpose.msra.mxu0 %v3684
        %3714 = vmatprep.subr.bf16.mxu0 0
        %3715 = vmatpush2.bf16.xpose.msra.mxu0 %v3681
        %3716 = vmatprep.subr.bf16.mxu0 0
        %3717 = vmatpush2.bf16.xpose.msra.mxu0 %v2830
        %3718 = vmatprep.subr.bf16.mxu0 0
        %3719 = vmatpush2.bf16.xpose.msra.mxu0 %v2827
        %3720 = vmatprep.subr.bf16.mxu0 0
        %3721 = vmatpush2.bf16.xpose.msra.mxu0 %v2824
        %3722 = vmatprep.subr.bf16.mxu0 0
        %3723 = vmatpush2.bf16.xpose.msra.mxu0 %v2821
        %3724 = vmatprep.mubr.bf16.mxu0 0
        %3725 = vmatmul.mubr.bf16.gmra.mxu0 %v3678
        %v3726 = vpop.f32.mrf.mxu0
        %v3727 = vadd.f32 0.0, %v3726
        %v3728 = vpop.f32.mrf.mxu0
        %v3729 = vadd.f32 0.0, %v3728
        %v3730 = vpop.f32.mrf.mxu0
        %v3731 = vadd.f32 0.0, %v3730
        %v3732 = vpop.f32.mrf.mxu0
        %v3733 = vadd.f32 0.0, %v3732
        %3734 = vdwg.mxu0
        %v3735 = vadd.f32 %v3655, %v3727
        %v3736 = vadd.f32 %v3656, %v3729
        %v3737 = vadd.f32 %v3657, %v3731
        %v3738 = vadd.f32 %v3658, %v3733
        %s3739 = scalar_lea.vmem %s1, 192
        %v3740 = vld [vmem:[%s3739] sm:$0xf]
        %v3741 = vld [vmem:[%s3739 + $0x4] sm:$0xf]
        %v3744 = vunpack.c.l.b16 %v3740
        %v3745 = vunpack.c.l.b16 %v3741
        %v3746 = vpack.c.b16 %v3745, %v3744
        %v3748 = vunpack.c.l.b16 %v354
        %v3749 = vpack.c.b16 %v3748, %v3503
        %v3751 = vsel %vm865, %v3746, 0
        %v3754 = vsel %vm865, %v3749, 0
        %3756 = vmatprep.subr.bf16.mxu0 0
        %3757 = vmatpush1.bf16.xpose.msra.mxu0 %v1947
        %3758 = vmatprep.subr.bf16.mxu0 0
        %3759 = vmatpush1.bf16.xpose.msra.mxu0 %v1094
        %3760 = vmatprep.subr.bf16.mxu0 0
        %3761 = vmatpush1.bf16.xpose.msra.mxu0 %v1091
        %3762 = vmatprep.subr.bf16.mxu0 0
        %3763 = vmatpush1.bf16.xpose.msra.mxu0 %v1088
        %3764 = vmatprep.subr.bf16.mxu0 0
        %3765 = vmatpush1.bf16.xpose.msra.mxu0 %v1944
        %3766 = vmatprep.subr.bf16.mxu0 0
        %3767 = vmatpush1.bf16.xpose.msra.mxu0 %v1082
        %3768 = vmatprep.subr.bf16.mxu0 0
        %3769 = vmatpush1.bf16.xpose.msra.mxu0 %v1079
        %3770 = vmatprep.subr.bf16.mxu0 0
        %3771 = vmatpush1.bf16.xpose.msra.mxu0 %v1076
        %3772 = vmatprep.subr.bf16.mxu0 0
        %3773 = vmatpush2.bf16.xpose.msra.mxu0 %v3754
        %3774 = vmatprep.subr.bf16.mxu0 0
        %3775 = vmatpush2.bf16.xpose.msra.mxu0 %v3129
        %3776 = vmatprep.subr.bf16.mxu0 0
        %3777 = vmatpush2.bf16.xpose.msra.mxu0 %v3126
        %3778 = vmatprep.subr.bf16.mxu0 0
        %3779 = vmatpush2.bf16.xpose.msra.mxu0 %v3123
        %3780 = vmatprep.subr.bf16.mxu0 0
        %3781 = vmatpush2.bf16.xpose.msra.mxu0 %v2894
        %3782 = vmatprep.subr.bf16.mxu0 0
        %3783 = vmatpush2.bf16.xpose.msra.mxu0 %v2269
        %3784 = vmatprep.subr.bf16.mxu0 0
        %3785 = vmatpush2.bf16.xpose.msra.mxu0 %v2266
        %3786 = vmatprep.subr.bf16.mxu0 0
        %3787 = vmatpush2.bf16.xpose.msra.mxu0 %v2263
        %3788 = vmatprep.mubr.bf16.mxu0 0
        %3789 = vmatmul.mubr.bf16.gmra.mxu0 %v3751
        %v3790 = vpop.f32.mrf.mxu0
        %v3791 = vadd.f32 0.0, %v3790
        %v3792 = vpop.f32.mrf.mxu0
        %v3793 = vadd.f32 0.0, %v3792
        %v3794 = vpop.f32.mrf.mxu0
        %v3795 = vadd.f32 0.0, %v3794
        %v3796 = vpop.f32.mrf.mxu0
        %v3797 = vadd.f32 0.0, %v3796
        %3798 = vdwg.mxu0
        %v3799 = vadd.f32 %v3735, %v3791
        %v3800 = vadd.f32 %v3736, %v3793
        %v3801 = vadd.f32 %v3737, %v3795
        %v3802 = vadd.f32 %v3738, %v3797
        %v3804 = vshrl.u32 %v354, 16
        %v3806 = vrot.slane %v3804, 4
        %v3807 = vshll.u32 %v354, 16
        %v3809 = vrot.slane %v3807, 5
        %v3810 = vor.u32 %v3806, %v3809
        %v3811 = vrot.slane %v3810, 4
        %v3813 = vshll.u32 %v355, 16
        %v3815 = vrot.slane %v3813, 5
        %v3816 = vsel %vm360, %v3811, %v3815
        %s3817 = scalar_lea.vmem %s1, 200
        %v3818 = vld [vmem:[%s3817] sm:$0xf]
        %v3819 = vld [vmem:[%s3817 + $0x4] sm:$0xf]
        %v3822 = vunpack.c.l.b16 %v3818
        %v3823 = vunpack.c.l.b16 %v3819
        %v3824 = vpack.c.b16 %v3823, %v3822
        %v3825 = vunpack.c.l.b16 %v3816
        %v3826 = vpack.c.b16 %v3825, %v3592
        %v3828 = vsel %vm865, %v3824, 0
        %v3831 = vsel %vm865, %v3826, 0
        %3833 = vmatprep.subr.bf16.mxu0 0
        %3834 = vmatpush1.bf16.xpose.msra.mxu0 %v2081
        %3835 = vmatprep.subr.bf16.mxu0 0
        %3836 = vmatpush1.bf16.xpose.msra.mxu0 %v915
        %3837 = vmatprep.subr.bf16.mxu0 0
        %3838 = vmatpush1.bf16.xpose.msra.mxu0 %v912
        %3839 = vmatprep.subr.bf16.mxu0 0
        %3840 = vmatpush1.bf16.xpose.msra.mxu0 %v909
        %3841 = vmatprep.subr.bf16.mxu0 0
        %3842 = vmatpush1.bf16.xpose.msra.mxu0 %v2078
        %3843 = vmatprep.subr.bf16.mxu0 0
        %3844 = vmatpush1.bf16.xpose.msra.mxu0 %v903
        %3845 = vmatprep.subr.bf16.mxu0 0
        %3846 = vmatpush1.bf16.xpose.msra.mxu0 %v900
        %3847 = vmatprep.subr.bf16.mxu0 0
        %3848 = vmatpush1.bf16.xpose.msra.mxu0 %v897
        %3849 = vmatprep.subr.bf16.mxu0 0
        %3850 = vmatpush2.bf16.xpose.msra.mxu0 %v3831
        %3851 = vmatprep.subr.bf16.mxu0 0
        %3852 = vmatpush2.bf16.xpose.msra.mxu0 %v3323
        %3853 = vmatprep.subr.bf16.mxu0 0
        %3854 = vmatpush2.bf16.xpose.msra.mxu0 %v3320
        %3855 = vmatprep.subr.bf16.mxu0 0
        %3856 = vmatpush2.bf16.xpose.msra.mxu0 %v3317
        %3857 = vmatprep.subr.bf16.mxu0 0
        %3858 = vmatpush2.bf16.xpose.msra.mxu0 %v2971
        %3859 = vmatprep.subr.bf16.mxu0 0
        %3860 = vmatpush2.bf16.xpose.msra.mxu0 %v2463
        %3861 = vmatprep.subr.bf16.mxu0 0
        %3862 = vmatpush2.bf16.xpose.msra.mxu0 %v2460
        %3863 = vmatprep.subr.bf16.mxu0 0
        %3864 = vmatpush2.bf16.xpose.msra.mxu0 %v2457
        %3865 = vmatprep.mubr.bf16.mxu0 0
        %3866 = vmatmul.mubr.bf16.gmra.mxu0 %v3828
        %v3867 = vpop.f32.mrf.mxu0
        %v3868 = vadd.f32 0.0, %v3867
        %v3869 = vpop.f32.mrf.mxu0
        %v3870 = vadd.f32 0.0, %v3869
        %v3871 = vpop.f32.mrf.mxu0
        %v3872 = vadd.f32 0.0, %v3871
        %v3873 = vpop.f32.mrf.mxu0
        %v3874 = vadd.f32 0.0, %v3873
        %3875 = vdwg.mxu0
        %v3876 = vadd.f32 %v3799, %v3868
        %v3877 = vadd.f32 %v3800, %v3870
        %v3878 = vadd.f32 %v3801, %v3872
        %v3879 = vadd.f32 %v3802, %v3874
        %v3881 = vrot.slane %v354, 5
        %v3882 = vrot.slane %v3881, 4
        %v3883 = vrot.slane %v355, 5
        %v3884 = vsel %vm1173, %v3882, %v3883
        %s3885 = scalar_lea.vmem %s1, 208
        %v3886 = vld [vmem:[%s3885] sm:$0xf]
        %v3887 = vld [vmem:[%s3885 + $0x4] sm:$0xf]
        %v3890 = vunpack.c.l.b16 %v3886
        %v3891 = vunpack.c.l.b16 %v3887
        %v3892 = vpack.c.b16 %v3891, %v3890
        %v3893 = vunpack.c.l.b16 %v3884
        %v3894 = vpack.c.b16 %v3893, %v3672
        %v3896 = vsel %vm865, %v3892, 0
        %v3899 = vsel %vm865, %v3894, 0
        %3901 = vmatprep.subr.bf16.mxu0 0
        %3902 = vmatpush1.bf16.xpose.msra.mxu0 %v2179
        %3903 = vmatprep.subr.bf16.mxu0 0
        %3904 = vmatpush1.bf16.xpose.msra.mxu0 %v1407
        %3905 = vmatprep.subr.bf16.mxu0 0
        %3906 = vmatpush1.bf16.xpose.msra.mxu0 %v1404
        %3907 = vmatprep.subr.bf16.mxu0 0
        %3908 = vmatpush1.bf16.xpose.msra.mxu0 %v1401
        %3909 = vmatprep.subr.bf16.mxu0 0
        %3910 = vmatpush1.bf16.xpose.msra.mxu0 %v2176
        %3911 = vmatprep.subr.bf16.mxu0 0
        %3912 = vmatpush1.bf16.xpose.msra.mxu0 %v1395
        %3913 = vmatprep.subr.bf16.mxu0 0
        %3914 = vmatpush1.bf16.xpose.msra.mxu0 %v1392
        %3915 = vmatprep.subr.bf16.mxu0 0
        %3916 = vmatpush1.bf16.xpose.msra.mxu0 %v1389
        %3917 = vmatprep.subr.bf16.mxu0 0
        %3918 = vmatpush2.bf16.xpose.msra.mxu0 %v3899
        %3919 = vmatprep.subr.bf16.mxu0 0
        %3920 = vmatpush2.bf16.xpose.msra.mxu0 %v3445
        %3921 = vmatprep.subr.bf16.mxu0 0
        %3922 = vmatpush2.bf16.xpose.msra.mxu0 %v3442
        %3923 = vmatprep.subr.bf16.mxu0 0
        %3924 = vmatpush2.bf16.xpose.msra.mxu0 %v3439
        %3925 = vmatprep.subr.bf16.mxu0 0
        %3926 = vmatpush2.bf16.xpose.msra.mxu0 %v3039
        %3927 = vmatprep.subr.bf16.mxu0 0
        %3928 = vmatpush2.bf16.xpose.msra.mxu0 %v2585
        %3929 = vmatprep.subr.bf16.mxu0 0
        %3930 = vmatpush2.bf16.xpose.msra.mxu0 %v2582
        %3931 = vmatprep.subr.bf16.mxu0 0
        %3932 = vmatpush2.bf16.xpose.msra.mxu0 %v2579
        %3933 = vmatprep.mubr.bf16.mxu0 0
        %3934 = vmatmul.mubr.bf16.gmra.mxu0 %v3896
        %v3935 = vpop.f32.mrf.mxu0
        %v3936 = vadd.f32 0.0, %v3935
        %v3937 = vpop.f32.mrf.mxu0
        %v3938 = vadd.f32 0.0, %v3937
        %v3939 = vpop.f32.mrf.mxu0
        %v3940 = vadd.f32 0.0, %v3939
        %v3941 = vpop.f32.mrf.mxu0
        %v3942 = vadd.f32 0.0, %v3941
        %3943 = vdwg.mxu0
        %v3944 = vadd.f32 %v3876, %v3936
        %v3945 = vadd.f32 %v3877, %v3938
        %v3946 = vadd.f32 %v3878, %v3940
        %v3947 = vadd.f32 %v3879, %v3942
        %p3948 = scmp.eq.s32.totalorder %s24, 0
        %p3949 = scmp.eq.s32.totalorder %s25, 0
        %p3950 = pnand %p3948, %p3949
        %p3951 = pneg %p3950
        // Predicated region
        $region37: #{tpu_custom_call.1} parent=35 // pred_check
          _
        $region38: #{tpu_custom_call.1} parent=35 // pred_check_branch
          %3953 = sbr.rel (%p3950) target = $region40
        $region39: #{tpu_custom_call.1} parent=35 // pred_region
          %vm3954 = vcmask 7168
          %3955 = vst.msk [vmem:[#allocation2] sm:$0xff] %vm3954, 0.0
          %3956 = vst.msk [vmem:[#allocation2 + $0x8] sm:$0xff] %vm3954, 0.0
          %3957 = vst.msk [vmem:[#allocation3] sm:$0xff] %vm3954, 0.0
          %3958 = vst.msk [vmem:[#allocation3 + $0x8] sm:$0xff] %vm3954, 0.0
        $region40: #{tpu_custom_call.1} parent=35 // pred_fallthru
          _
        // Predicated region
        $region41: #{tpu_custom_call.1} parent=35 // pred_check
          %p3959 = pneg %p3948
        $region42: #{tpu_custom_call.1} parent=35 // pred_check_branch
          %3961 = sbr.rel (%p3959) target = $region44
        $region43: #{tpu_custom_call.1} parent=35 // pred_region
          %v3962 = vld [vmem:[#allocation2] sm:$0xff]
          %v3963 = vld [vmem:[#allocation2 + $0x8] sm:$0xff]
          %v3964 = vadd.f32 %v3944, %v3945
          %3965 = vadd.xlane.f32.xlu0 %v3964
          %v3966 = vpop.xlane.xlu0 %3965
          %v3967 = vadd.f32 %v3946, %v3947
          %3968 = vadd.xlane.f32.xlu0 %v3967
          %v3969 = vpop.xlane.xlu0 %3968
          %v3970 = vadd.f32 %v3962, %v3966
          %v3971 = vadd.f32 %v3963, %v3969
          %vm3972 = vcmask 7168
          %3973 = vst.msk [vmem:[#allocation2] sm:$0xff] %vm3972, %v3970
          %3974 = vst.msk [vmem:[#allocation2 + $0x8] sm:$0xff] %vm3972, %v3971
          %v3975 = vld [vmem:[#allocation3] sm:$0xff]
          %v3976 = vld [vmem:[#allocation3 + $0x8] sm:$0xff]
          %v3977 = vmul.f32 %v3944, %v3944
          %v3978 = vmul.f32 %v3945, %v3945
          %v3979 = vmul.f32 %v3946, %v3946
          %v3980 = vmul.f32 %v3947, %v3947
          %v3981 = vadd.f32 %v3977, %v3978
          %3982 = vadd.xlane.f32.xlu0 %v3981
          %v3983 = vpop.xlane.xlu0 %3982
          %v3984 = vadd.f32 %v3979, %v3980
          %3985 = vadd.xlane.f32.xlu0 %v3984
          %v3986 = vpop.xlane.xlu0 %3985
          %v3987 = vadd.f32 %v3975, %v3983
          %v3988 = vadd.f32 %v3976, %v3986
          %3989 = vst.msk [vmem:[#allocation3] sm:$0xff] %vm3972, %v3987
          %3990 = vst.msk [vmem:[#allocation3 + $0x8] sm:$0xff] %vm3972, %v3988
        $region44: #{tpu_custom_call.1} parent=35 // pred_fallthru
          _
        %p3991 = scmp.eq.s32.totalorder %s24, 1
        // Predicated region
        $region45: #{tpu_custom_call.1} parent=35 // pred_check
          %p3992 = pneg %p3991
        $region46: #{tpu_custom_call.1} parent=35 // pred_check_branch
          %3994 = sbr.rel (%p3992) target = $region48
        $region47: #{tpu_custom_call.1} parent=35 // pred_region
          %v3995 = vld [vmem:[#allocation2] sm:$0xff]
          %v3996 = vld [vmem:[#allocation2 + $0x8] sm:$0xff]
          %v3997 = vmul.f32 %v3995, 0.001953125
          %v3998 = vmul.f32 %v3996, 0.001953125
          %v3999 = vld [vmem:[#allocation3] sm:$0xff]
          %v4000 = vld [vmem:[#allocation3 + $0x8] sm:$0xff]
          %v4001 = vmul.f32 %v3999, 0.001953125
          %v4002 = vmul.f32 %v4000, 0.001953125
          %v4003 = vmul.f32 %v3997, %v3997
          %v4004 = vmul.f32 %v3998, %v3998
          %v4005 = vsub.f32 %v4001, %v4003
          %v4006 = vsub.f32 %v4002, %v4004
          %v4007 = vadd.f32 %v4005, 1e-05
          %v4008 = vadd.f32 %v4006, 1e-05
          %v4009 = vrsqrt.pop %v4007
          %v4010 = vrsqrt.pop %v4008
          %v4011 = vld [vmem:[%s2] sm:$0xff]
          %v4012 = vld [vmem:[%s2 + $0x8] sm:$0xff]
          %v4013 = vmul.f32 %v4011, %v4009
          %v4014 = vmul.f32 %v4012, %v4010
          %v4015 = vld [vmem:[%s3] sm:$0xff]
          %v4016 = vld [vmem:[%s3 + $0x8] sm:$0xff]
          %v4017 = vmul.f32 %v3997, %v4013
          %v4018 = vmul.f32 %v3998, %v4014
          %v4019 = vsub.f32 %v4015, %v4017
          %v4020 = vsub.f32 %v4016, %v4018
          %4022 = vset.pattern.permute.xlu0 0
          %4023 = vperm.xlu0 %4022, %v4013
          %v4024 = vpop.permute.xlu0 %4023
          %4027 = vset.pattern.permute.xlu0 0
          %4028 = vperm.xlu0 %4027, %v4014
          %v4029 = vpop.permute.xlu0 %4028
          %v4031 = vmul.f32 %v3944, %v4024
          %v4032 = vmul.f32 %v3945, %v4024
          %v4033 = vmul.f32 %v3946, %v4029
          %v4034 = vmul.f32 %v3947, %v4029
          %4036 = vset.pattern.permute.xlu0 0
          %4037 = vperm.xlu0 %4036, %v4019
          %v4038 = vpop.permute.xlu0 %4037
          %4041 = vset.pattern.permute.xlu0 0
          %4042 = vperm.xlu0 %4041, %v4020
          %v4043 = vpop.permute.xlu0 %4042
          %v4045 = vadd.f32 %v4031, %v4038
          %v4046 = vadd.f32 %v4032, %v4038
          %v4047 = vadd.f32 %v4033, %v4043
          %v4048 = vadd.f32 %v4034, %v4043
          %vm4049 = vcmp.gt.f32.partialorder %v4045, 0.0
          %vm4050 = vcmp.gt.f32.partialorder %v4046, 0.0
          %vm4051 = vcmp.gt.f32.partialorder %v4047, 0.0
          %vm4052 = vcmp.gt.f32.partialorder %v4048, 0.0
          %v4053 = vmul.f32 %v4045, 0.0
          %v4054 = vmul.f32 %v4046, 0.0
          %v4055 = vmul.f32 %v4047, 0.0
          %v4056 = vmul.f32 %v4048, 0.0
          %v4057 = vsel %vm4049, %v4045, %v4053
          %v4058 = vsel %vm4050, %v4046, %v4054
          %v4059 = vsel %vm4051, %v4047, %v4055
          %v4060 = vsel %vm4052, %v4048, %v4056
          %4061 = vst [vmem:[%s223] sm:$0xff] %v4057
          %4062 = vst [vmem:[%s223 + $0x8] sm:$0xff] %v4058
          %4063 = vst [vmem:[%s223 + $0x10] sm:$0xff] %v4059
          %4064 = vst [vmem:[%s223 + $0x18] sm:$0xff] %v4060
        $region48: #{tpu_custom_call.1} parent=35 // pred_fallthru
          _
        %s4065 = sand.u32 %s142, 1
        %s4066 = scalar_lea.sflag [#allocation5], %s4065
        %s4067 = sand.u32 %s142, 1
        %s4068 = smul.addr %s4067, 32
        %s4069 = scalar_lea.vmem [#allocation4], %s4068
        // Predicated region
        $region49: #{tpu_custom_call.1} parent=35 // pred_check
          %p4070 = pneg %p152
        $region50: #{tpu_custom_call.1} parent=35 // pred_check_branch
          %4072 = sbr.rel (%p4070) target = $region52
        $region51: #{tpu_custom_call.1} parent=35 // pred_region
          %s4073 = smul.u32 %s24, %s25
          %s4074 = smul.u32 2, %s4073
          %s4076 = ssub.s32 512, 512
          %4077 = vsyncadd %s4066, %s4076
          %s4078 = smul.addr %s23, 8
          %s4079 = sadd.s32 %s4074, %s4078
          %s4080 = smul.addr %s4079, 128
          %s4081 = scalar_lea.hbm %s4, %s4080
          %s4082 = sshll.u32 %s4069, 4
          %s4083 = int_to_ptr.vmem [resolvable:$true] %s4082
          %4088 = dma.vmem_to_hbm [thread:$0]  %s4083, 512, %s4081, %s4066, 256, 512, 16
        $region52: #{tpu_custom_call.1} parent=35 // pred_fallthru
          _
      $region36: #{tpu_custom_call.1} parent=5 // pred_fallthru
        _
      %p4089 = scmp.le.s32.totalorder 2, %s13
      // Predicated region
      $region53: #{tpu_custom_call.1} parent=5 // pred_check
        %p4090 = pneg %p4089
      $region54: #{tpu_custom_call.1} parent=5 // pred_check_branch
        %4092 = sbr.rel (%p4090) target = $region56
      $region55: #{tpu_custom_call.1} parent=5 // pred_region
        %s4093 = ssub.s32 %s13, 2
        // Predicated region
        $region57: #{tpu_custom_call.1} parent=55 // pred_check
          %p4094 = pneg %p158
        $region58: #{tpu_custom_call.1} parent=55 // pred_check_branch
          %4096 = sbr.rel (%p4094) target = $region60
        $region59: #{tpu_custom_call.1} parent=55 // pred_region
          %s4097 = sand.u32 %s143, 1
          %s4098 = scalar_lea.sflag [#allocation5], %s4097
          %s4099 = sand.u32 %s143, 1
          %s4100 = smul.addr %s4099, 32
          %s4101 = scalar_lea.vmem [#allocation4], %s4100
          %4102 = dma.done %s4098, 512
        $region60: #{tpu_custom_call.1} parent=55 // pred_fallthru
          _
      $region56: #{tpu_custom_call.1} parent=5 // pred_fallthru
        _
    $region6: #{tpu_custom_call.1} parent=1 // loop_footer
      %s17 = sadd.s32 1, %s13
    $region7: #{tpu_custom_call.1} parent=1 // loop_footer_branch
      %12 = sbr.rel target = $region3
    $region8: #{tpu_custom_call.1} parent=1 // loop_exit
      _
    %4103 = vsyncpa [#allocation5], 1
    %s4104 = scalar_lea.sflag [#allocation5], 1
    %4105 = vsyncpa %s4104, 1

</llo_original>
